<compile_context>
chip_gen: v7x
topology: tpu7x:2x2x1
jax: 0.10.0
libtpu: 0.0.40
codegen_flags: <defaults>
</compile_context>

<pallas_src>
import jax
import jax.numpy as jnp
from jax import lax
from jax.experimental import pallas as pl
from jax.experimental.pallas import tpu as pltpu
import numpy as np

N_EMBD = 32       # C
BLOCK_SIZE = 8    # T (sequence length / causal window)
HEAD_SIZE = 16    # HS
NEG_INF = -1e30   # fp32 stand-in for -inf; safe under softmax max-subtraction


def head_kernel(x_ref, wqkv_ref, out_ref):
    # x_ref: (BT, T, C) fp32 ; wqkv_ref: (C, 3*HS) fp32 ; out_ref: (BT, T, HS) fp32
    bt, t, c = x_ref.shape
    hs = out_ref.shape[-1]
    scale = float(hs) ** -0.5

    # ---- fused QKV projection: one matmul with M = BT*T rows ----
    x2d = x_ref[...].reshape(bt * t, c).astype(jnp.bfloat16)
    w = wqkv_ref[...].astype(jnp.bfloat16)
    qkv = jnp.dot(x2d, w, preferred_element_type=jnp.float32).reshape(bt, t, 3 * hs)
    q = qkv[..., 0 * hs:1 * hs]
    k = qkv[..., 1 * hs:2 * hs]
    v = qkv[..., 2 * hs:3 * hs]

    # ---- causal mask, built once per invocation ----
    row = lax.broadcasted_iota(jnp.int32, (t, t), 0)
    col = lax.broadcasted_iota(jnp.int32, (t, t), 1)
    causal = col <= row

    # ---- batched attention over all BT sequences in the block ----
    s = jnp.einsum('bqd,bkd->bqk',
                   q.astype(jnp.bfloat16), k.astype(jnp.bfloat16),
                   preferred_element_type=jnp.float32) * scale
    s = jnp.where(causal[None, :, :], s, NEG_INF)          # masked_fill(-inf)
    m = jnp.max(s, axis=-1, keepdims=True)
    e = jnp.exp(s - m)                                      # fp32 softmax
    p = e / jnp.sum(e, axis=-1, keepdims=True)
    # TODO(synk): nn.Dropout(p=0.2) on the attention weights omitted — inference
    # semantics (identity).
    o = jnp.einsum('bqk,bkd->bqd',
                   p.astype(jnp.bfloat16), v.astype(jnp.bfloat16),
                   preferred_element_type=jnp.float32)
    out_ref[...] = o.astype(out_ref.dtype)


def head_attention(x, wq, wk, wv, *, block_batch=32):
    """x: (B, T, C); wq/wk/wv: (C, HS) (i.e. nn.Linear weight transposed)."""
    B, T, C = x.shape
    HS = wq.shape[1]
    wqkv = jnp.concatenate([wq, wk, wv], axis=1)            # (C, 3*HS)

    # Largest BT <= block_batch that divides B; keeps >= 2 grid steps when B allows
    # so v7x's two TensorCores both get work.  VMEM use is tiny (a few hundred KiB),
    # far under the v7x 64 MiB cap, so no vmem_limit override is needed.
    bt = min(block_batch, B)
    while B % bt:
        bt -= 1
    grid = (B // bt,)

    return pl.pallas_call(
        head_kernel,
        out_shape=jax.ShapeDtypeStruct((B, T, HS), x.dtype),
        grid_spec=pltpu.PrefetchScalarGridSpec(
            num_scalar_prefetch=0,
            grid=grid,
            in_specs=[
                pl.BlockSpec((bt, T, C), lambda b: (b, 0, 0)),
                # constant index_map -> fused weight stays VMEM-resident across steps
                pl.BlockSpec((C, 3 * HS), lambda b: (0, 0)),
            ],
            out_specs=pl.BlockSpec((bt, T, HS), lambda b: (b, 0, 0)),
        ),
        compiler_params=pltpu.CompilerParams(
            dimension_semantics=("parallel",)),
    )(x, wqkv)


def reference(x, wq, wk, wv):
    # Pure-JAX (fp32) reproduction of the PyTorch Head.forward (dropout = identity).
    B, T, C = x.shape
    hs = wq.shape[1]
    q = x @ wq
    k = x @ wk
    v = x @ wv
    wei = (q @ jnp.swapaxes(k, -1, -2)) * hs ** -0.5
    mask = jnp.tril(jnp.ones((T, T), bool))
    wei = jnp.where(mask, wei, -jnp.inf)
    wei = jax.nn.softmax(wei, axis=-1)
    return wei @ v


if __name__ == "__main__":
    key = jax.random.PRNGKey(0)
    kx, kq, kk, kv = jax.random.split(key, 4)
    B, T, C, HS = 64, BLOCK_SIZE, N_EMBD, HEAD_SIZE

    bound = 1.0 / np.sqrt(C)   # PyTorch nn.Linear default: U(-1/sqrt(fan_in), +)
    x = jax.random.normal(kx, (B, T, C), jnp.float32)
    wq = jax.random.uniform(kq, (C, HS), jnp.float32, -bound, bound)
    wk = jax.random.uniform(kk, (C, HS), jnp.float32, -bound, bound)
    wv = jax.random.uniform(kv, (C, HS), jnp.float32, -bound, bound)

    out = jax.block_until_ready(head_attention(x, wq, wk, wv))

    ref = reference(x, wq, wk, wv)
    # bf16 matmul operands with fp32 accumulation -> ~1e-2 absolute deviation
    np.testing.assert_allclose(np.asarray(out), np.asarray(ref), atol=5e-2, rtol=5e-2)
    print("KERNEL_OK")
</pallas_src>

<mosaic_0001>
module attributes {stable_mosaic.version = 11 : i64} {
  func.func @head_kernel(%arg0: i32, %arg1: memref<32x8x32xf32, #tpu.memory_space<vmem>>, %arg2: memref<32x48xf32, #tpu.memory_space<vmem>>, %arg3: memref<32x8x16xf32, #tpu.memory_space<vmem>>) attributes {dimension_semantics = [#tpu.dimension_semantics<parallel>], iteration_bounds = array<i64: 2>, scalar_prefetch = 0 : i64, scratch_operands = 0 : i64, tpu.core_type = #tpu.core_type<tc>, window_params = [{transform_indices = @transform_0, window_bounds = array<i64: 32, 8, 32>}, {pipeline_mode = #tpu.pipeline_mode<synchronous>, transform_indices = @transform_1, window_bounds = array<i64: 32, 48>}, {transform_indices = @transform_2, window_bounds = array<i64: 32, 8, 16>}]} {
    %c0 = arith.constant 0 : index
    %c0_0 = arith.constant 0 : index
    %c0_1 = arith.constant 0 : index
    %0 = vector.load %arg1[%c0, %c0_0, %c0_1] : memref<32x8x32xf32, #tpu.memory_space<vmem>>, vector<32x8x32xf32>
    %1 = vector.shape_cast %0 : vector<32x8x32xf32> to vector<256x32xf32>
    %2 = arith.truncf %1 : vector<256x32xf32> to vector<256x32xbf16>
    %c0_2 = arith.constant 0 : index
    %c0_3 = arith.constant 0 : index
    %3 = vector.load %arg2[%c0_2, %c0_3] : memref<32x48xf32, #tpu.memory_space<vmem>>, vector<32x48xf32>
    %4 = arith.truncf %3 : vector<32x48xf32> to vector<32x48xbf16>
    %cst = arith.constant dense<0.000000e+00> : vector<256x48xf32>
    %5 = tpu.matmul %2, %4, %cst {dimension_numbers = #tpu.dot_dimension_numbers<[1], [0], [0], [1], [0, 0, 1, 1], [], []>} : vector<256x32xbf16>, vector<32x48xbf16>, vector<256x48xf32> -> vector<256x48xf32>
    %6 = vector.shape_cast %5 : vector<256x48xf32> to vector<32x8x48xf32>
    %7 = vector.extract_strided_slice %6 {offsets = [0, 0, 0], sizes = [32, 8, 16], strides = [1, 1, 1]} : vector<32x8x48xf32> to vector<32x8x16xf32>
    %8 = vector.extract_strided_slice %6 {offsets = [0, 0, 16], sizes = [32, 8, 16], strides = [1, 1, 1]} : vector<32x8x48xf32> to vector<32x8x16xf32>
    %9 = vector.extract_strided_slice %6 {offsets = [0, 0, 32], sizes = [32, 8, 16], strides = [1, 1, 1]} : vector<32x8x48xf32> to vector<32x8x16xf32>
    %10 = tpu.iota {dimensions = array<i32: 0>} : vector<8x8xi32>
    %11 = tpu.iota {dimensions = array<i32: 1>} : vector<8x8xi32>
    %12 = arith.cmpi sle, %11, %10 : vector<8x8xi32>
    %13 = arith.truncf %7 : vector<32x8x16xf32> to vector<32x8x16xbf16>
    %14 = arith.truncf %8 : vector<32x8x16xf32> to vector<32x8x16xbf16>
    "tpu.trace_start"() <{level = 10 : i32, message = "bqd,bkd->bqk"}> : () -> ()
    %cst_4 = arith.constant dense<0.000000e+00> : vector<32x8x8xf32>
    %15 = tpu.matmul %13, %14, %cst_4 {dimension_numbers = #tpu.dot_dimension_numbers<[2], [2], [1], [1], [0, 0, 0, 1, 1, 1], [0], [0]>} : vector<32x8x16xbf16>, vector<32x8x16xbf16>, vector<32x8x8xf32> -> vector<32x8x8xf32>
    "tpu.trace_stop"() : () -> ()
    %cst_5 = arith.constant 2.500000e-01 : f32
    %16 = vector.broadcast %cst_5 : f32 to vector<32x8x8xf32>
    %17 = arith.mulf %15, %16 : vector<32x8x8xf32>
    %18 = vector.shape_cast %12 : vector<8x8xi1> to vector<1x8x8xi1>
    %cst_6 = arith.constant -1.000000e+30 : f32
    %19 = vector.shape_cast %18 : vector<1x8x8xi1> to vector<1x8x8xi1>
    %20 = vector.broadcast %19 : vector<1x8x8xi1> to vector<32x8x8xi1>
    %21 = vector.broadcast %cst_6 : f32 to vector<32x8x8xf32>
    %22 = arith.select %20, %17, %21 : vector<32x8x8xi1>, vector<32x8x8xf32>
    %cst_7 = arith.constant dense<0xFF800000> : vector<32x8xf32>
    %23 = vector.multi_reduction <maximumf>, %22, %cst_7 [2] : vector<32x8x8xf32> to vector<32x8xf32>
    %24 = vector.shape_cast %23 : vector<32x8xf32> to vector<32x8x1xf32>
    %25 = vector.broadcast %24 : vector<32x8x1xf32> to vector<32x8x8xf32>
    %26 = arith.subf %22, %25 : vector<32x8x8xf32>
    %27 = math.exp %26 : vector<32x8x8xf32>
    %cst_8 = arith.constant dense<0.000000e+00> : vector<32x8xf32>
    %28 = vector.multi_reduction <add>, %27, %cst_8 [2] : vector<32x8x8xf32> to vector<32x8xf32>
    %29 = vector.shape_cast %28 : vector<32x8xf32> to vector<32x8x1xf32>
    %30 = vector.broadcast %29 : vector<32x8x1xf32> to vector<32x8x8xf32>
    %31 = arith.divf %27, %30 : vector<32x8x8xf32>
    %32 = arith.truncf %31 : vector<32x8x8xf32> to vector<32x8x8xbf16>
    %33 = arith.truncf %9 : vector<32x8x16xf32> to vector<32x8x16xbf16>
    "tpu.trace_start"() <{level = 10 : i32, message = "bqk,bkd->bqd"}> : () -> ()
    %cst_9 = arith.constant dense<0.000000e+00> : vector<32x8x16xf32>
    %34 = tpu.matmul %32, %33, %cst_9 {dimension_numbers = #tpu.dot_dimension_numbers<[2], [1], [1], [2], [0, 0, 0, 1, 1, 2], [0], [0]>} : vector<32x8x8xbf16>, vector<32x8x16xbf16>, vector<32x8x16xf32> -> vector<32x8x16xf32>
    "tpu.trace_stop"() : () -> ()
    %c0_10 = arith.constant 0 : index
    %c0_11 = arith.constant 0 : index
    %c0_12 = arith.constant 0 : index
    %35 = vector.load %arg3[%c0_10, %c0_11, %c0_12] : memref<32x8x16xf32, #tpu.memory_space<vmem>>, vector<32x8x16xf32>
    tpu.vector_store %arg3[%c0_10, %c0_11, %c0_12], %34 {strides = array<i32>} : memref<32x8x16xf32, #tpu.memory_space<vmem>>, vector<32x8x16xf32>,
    return
  }
  func.func @transform_0(%arg0: i32) -> (i32, i32, i32) {
    %c0_i32 = arith.constant 0 : i32
    %c0_i32_0 = arith.constant 0 : i32
    %c0_i32_1 = arith.constant 0 : i32
    return %arg0, %c0_i32, %c0_i32_0 : i32, i32, i32
  }
  func.func @transform_1(%arg0: i32) -> (i32, i32) {
    %c0_i32 = arith.constant 0 : i32
    %c0_i32_0 = arith.constant 0 : i32
    %c0_i32_1 = arith.constant 0 : i32
    return %c0_i32, %c0_i32_0 : i32, i32
  }
  func.func @transform_2(%arg0: i32) -> (i32, i32, i32) {
    %c0_i32 = arith.constant 0 : i32
    %c0_i32_0 = arith.constant 0 : i32
    %c0_i32_1 = arith.constant 0 : i32
    return %arg0, %c0_i32, %c0_i32_0 : i32, i32, i32
  }
}

</mosaic_0001>

<llo_original>
// kernel: tpu_custom_call.1
$region0: #{tpu_custom_call.1}
  #allocation0 [shape = 'u32[]', space=smem, size = 0x4, offset = 0x4, fixed_abs, tag = 'smem constant byte address 0x4 - core index']
  #allocation1 [shape = 'u32[144,128]{1,0:T(1,128)}', space=vmem, size = 0x12000, scoped, tag = 'internal scratch']
  %s0 = inlined_call_operand.vmem [shape: f32[64,8,32], index: 0, kind: input, shape index: {}]
  %s1 = inlined_call_operand.vmem [shape: f32[32,48], index: 1, kind: input, shape index: {}]
  %s2 = inlined_call_operand.vmem [shape: f32[64,8,16], index: 2, kind: output, shape index: {}]
  %s3 = sld [smem:[#allocation0]]
  $region41: #{tpu_custom_call.1} parent=0
    _
  %s5 = ssub.s32 1, %s3
  %s6 = scalar_select 0, %s5, %s3
  loop: start=0, step=1, limit=4
  $region2: #{tpu_custom_call.1} parent=0 // loop_pre_header
    _
  $region3: #{tpu_custom_call.1} parent=0 // loop_header
    %s8 = sphi 0, %s12
    %p9 = scmp.ge.s32.totalorder %s8, 4
    %s18 = sphi 0, %s20
    %s21 = sphi 0, %s18
    %s22 = sphi 0, %s21
    %s38 = sphi 0, %s22
    %s42 = sphi 0, %s42
    %s44 = sphi 0, %s42
    %s45 = sphi 0, %s44
    %s59 = sphi 0, %s45
    %s65 = sphi 0, %s67
    %s68 = sphi 0, %s65
    %s69 = sphi 0, %s68
    %s85 = sphi 0, %s69
  $region4: #{tpu_custom_call.1} parent=0 // loop_header_branch
    %11 = sbr.rel (%p9) target = $region8
  $region5: #{tpu_custom_call.1} parent=0 // loop_body
    %s13 = ssub.s32 %s8, 1
    %s14 = ssub.s32 %s8, 2
    %s15 = sadd.s32 %s8, 1
    %s16 = ssub.s32 %s8, %s15
    %p17 = scmp.eq.s32.totalorder %s16, 0
    %s19 = sadd.s32 %s18, 1
    %s20 = scalar_select %p17, %s18, %s19
    %p23 = pneg %p17
    %p24 = scmp.eq.s32.totalorder %s8, 1
    %p25 = por %p23, %p24
    %p26 = scmp.ne.s32.totalorder %s18, %s21
    %p27 = scmp.eq.s32.totalorder %s8, 0
    %p28 = por %p26, %p27
    %p29 = scmp.ne.s32.totalorder %s18, %s21
    %p30 = scmp.eq.s32.totalorder %s13, 1
    %p31 = por %p29, %p30
    %p32 = scmp.ne.s32.totalorder %s21, %s22
    %p33 = scmp.eq.s32.totalorder %s13, 0
    %p34 = por %p32, %p33
    %p35 = scmp.ne.s32.totalorder %s21, %s22
    %p36 = scmp.eq.s32.totalorder %s14, 1
    %p37 = por %p35, %p36
    %p39 = scmp.ne.s32.totalorder %s22, %s38
    %p40 = scmp.eq.s32.totalorder %s14, 0
    %p41 = por %p39, %p40
    %s43 = sadd.s32 %s42, 1
    %p46 = scmp.eq.s32.totalorder %s8, 1
    %p47 = scmp.ne.s32.totalorder %s42, %s44
    %p48 = scmp.eq.s32.totalorder %s8, 0
    %p49 = por %p47, %p48
    %p50 = scmp.ne.s32.totalorder %s42, %s44
    %p51 = scmp.eq.s32.totalorder %s13, 1
    %p52 = por %p50, %p51
    %p53 = scmp.ne.s32.totalorder %s44, %s45
    %p54 = scmp.eq.s32.totalorder %s13, 0
    %p55 = por %p53, %p54
    %p56 = scmp.ne.s32.totalorder %s44, %s45
    %p57 = scmp.eq.s32.totalorder %s14, 1
    %p58 = por %p56, %p57
    %p60 = scmp.ne.s32.totalorder %s45, %s59
    %p61 = scmp.eq.s32.totalorder %s14, 0
    %p62 = por %p60, %p61
    %s63 = ssub.s32 %s8, %s15
    %p64 = scmp.eq.s32.totalorder %s63, 0
    %s66 = sadd.s32 %s65, 1
    %s67 = scalar_select %p64, %s65, %s66
    %p70 = pneg %p64
    %p71 = scmp.eq.s32.totalorder %s8, 1
    %p72 = por %p70, %p71
    %p73 = scmp.ne.s32.totalorder %s65, %s68
    %p74 = scmp.eq.s32.totalorder %s8, 0
    %p75 = por %p73, %p74
    %p76 = scmp.ne.s32.totalorder %s65, %s68
    %p77 = scmp.eq.s32.totalorder %s13, 1
    %p78 = por %p76, %p77
    %p79 = scmp.ne.s32.totalorder %s68, %s69
    %p80 = scmp.eq.s32.totalorder %s13, 0
    %p81 = por %p79, %p80
    %p82 = scmp.ne.s32.totalorder %s68, %s69
    %p83 = scmp.eq.s32.totalorder %s14, 1
    %p84 = por %p82, %p83
    %p86 = scmp.ne.s32.totalorder %s69, %s85
    %p87 = scmp.eq.s32.totalorder %s14, 0
    %p88 = por %p86, %p87
    %p89 = scmp.le.s32.totalorder 1, %s8
    %p90 = scmp.lt.s32.totalorder %s8, 3
    %p91 = pnand %p89, %p90
    %p92 = pneg %p91
    // Predicated region
    $region9: #{tpu_custom_call.1} parent=5 // pred_check
      _
    $region10: #{tpu_custom_call.1} parent=5 // pred_check_branch
      %94 = sbr.rel (%p91) target = $region12
    $region11: #{tpu_custom_call.1} parent=5 // pred_region
      %s95 = ssub.s32 %s8, 1
      // Predicated region
      $region13: #{tpu_custom_call.1} parent=11 // pred_check
        %p96 = pneg %p55
      $region14: #{tpu_custom_call.1} parent=11 // pred_check_branch
        %98 = sbr.rel (%p96) target = $region16
      $region15: #{tpu_custom_call.1} parent=11 // pred_region
        _
      $region16: #{tpu_custom_call.1} parent=11 // pred_fallthru
        _
    $region12: #{tpu_custom_call.1} parent=5 // pred_fallthru
      _
    %p99 = scmp.lt.s32.totalorder %s8, 2
    // Predicated region
    $region17: #{tpu_custom_call.1} parent=5 // pred_check
      %p100 = pneg %p99
    $region18: #{tpu_custom_call.1} parent=5 // pred_check_branch
      %102 = sbr.rel (%p100) target = $region20
    $region19: #{tpu_custom_call.1} parent=5 // pred_region
      // Predicated region
      $region21: #{tpu_custom_call.1} parent=19 // pred_check
        %p103 = pneg %p28
      $region22: #{tpu_custom_call.1} parent=19 // pred_check_branch
        %105 = sbr.rel (%p103) target = $region24
      $region23: #{tpu_custom_call.1} parent=19 // pred_region
        %s106 = smul.u32 32, %s8
        %p107 = scmp.lt.s32.totalorder %s106, 63
        %s108 = scalar_select %p107, %s106, 63
        %s109 = smul.addr %s108, 8
        %s110 = scalar_lea.vmem %s0, %s109
        %s111 = smul.u32 32, %s8
      $region24: #{tpu_custom_call.1} parent=19 // pred_fallthru
        _
    $region20: #{tpu_custom_call.1} parent=5 // pred_fallthru
      _
    %p112 = scmp.le.s32.totalorder 1, %s8
    %p113 = scmp.lt.s32.totalorder %s8, 3
    %p114 = pnand %p112, %p113
    %p115 = pneg %p114
    // Predicated region
    $region25: #{tpu_custom_call.1} parent=5 // pred_check
      _
    $region26: #{tpu_custom_call.1} parent=5 // pred_check_branch
      %117 = sbr.rel (%p114) target = $region28
    $region27: #{tpu_custom_call.1} parent=5 // pred_region
      %s118 = ssub.s32 %s8, 1
      %s119 = smul.u32 32, %s13
      %p120 = scmp.lt.s32.totalorder %s119, 63
      %s121 = scalar_select %p120, %s119, 63
      %s122 = smul.addr %s121, 8
      %s123 = scalar_lea.vmem %s0, %s122
      %p124 = pneg %p34
      %p125 = pneg %p31
      %p126 = pneg %p55
      %p127 = pneg %p52
      %p128 = pneg %p81
      %p129 = pneg %p78
      %s130 = smul.u32 32, %s13
      %p131 = scmp.lt.s32.totalorder %s130, 63
      %s132 = scalar_select %p131, %s130, 63
      %s133 = smul.addr %s132, 8
      %s134 = scalar_lea.vmem %s2, %s133
      %s135 = smul.u32 32, %s13
      %p136 = scmp.lt.s32.totalorder %s135, 63
      %s137 = scalar_select %p136, %s135, 63
      %s138 = smul.addr %s137, 8
      %s139 = scalar_lea.vmem %s0, %s138
      %s140 = smul.u32 32, %s13
      %s141 = smul.u32 32, %s13
      %p142 = scmp.lt.s32.totalorder %s141, 63
      %s143 = scalar_select %p142, %s141, 63
      %s144 = smul.addr %s143, 8
      %s145 = scalar_lea.vmem %s2, %s144
      %s146 = smul.u32 32, %s13
      %v148 = vld [vmem:[%s139] sm:$0xff]
      %v149 = vld [vmem:[%s139 + $0x8] sm:$0xff]
      %v150 = vld [vmem:[%s139 + $0x10] sm:$0xff]
      %v151 = vld [vmem:[%s139 + $0x18] sm:$0xff]
      %v152 = vld [vmem:[%s139 + $0x20] sm:$0xff]
      %v153 = vld [vmem:[%s139 + $0x28] sm:$0xff]
      %v154 = vld [vmem:[%s139 + $0x30] sm:$0xff]
      %v155 = vld [vmem:[%s139 + $0x38] sm:$0xff]
      %v156 = vld [vmem:[%s139 + $0x40] sm:$0xff]
      %v157 = vld [vmem:[%s139 + $0x48] sm:$0xff]
      %v158 = vld [vmem:[%s139 + $0x50] sm:$0xff]
      %v159 = vld [vmem:[%s139 + $0x58] sm:$0xff]
      %v160 = vld [vmem:[%s139 + $0x60] sm:$0xff]
      %v161 = vld [vmem:[%s139 + $0x68] sm:$0xff]
      %v162 = vld [vmem:[%s139 + $0x70] sm:$0xff]
      %v163 = vld [vmem:[%s139 + $0x78] sm:$0xff]
      %v164 = vld [vmem:[%s139 + $0x80] sm:$0xff]
      %v165 = vld [vmem:[%s139 + $0x88] sm:$0xff]
      %v166 = vld [vmem:[%s139 + $0x90] sm:$0xff]
      %v167 = vld [vmem:[%s139 + $0x98] sm:$0xff]
      %v168 = vld [vmem:[%s139 + $0xa0] sm:$0xff]
      %v169 = vld [vmem:[%s139 + $0xa8] sm:$0xff]
      %v170 = vld [vmem:[%s139 + $0xb0] sm:$0xff]
      %v171 = vld [vmem:[%s139 + $0xb8] sm:$0xff]
      %v172 = vld [vmem:[%s139 + $0xc0] sm:$0xff]
      %v173 = vld [vmem:[%s139 + $0xc8] sm:$0xff]
      %v174 = vld [vmem:[%s139 + $0xd0] sm:$0xff]
      %v175 = vld [vmem:[%s139 + $0xd8] sm:$0xff]
      %v176 = vld [vmem:[%s139 + $0xe0] sm:$0xff]
      %v177 = vld [vmem:[%s139 + $0xe8] sm:$0xff]
      %v178 = vld [vmem:[%s139 + $0xf0] sm:$0xff]
      %v179 = vld [vmem:[%s139 + $0xf8] sm:$0xff]
      %v180 = vpack.c.bf16 %v149, %v148
      %v181 = vpack.c.bf16 %v151, %v150
      %v182 = vpack.c.bf16 %v153, %v152
      %v183 = vpack.c.bf16 %v155, %v154
      %v184 = vpack.c.bf16 %v157, %v156
      %v185 = vpack.c.bf16 %v159, %v158
      %v186 = vpack.c.bf16 %v161, %v160
      %v187 = vpack.c.bf16 %v163, %v162
      %v188 = vpack.c.bf16 %v165, %v164
      %v189 = vpack.c.bf16 %v167, %v166
      %v190 = vpack.c.bf16 %v169, %v168
      %v191 = vpack.c.bf16 %v171, %v170
      %v192 = vpack.c.bf16 %v173, %v172
      %v193 = vpack.c.bf16 %v175, %v174
      %v194 = vpack.c.bf16 %v177, %v176
      %v195 = vpack.c.bf16 %v179, %v178
      %v196 = vld [vmem:[%s1] sm:$0xff]
      %v197 = vld [vmem:[%s1 + $0x8] sm:$0xff]
      %v198 = vld [vmem:[%s1 + $0x10] sm:$0xff]
      %v199 = vld [vmem:[%s1 + $0x18] sm:$0xff]
      %v200 = vpack.c.bf16 %v197, %v196
      %v201 = vpack.c.bf16 %v199, %v198
      %vm202 = vcmask 261120
      %v204 = vsel %vm202, %v180, 0
      %v207 = vsel %vm202, %v181, 0
      %v210 = vsel %vm202, %v182, 0
      %v213 = vsel %vm202, %v183, 0
      %v216 = vsel %vm202, %v184, 0
      %v219 = vsel %vm202, %v185, 0
      %v222 = vsel %vm202, %v186, 0
      %v225 = vsel %vm202, %v187, 0
      %v228 = vsel %vm202, %v188, 0
      %v231 = vsel %vm202, %v189, 0
      %v234 = vsel %vm202, %v190, 0
      %v237 = vsel %vm202, %v191, 0
      %v240 = vsel %vm202, %v192, 0
      %v243 = vsel %vm202, %v193, 0
      %v246 = vsel %vm202, %v194, 0
      %v249 = vsel %vm202, %v195, 0
      %251 = vmatprep.subr.bf16.mxu0 0
      %252 = vmatpush1.bf16.msra.mxu0 %v200
      %253 = vmatprep.subr.bf16.mxu0 0
      %254 = vmatpush1.bf16.msra.mxu0 %v201
      %255 = vmatprep.subr.bf16.mxu0 0
      %256 = vmatpush1.bf16.msra.mxu0 0
      %257 = vmatprep.subr.bf16.mxu0 0
      %258 = vmatpush1.bf16.msra.mxu0 0
      %259 = vmatprep.subr.bf16.mxu0 0
      %260 = vmatpush1.bf16.msra.mxu0 0
      %261 = vmatprep.subr.bf16.mxu0 0
      %262 = vmatpush1.bf16.msra.mxu0 0
      %263 = vmatprep.subr.bf16.mxu0 0
      %264 = vmatpush1.bf16.msra.mxu0 0
      %265 = vmatprep.subr.bf16.mxu0 0
      %266 = vmatpush1.bf16.msra.mxu0 0
      %267 = vmatprep.subr.bf16.mxu0 0
      %268 = vmatpush1.bf16.msra.mxu0 0
      %269 = vmatprep.subr.bf16.mxu0 0
      %270 = vmatpush1.bf16.msra.mxu0 0
      %271 = vmatprep.subr.bf16.mxu0 0
      %272 = vmatpush1.bf16.msra.mxu0 0
      %273 = vmatprep.subr.bf16.mxu0 0
      %274 = vmatpush1.bf16.msra.mxu0 0
      %275 = vmatprep.subr.bf16.mxu0 0
      %276 = vmatpush1.bf16.msra.mxu0 0
      %277 = vmatprep.subr.bf16.mxu0 0
      %278 = vmatpush1.bf16.msra.mxu0 0
      %279 = vmatprep.subr.bf16.mxu0 0
      %280 = vmatpush1.bf16.msra.mxu0 0
      %281 = vmatprep.subr.bf16.mxu0 0
      %282 = vmatpush1.bf16.msra.mxu0 0
      %283 = vmatprep.mubr.bf16.mxu0 0
      %284 = vmatmul.mubr.bf16.gmra.mrb[0].mxu0 %v204
      %v285 = vpop.f32.mrb[0].mxu0
      %v286 = vadd.f32 0.0, %v285
      %v287 = vpop.f32.mrb[0].mxu0
      %v288 = vpop.f32.mrb[0].mxu0
      %v289 = vadd.f32 0.0, %v288
      %v290 = vpop.f32.mrb[0].mxu0
      %291 = vmatprep.mubr.bf16.mxu0 0
      %292 = vmatmul.mubr.bf16.gmra.mrb[0].mxu0 %v207
      %v293 = vpop.f32.mrb[0].mxu0
      %v294 = vadd.f32 0.0, %v293
      %v295 = vpop.f32.mrb[0].mxu0
      %v296 = vpop.f32.mrb[0].mxu0
      %v297 = vadd.f32 0.0, %v296
      %v298 = vpop.f32.mrb[0].mxu0
      %299 = vmatprep.mubr.bf16.mxu0 0
      %300 = vmatmul.mubr.bf16.gmra.mrb[0].mxu0 %v210
      %v301 = vpop.f32.mrb[0].mxu0
      %v302 = vadd.f32 0.0, %v301
      %v303 = vpop.f32.mrb[0].mxu0
      %v304 = vpop.f32.mrb[0].mxu0
      %v305 = vadd.f32 0.0, %v304
      %v306 = vpop.f32.mrb[0].mxu0
      %307 = vmatprep.mubr.bf16.mxu0 0
      %308 = vmatmul.mubr.bf16.gmra.mrb[0].mxu0 %v213
      %v309 = vpop.f32.mrb[0].mxu0
      %v310 = vadd.f32 0.0, %v309
      %v311 = vpop.f32.mrb[0].mxu0
      %v312 = vpop.f32.mrb[0].mxu0
      %v313 = vadd.f32 0.0, %v312
      %v314 = vpop.f32.mrb[0].mxu0
      %315 = vmatprep.mubr.bf16.mxu0 0
      %316 = vmatmul.mubr.bf16.gmra.mrb[0].mxu0 %v216
      %v317 = vpop.f32.mrb[0].mxu0
      %v318 = vadd.f32 0.0, %v317
      %v319 = vpop.f32.mrb[0].mxu0
      %v320 = vpop.f32.mrb[0].mxu0
      %v321 = vadd.f32 0.0, %v320
      %v322 = vpop.f32.mrb[0].mxu0
      %323 = vmatprep.mubr.bf16.mxu0 0
      %324 = vmatmul.mubr.bf16.gmra.mrb[0].mxu0 %v219
      %v325 = vpop.f32.mrb[0].mxu0
      %v326 = vadd.f32 0.0, %v325
      %v327 = vpop.f32.mrb[0].mxu0
      %v328 = vpop.f32.mrb[0].mxu0
      %v329 = vadd.f32 0.0, %v328
      %v330 = vpop.f32.mrb[0].mxu0
      %331 = vmatprep.mubr.bf16.mxu0 0
      %332 = vmatmul.mubr.bf16.gmra.mrb[0].mxu0 %v222
      %v333 = vpop.f32.mrb[0].mxu0
      %v334 = vadd.f32 0.0, %v333
      %v335 = vpop.f32.mrb[0].mxu0
      %v336 = vpop.f32.mrb[0].mxu0
      %v337 = vadd.f32 0.0, %v336
      %v338 = vpop.f32.mrb[0].mxu0
      %339 = vmatprep.mubr.bf16.mxu0 0
      %340 = vmatmul.mubr.bf16.gmra.mrb[0].mxu0 %v225
      %v341 = vpop.f32.mrb[0].mxu0
      %v342 = vadd.f32 0.0, %v341
      %v343 = vpop.f32.mrb[0].mxu0
      %v344 = vpop.f32.mrb[0].mxu0
      %v345 = vadd.f32 0.0, %v344
      %v346 = vpop.f32.mrb[0].mxu0
      %347 = vmatprep.mubr.bf16.mxu0 0
      %348 = vmatmul.mubr.bf16.gmra.mrb[0].mxu0 %v228
      %v349 = vpop.f32.mrb[0].mxu0
      %v350 = vadd.f32 0.0, %v349
      %v351 = vpop.f32.mrb[0].mxu0
      %v352 = vpop.f32.mrb[0].mxu0
      %v353 = vadd.f32 0.0, %v352
      %v354 = vpop.f32.mrb[0].mxu0
      %355 = vmatprep.mubr.bf16.mxu0 0
      %356 = vmatmul.mubr.bf16.gmra.mrb[0].mxu0 %v231
      %v357 = vpop.f32.mrb[0].mxu0
      %v358 = vadd.f32 0.0, %v357
      %v359 = vpop.f32.mrb[0].mxu0
      %v360 = vpop.f32.mrb[0].mxu0
      %v361 = vadd.f32 0.0, %v360
      %v362 = vpop.f32.mrb[0].mxu0
      %363 = vmatprep.mubr.bf16.mxu0 0
      %364 = vmatmul.mubr.bf16.gmra.mrb[0].mxu0 %v234
      %v365 = vpop.f32.mrb[0].mxu0
      %v366 = vadd.f32 0.0, %v365
      %v367 = vpop.f32.mrb[0].mxu0
      %v368 = vpop.f32.mrb[0].mxu0
      %v369 = vadd.f32 0.0, %v368
      %v370 = vpop.f32.mrb[0].mxu0
      %371 = vmatprep.mubr.bf16.mxu0 0
      %372 = vmatmul.mubr.bf16.gmra.mrb[0].mxu0 %v237
      %v373 = vpop.f32.mrb[0].mxu0
      %v374 = vadd.f32 0.0, %v373
      %v375 = vpop.f32.mrb[0].mxu0
      %v376 = vpop.f32.mrb[0].mxu0
      %v377 = vadd.f32 0.0, %v376
      %v378 = vpop.f32.mrb[0].mxu0
      %379 = vmatprep.mubr.bf16.mxu0 0
      %380 = vmatmul.mubr.bf16.gmra.mrb[0].mxu0 %v240
      %v381 = vpop.f32.mrb[0].mxu0
      %v382 = vadd.f32 0.0, %v381
      %v383 = vpop.f32.mrb[0].mxu0
      %v384 = vpop.f32.mrb[0].mxu0
      %v385 = vadd.f32 0.0, %v384
      %v386 = vpop.f32.mrb[0].mxu0
      %387 = vmatprep.mubr.bf16.mxu0 0
      %388 = vmatmul.mubr.bf16.gmra.mrb[0].mxu0 %v243
      %v389 = vpop.f32.mrb[0].mxu0
      %v390 = vadd.f32 0.0, %v389
      %v391 = vpop.f32.mrb[0].mxu0
      %v392 = vpop.f32.mrb[0].mxu0
      %v393 = vadd.f32 0.0, %v392
      %v394 = vpop.f32.mrb[0].mxu0
      %395 = vmatprep.mubr.bf16.mxu0 0
      %396 = vmatmul.mubr.bf16.gmra.mrb[0].mxu0 %v246
      %v397 = vpop.f32.mrb[0].mxu0
      %v398 = vadd.f32 0.0, %v397
      %v399 = vpop.f32.mrb[0].mxu0
      %v400 = vpop.f32.mrb[0].mxu0
      %v401 = vadd.f32 0.0, %v400
      %v402 = vpop.f32.mrb[0].mxu0
      %403 = vmatprep.mubr.bf16.mxu0 0
      %404 = vmatmul.mubr.bf16.gmra.mrb[0].mxu0 %v249
      %v405 = vpop.f32.mrb[0].mxu0
      %v406 = vadd.f32 0.0, %v405
      %v407 = vpop.f32.mrb[0].mxu0
      %v408 = vpop.f32.mrb[0].mxu0
      %v409 = vadd.f32 0.0, %v408
      %v410 = vpop.f32.mrb[0].mxu0
      %411 = vdwg.mxu0
      %v412 = vlaneseq
      %v413 = vshrl.u32 %v412, 7
      %v414 = vlaneseq
      %v415 = vand.u32 %v414, 127
      %vm416 = vcmp.le.s32.totalorder %v415, %v413
      %v417 = vpack.c.bf16 %v286, %v286
      %v418 = vpack.c.bf16 %v289, %v289
      %v419 = vpack.c.bf16 %v294, %v294
      %v420 = vpack.c.bf16 %v297, %v297
      %v421 = vpack.c.bf16 %v302, %v302
      %v422 = vpack.c.bf16 %v305, %v305
      %v423 = vpack.c.bf16 %v310, %v310
      %v424 = vpack.c.bf16 %v313, %v313
      %v425 = vpack.c.bf16 %v318, %v318
      %v426 = vpack.c.bf16 %v321, %v321
      %v427 = vpack.c.bf16 %v326, %v326
      %v428 = vpack.c.bf16 %v329, %v329
      %v429 = vpack.c.bf16 %v334, %v334
      %v430 = vpack.c.bf16 %v337, %v337
      %v431 = vpack.c.bf16 %v342, %v342
      %v432 = vpack.c.bf16 %v345, %v345
      %v433 = vpack.c.bf16 %v350, %v350
      %v434 = vpack.c.bf16 %v353, %v353
      %v435 = vpack.c.bf16 %v358, %v358
      %v436 = vpack.c.bf16 %v361, %v361
      %v437 = vpack.c.bf16 %v366, %v366
      %v438 = vpack.c.bf16 %v369, %v369
      %v439 = vpack.c.bf16 %v374, %v374
      %v440 = vpack.c.bf16 %v377, %v377
      %v441 = vpack.c.bf16 %v382, %v382
      %v442 = vpack.c.bf16 %v385, %v385
      %v443 = vpack.c.bf16 %v390, %v390
      %v444 = vpack.c.bf16 %v393, %v393
      %v445 = vpack.c.bf16 %v398, %v398
      %v446 = vpack.c.bf16 %v401, %v401
      %v447 = vpack.c.bf16 %v406, %v406
      %v448 = vpack.c.bf16 %v409, %v409
      %450 = vrot.lane.b32.xlu0 %v417, 112
      %v451 = vpop.permute.xlu0 %450
      %vm452 = vcmask 130048
      %v454 = vsel %vm452, %v417, 0
      %v457 = vsel %vm452, %v451, 0
      %459 = vmatprep.subr.bf16.mxu0 0
      %460 = vmatpush1.bf16.xpose.msra.mxu0 %v457
      %461 = vmatprep.subr.bf16.mxu0 0
      %462 = vmatpush1.bf16.xpose.msra.mxu0 0
      %463 = vmatprep.subr.bf16.mxu0 0
      %464 = vmatpush1.bf16.xpose.msra.mxu0 0
      %465 = vmatprep.subr.bf16.mxu0 0
      %466 = vmatpush1.bf16.xpose.msra.mxu0 0
      %467 = vmatprep.subr.bf16.mxu0 0
      %468 = vmatpush1.bf16.xpose.msra.mxu0 0
      %469 = vmatprep.subr.bf16.mxu0 0
      %470 = vmatpush1.bf16.xpose.msra.mxu0 0
      %471 = vmatprep.subr.bf16.mxu0 0
      %472 = vmatpush1.bf16.xpose.msra.mxu0 0
      %473 = vmatprep.subr.bf16.mxu0 0
      %474 = vmatpush1.bf16.xpose.msra.mxu0 0
      %475 = vmatprep.subr.bf16.mxu0 0
      %476 = vmatpush1.bf16.xpose.msra.mxu0 0
      %477 = vmatprep.subr.bf16.mxu0 0
      %478 = vmatpush1.bf16.xpose.msra.mxu0 0
      %479 = vmatprep.subr.bf16.mxu0 0
      %480 = vmatpush1.bf16.xpose.msra.mxu0 0
      %481 = vmatprep.subr.bf16.mxu0 0
      %482 = vmatpush1.bf16.xpose.msra.mxu0 0
      %483 = vmatprep.subr.bf16.mxu0 0
      %484 = vmatpush1.bf16.xpose.msra.mxu0 0
      %485 = vmatprep.subr.bf16.mxu0 0
      %486 = vmatpush1.bf16.xpose.msra.mxu0 0
      %487 = vmatprep.subr.bf16.mxu0 0
      %488 = vmatpush1.bf16.xpose.msra.mxu0 0
      %489 = vmatprep.subr.bf16.mxu0 0
      %490 = vmatpush1.bf16.xpose.msra.mxu0 0
      %491 = vmatprep.mubr.bf16.mxu0 0
      %492 = vmatmul.mubr.bf16.gmra.mrb[0].mxu0 %v454
      %v493 = vpop.f32.mrb[0].mxu0
      %v494 = vadd.f32 0.0, %v493
      %v495 = vpop.f32.mrb[0].mxu0
      %v496 = vpop.f32.mrb[0].mxu0
      %v497 = vpop.f32.mrb[0].mxu0
      %498 = vdwg.mxu0
      %500 = vrot.lane.b32.xlu0 %v418, 112
      %v501 = vpop.permute.xlu0 %500
      %v503 = vsel %vm452, %v418, 0
      %v506 = vsel %vm452, %v501, 0
      %508 = vmatprep.subr.bf16.mxu0 0
      %509 = vmatpush1.bf16.xpose.msra.mxu0 %v506
      %510 = vmatprep.subr.bf16.mxu0 0
      %511 = vmatpush1.bf16.xpose.msra.mxu0 0
      %512 = vmatprep.subr.bf16.mxu0 0
      %513 = vmatpush1.bf16.xpose.msra.mxu0 0
      %514 = vmatprep.subr.bf16.mxu0 0
      %515 = vmatpush1.bf16.xpose.msra.mxu0 0
      %516 = vmatprep.subr.bf16.mxu0 0
      %517 = vmatpush1.bf16.xpose.msra.mxu0 0
      %518 = vmatprep.subr.bf16.mxu0 0
      %519 = vmatpush1.bf16.xpose.msra.mxu0 0
      %520 = vmatprep.subr.bf16.mxu0 0
      %521 = vmatpush1.bf16.xpose.msra.mxu0 0
      %522 = vmatprep.subr.bf16.mxu0 0
      %523 = vmatpush1.bf16.xpose.msra.mxu0 0
      %524 = vmatprep.subr.bf16.mxu0 0
      %525 = vmatpush1.bf16.xpose.msra.mxu0 0
      %526 = vmatprep.subr.bf16.mxu0 0
      %527 = vmatpush1.bf16.xpose.msra.mxu0 0
      %528 = vmatprep.subr.bf16.mxu0 0
      %529 = vmatpush1.bf16.xpose.msra.mxu0 0
      %530 = vmatprep.subr.bf16.mxu0 0
      %531 = vmatpush1.bf16.xpose.msra.mxu0 0
      %532 = vmatprep.subr.bf16.mxu0 0
      %533 = vmatpush1.bf16.xpose.msra.mxu0 0
      %534 = vmatprep.subr.bf16.mxu0 0
      %535 = vmatpush1.bf16.xpose.msra.mxu0 0
      %536 = vmatprep.subr.bf16.mxu0 0
      %537 = vmatpush1.bf16.xpose.msra.mxu0 0
      %538 = vmatprep.subr.bf16.mxu0 0
      %539 = vmatpush1.bf16.xpose.msra.mxu0 0
      %540 = vmatprep.mubr.bf16.mxu0 0
      %541 = vmatmul.mubr.bf16.gmra.mrb[0].mxu0 %v503
      %v542 = vpop.f32.mrb[0].mxu0
      %v543 = vadd.f32 0.0, %v542
      %v544 = vpop.f32.mrb[0].mxu0
      %v545 = vpop.f32.mrb[0].mxu0
      %v546 = vpop.f32.mrb[0].mxu0
      %547 = vdwg.mxu0
      %549 = vrot.lane.b32.xlu0 %v419, 112
      %v550 = vpop.permute.xlu0 %549
      %v552 = vsel %vm452, %v419, 0
      %v555 = vsel %vm452, %v550, 0
      %557 = vmatprep.subr.bf16.mxu0 0
      %558 = vmatpush1.bf16.xpose.msra.mxu0 %v555
      %559 = vmatprep.subr.bf16.mxu0 0
      %560 = vmatpush1.bf16.xpose.msra.mxu0 0
      %561 = vmatprep.subr.bf16.mxu0 0
      %562 = vmatpush1.bf16.xpose.msra.mxu0 0
      %563 = vmatprep.subr.bf16.mxu0 0
      %564 = vmatpush1.bf16.xpose.msra.mxu0 0
      %565 = vmatprep.subr.bf16.mxu0 0
      %566 = vmatpush1.bf16.xpose.msra.mxu0 0
      %567 = vmatprep.subr.bf16.mxu0 0
      %568 = vmatpush1.bf16.xpose.msra.mxu0 0
      %569 = vmatprep.subr.bf16.mxu0 0
      %570 = vmatpush1.bf16.xpose.msra.mxu0 0
      %571 = vmatprep.subr.bf16.mxu0 0
      %572 = vmatpush1.bf16.xpose.msra.mxu0 0
      %573 = vmatprep.subr.bf16.mxu0 0
      %574 = vmatpush1.bf16.xpose.msra.mxu0 0
      %575 = vmatprep.subr.bf16.mxu0 0
      %576 = vmatpush1.bf16.xpose.msra.mxu0 0
      %577 = vmatprep.subr.bf16.mxu0 0
      %578 = vmatpush1.bf16.xpose.msra.mxu0 0
      %579 = vmatprep.subr.bf16.mxu0 0
      %580 = vmatpush1.bf16.xpose.msra.mxu0 0
      %581 = vmatprep.subr.bf16.mxu0 0
      %582 = vmatpush1.bf16.xpose.msra.mxu0 0
      %583 = vmatprep.subr.bf16.mxu0 0
      %584 = vmatpush1.bf16.xpose.msra.mxu0 0
      %585 = vmatprep.subr.bf16.mxu0 0
      %586 = vmatpush1.bf16.xpose.msra.mxu0 0
      %587 = vmatprep.subr.bf16.mxu0 0
      %588 = vmatpush1.bf16.xpose.msra.mxu0 0
      %589 = vmatprep.mubr.bf16.mxu0 0
      %590 = vmatmul.mubr.bf16.gmra.mrb[0].mxu0 %v552
      %v591 = vpop.f32.mrb[0].mxu0
      %v592 = vadd.f32 0.0, %v591
      %v593 = vpop.f32.mrb[0].mxu0
      %v594 = vpop.f32.mrb[0].mxu0
      %v595 = vpop.f32.mrb[0].mxu0
      %596 = vdwg.mxu0
      %598 = vrot.lane.b32.xlu0 %v420, 112
      %v599 = vpop.permute.xlu0 %598
      %v601 = vsel %vm452, %v420, 0
      %v604 = vsel %vm452, %v599, 0
      %606 = vmatprep.subr.bf16.mxu0 0
      %607 = vmatpush1.bf16.xpose.msra.mxu0 %v604
      %608 = vmatprep.subr.bf16.mxu0 0
      %609 = vmatpush1.bf16.xpose.msra.mxu0 0
      %610 = vmatprep.subr.bf16.mxu0 0
      %611 = vmatpush1.bf16.xpose.msra.mxu0 0
      %612 = vmatprep.subr.bf16.mxu0 0
      %613 = vmatpush1.bf16.xpose.msra.mxu0 0
      %614 = vmatprep.subr.bf16.mxu0 0
      %615 = vmatpush1.bf16.xpose.msra.mxu0 0
      %616 = vmatprep.subr.bf16.mxu0 0
      %617 = vmatpush1.bf16.xpose.msra.mxu0 0
      %618 = vmatprep.subr.bf16.mxu0 0
      %619 = vmatpush1.bf16.xpose.msra.mxu0 0
      %620 = vmatprep.subr.bf16.mxu0 0
      %621 = vmatpush1.bf16.xpose.msra.mxu0 0
      %622 = vmatprep.subr.bf16.mxu0 0
      %623 = vmatpush1.bf16.xpose.msra.mxu0 0
      %624 = vmatprep.subr.bf16.mxu0 0
      %625 = vmatpush1.bf16.xpose.msra.mxu0 0
      %626 = vmatprep.subr.bf16.mxu0 0
      %627 = vmatpush1.bf16.xpose.msra.mxu0 0
      %628 = vmatprep.subr.bf16.mxu0 0
      %629 = vmatpush1.bf16.xpose.msra.mxu0 0
      %630 = vmatprep.subr.bf16.mxu0 0
      %631 = vmatpush1.bf16.xpose.msra.mxu0 0
      %632 = vmatprep.subr.bf16.mxu0 0
      %633 = vmatpush1.bf16.xpose.msra.mxu0 0
      %634 = vmatprep.subr.bf16.mxu0 0
      %635 = vmatpush1.bf16.xpose.msra.mxu0 0
      %636 = vmatprep.subr.bf16.mxu0 0
      %637 = vmatpush1.bf16.xpose.msra.mxu0 0
      %638 = vmatprep.mubr.bf16.mxu0 0
      %639 = vmatmul.mubr.bf16.gmra.mrb[0].mxu0 %v601
      %v640 = vpop.f32.mrb[0].mxu0
      %v641 = vadd.f32 0.0, %v640
      %v642 = vpop.f32.mrb[0].mxu0
      %v643 = vpop.f32.mrb[0].mxu0
      %v644 = vpop.f32.mrb[0].mxu0
      %645 = vdwg.mxu0
      %647 = vrot.lane.b32.xlu0 %v421, 112
      %v648 = vpop.permute.xlu0 %647
      %v650 = vsel %vm452, %v421, 0
      %v653 = vsel %vm452, %v648, 0
      %655 = vmatprep.subr.bf16.mxu0 0
      %656 = vmatpush1.bf16.xpose.msra.mxu0 %v653
      %657 = vmatprep.subr.bf16.mxu0 0
      %658 = vmatpush1.bf16.xpose.msra.mxu0 0
      %659 = vmatprep.subr.bf16.mxu0 0
      %660 = vmatpush1.bf16.xpose.msra.mxu0 0
      %661 = vmatprep.subr.bf16.mxu0 0
      %662 = vmatpush1.bf16.xpose.msra.mxu0 0
      %663 = vmatprep.subr.bf16.mxu0 0
      %664 = vmatpush1.bf16.xpose.msra.mxu0 0
      %665 = vmatprep.subr.bf16.mxu0 0
      %666 = vmatpush1.bf16.xpose.msra.mxu0 0
      %667 = vmatprep.subr.bf16.mxu0 0
      %668 = vmatpush1.bf16.xpose.msra.mxu0 0
      %669 = vmatprep.subr.bf16.mxu0 0
      %670 = vmatpush1.bf16.xpose.msra.mxu0 0
      %671 = vmatprep.subr.bf16.mxu0 0
      %672 = vmatpush1.bf16.xpose.msra.mxu0 0
      %673 = vmatprep.subr.bf16.mxu0 0
      %674 = vmatpush1.bf16.xpose.msra.mxu0 0
      %675 = vmatprep.subr.bf16.mxu0 0
      %676 = vmatpush1.bf16.xpose.msra.mxu0 0
      %677 = vmatprep.subr.bf16.mxu0 0
      %678 = vmatpush1.bf16.xpose.msra.mxu0 0
      %679 = vmatprep.subr.bf16.mxu0 0
      %680 = vmatpush1.bf16.xpose.msra.mxu0 0
      %681 = vmatprep.subr.bf16.mxu0 0
      %682 = vmatpush1.bf16.xpose.msra.mxu0 0
      %683 = vmatprep.subr.bf16.mxu0 0
      %684 = vmatpush1.bf16.xpose.msra.mxu0 0
      %685 = vmatprep.subr.bf16.mxu0 0
      %686 = vmatpush1.bf16.xpose.msra.mxu0 0
      %687 = vmatprep.mubr.bf16.mxu0 0
      %688 = vmatmul.mubr.bf16.gmra.mrb[0].mxu0 %v650
      %v689 = vpop.f32.mrb[0].mxu0
      %v690 = vadd.f32 0.0, %v689
      %v691 = vpop.f32.mrb[0].mxu0
      %v692 = vpop.f32.mrb[0].mxu0
      %v693 = vpop.f32.mrb[0].mxu0
      %694 = vdwg.mxu0
      %696 = vrot.lane.b32.xlu0 %v422, 112
      %v697 = vpop.permute.xlu0 %696
      %v699 = vsel %vm452, %v422, 0
      %v702 = vsel %vm452, %v697, 0
      %704 = vmatprep.subr.bf16.mxu0 0
      %705 = vmatpush1.bf16.xpose.msra.mxu0 %v702
      %706 = vmatprep.subr.bf16.mxu0 0
      %707 = vmatpush1.bf16.xpose.msra.mxu0 0
      %708 = vmatprep.subr.bf16.mxu0 0
      %709 = vmatpush1.bf16.xpose.msra.mxu0 0
      %710 = vmatprep.subr.bf16.mxu0 0
      %711 = vmatpush1.bf16.xpose.msra.mxu0 0
      %712 = vmatprep.subr.bf16.mxu0 0
      %713 = vmatpush1.bf16.xpose.msra.mxu0 0
      %714 = vmatprep.subr.bf16.mxu0 0
      %715 = vmatpush1.bf16.xpose.msra.mxu0 0
      %716 = vmatprep.subr.bf16.mxu0 0
      %717 = vmatpush1.bf16.xpose.msra.mxu0 0
      %718 = vmatprep.subr.bf16.mxu0 0
      %719 = vmatpush1.bf16.xpose.msra.mxu0 0
      %720 = vmatprep.subr.bf16.mxu0 0
      %721 = vmatpush1.bf16.xpose.msra.mxu0 0
      %722 = vmatprep.subr.bf16.mxu0 0
      %723 = vmatpush1.bf16.xpose.msra.mxu0 0
      %724 = vmatprep.subr.bf16.mxu0 0
      %725 = vmatpush1.bf16.xpose.msra.mxu0 0
      %726 = vmatprep.subr.bf16.mxu0 0
      %727 = vmatpush1.bf16.xpose.msra.mxu0 0
      %728 = vmatprep.subr.bf16.mxu0 0
      %729 = vmatpush1.bf16.xpose.msra.mxu0 0
      %730 = vmatprep.subr.bf16.mxu0 0
      %731 = vmatpush1.bf16.xpose.msra.mxu0 0
      %732 = vmatprep.subr.bf16.mxu0 0
      %733 = vmatpush1.bf16.xpose.msra.mxu0 0
      %734 = vmatprep.subr.bf16.mxu0 0
      %735 = vmatpush1.bf16.xpose.msra.mxu0 0
      %736 = vmatprep.mubr.bf16.mxu0 0
      %737 = vmatmul.mubr.bf16.gmra.mrb[0].mxu0 %v699
      %v738 = vpop.f32.mrb[0].mxu0
      %v739 = vadd.f32 0.0, %v738
      %v740 = vpop.f32.mrb[0].mxu0
      %v741 = vpop.f32.mrb[0].mxu0
      %v742 = vpop.f32.mrb[0].mxu0
      %743 = vdwg.mxu0
      %745 = vrot.lane.b32.xlu0 %v423, 112
      %v746 = vpop.permute.xlu0 %745
      %v748 = vsel %vm452, %v423, 0
      %v751 = vsel %vm452, %v746, 0
      %753 = vmatprep.subr.bf16.mxu0 0
      %754 = vmatpush1.bf16.xpose.msra.mxu0 %v751
      %755 = vmatprep.subr.bf16.mxu0 0
      %756 = vmatpush1.bf16.xpose.msra.mxu0 0
      %757 = vmatprep.subr.bf16.mxu0 0
      %758 = vmatpush1.bf16.xpose.msra.mxu0 0
      %759 = vmatprep.subr.bf16.mxu0 0
      %760 = vmatpush1.bf16.xpose.msra.mxu0 0
      %761 = vmatprep.subr.bf16.mxu0 0
      %762 = vmatpush1.bf16.xpose.msra.mxu0 0
      %763 = vmatprep.subr.bf16.mxu0 0
      %764 = vmatpush1.bf16.xpose.msra.mxu0 0
      %765 = vmatprep.subr.bf16.mxu0 0
      %766 = vmatpush1.bf16.xpose.msra.mxu0 0
      %767 = vmatprep.subr.bf16.mxu0 0
      %768 = vmatpush1.bf16.xpose.msra.mxu0 0
      %769 = vmatprep.subr.bf16.mxu0 0
      %770 = vmatpush1.bf16.xpose.msra.mxu0 0
      %771 = vmatprep.subr.bf16.mxu0 0
      %772 = vmatpush1.bf16.xpose.msra.mxu0 0
      %773 = vmatprep.subr.bf16.mxu0 0
      %774 = vmatpush1.bf16.xpose.msra.mxu0 0
      %775 = vmatprep.subr.bf16.mxu0 0
      %776 = vmatpush1.bf16.xpose.msra.mxu0 0
      %777 = vmatprep.subr.bf16.mxu0 0
      %778 = vmatpush1.bf16.xpose.msra.mxu0 0
      %779 = vmatprep.subr.bf16.mxu0 0
      %780 = vmatpush1.bf16.xpose.msra.mxu0 0
      %781 = vmatprep.subr.bf16.mxu0 0
      %782 = vmatpush1.bf16.xpose.msra.mxu0 0
      %783 = vmatprep.subr.bf16.mxu0 0
      %784 = vmatpush1.bf16.xpose.msra.mxu0 0
      %785 = vmatprep.mubr.bf16.mxu0 0
      %786 = vmatmul.mubr.bf16.gmra.mrb[0].mxu0 %v748
      %v787 = vpop.f32.mrb[0].mxu0
      %v788 = vadd.f32 0.0, %v787
      %v789 = vpop.f32.mrb[0].mxu0
      %v790 = vpop.f32.mrb[0].mxu0
      %v791 = vpop.f32.mrb[0].mxu0
      %792 = vdwg.mxu0
      %794 = vrot.lane.b32.xlu0 %v424, 112
      %v795 = vpop.permute.xlu0 %794
      %v797 = vsel %vm452, %v424, 0
      %v800 = vsel %vm452, %v795, 0
      %802 = vmatprep.subr.bf16.mxu0 0
      %803 = vmatpush1.bf16.xpose.msra.mxu0 %v800
      %804 = vmatprep.subr.bf16.mxu0 0
      %805 = vmatpush1.bf16.xpose.msra.mxu0 0
      %806 = vmatprep.subr.bf16.mxu0 0
      %807 = vmatpush1.bf16.xpose.msra.mxu0 0
      %808 = vmatprep.subr.bf16.mxu0 0
      %809 = vmatpush1.bf16.xpose.msra.mxu0 0
      %810 = vmatprep.subr.bf16.mxu0 0
      %811 = vmatpush1.bf16.xpose.msra.mxu0 0
      %812 = vmatprep.subr.bf16.mxu0 0
      %813 = vmatpush1.bf16.xpose.msra.mxu0 0
      %814 = vmatprep.subr.bf16.mxu0 0
      %815 = vmatpush1.bf16.xpose.msra.mxu0 0
      %816 = vmatprep.subr.bf16.mxu0 0
      %817 = vmatpush1.bf16.xpose.msra.mxu0 0
      %818 = vmatprep.subr.bf16.mxu0 0
      %819 = vmatpush1.bf16.xpose.msra.mxu0 0
      %820 = vmatprep.subr.bf16.mxu0 0
      %821 = vmatpush1.bf16.xpose.msra.mxu0 0
      %822 = vmatprep.subr.bf16.mxu0 0
      %823 = vmatpush1.bf16.xpose.msra.mxu0 0
      %824 = vmatprep.subr.bf16.mxu0 0
      %825 = vmatpush1.bf16.xpose.msra.mxu0 0
      %826 = vmatprep.subr.bf16.mxu0 0
      %827 = vmatpush1.bf16.xpose.msra.mxu0 0
      %828 = vmatprep.subr.bf16.mxu0 0
      %829 = vmatpush1.bf16.xpose.msra.mxu0 0
      %830 = vmatprep.subr.bf16.mxu0 0
      %831 = vmatpush1.bf16.xpose.msra.mxu0 0
      %832 = vmatprep.subr.bf16.mxu0 0
      %833 = vmatpush1.bf16.xpose.msra.mxu0 0
      %834 = vmatprep.mubr.bf16.mxu0 0
      %835 = vmatmul.mubr.bf16.gmra.mrb[0].mxu0 %v797
      %v836 = vpop.f32.mrb[0].mxu0
      %v837 = vadd.f32 0.0, %v836
      %v838 = vpop.f32.mrb[0].mxu0
      %v839 = vpop.f32.mrb[0].mxu0
      %v840 = vpop.f32.mrb[0].mxu0
      %841 = vdwg.mxu0
      %843 = vrot.lane.b32.xlu0 %v425, 112
      %v844 = vpop.permute.xlu0 %843
      %v846 = vsel %vm452, %v425, 0
      %v849 = vsel %vm452, %v844, 0
      %851 = vmatprep.subr.bf16.mxu0 0
      %852 = vmatpush1.bf16.xpose.msra.mxu0 %v849
      %853 = vmatprep.subr.bf16.mxu0 0
      %854 = vmatpush1.bf16.xpose.msra.mxu0 0
      %855 = vmatprep.subr.bf16.mxu0 0
      %856 = vmatpush1.bf16.xpose.msra.mxu0 0
      %857 = vmatprep.subr.bf16.mxu0 0
      %858 = vmatpush1.bf16.xpose.msra.mxu0 0
      %859 = vmatprep.subr.bf16.mxu0 0
      %860 = vmatpush1.bf16.xpose.msra.mxu0 0
      %861 = vmatprep.subr.bf16.mxu0 0
      %862 = vmatpush1.bf16.xpose.msra.mxu0 0
      %863 = vmatprep.subr.bf16.mxu0 0
      %864 = vmatpush1.bf16.xpose.msra.mxu0 0
      %865 = vmatprep.subr.bf16.mxu0 0
      %866 = vmatpush1.bf16.xpose.msra.mxu0 0
      %867 = vmatprep.subr.bf16.mxu0 0
      %868 = vmatpush1.bf16.xpose.msra.mxu0 0
      %869 = vmatprep.subr.bf16.mxu0 0
      %870 = vmatpush1.bf16.xpose.msra.mxu0 0
      %871 = vmatprep.subr.bf16.mxu0 0
      %872 = vmatpush1.bf16.xpose.msra.mxu0 0
      %873 = vmatprep.subr.bf16.mxu0 0
      %874 = vmatpush1.bf16.xpose.msra.mxu0 0
      %875 = vmatprep.subr.bf16.mxu0 0
      %876 = vmatpush1.bf16.xpose.msra.mxu0 0
      %877 = vmatprep.subr.bf16.mxu0 0
      %878 = vmatpush1.bf16.xpose.msra.mxu0 0
      %879 = vmatprep.subr.bf16.mxu0 0
      %880 = vmatpush1.bf16.xpose.msra.mxu0 0
      %881 = vmatprep.subr.bf16.mxu0 0
      %882 = vmatpush1.bf16.xpose.msra.mxu0 0
      %883 = vmatprep.mubr.bf16.mxu0 0
      %884 = vmatmul.mubr.bf16.gmra.mrb[0].mxu0 %v846
      %v885 = vpop.f32.mrb[0].mxu0
      %v886 = vadd.f32 0.0, %v885
      %v887 = vpop.f32.mrb[0].mxu0
      %v888 = vpop.f32.mrb[0].mxu0
      %v889 = vpop.f32.mrb[0].mxu0
      %890 = vdwg.mxu0
      %892 = vrot.lane.b32.xlu0 %v426, 112
      %v893 = vpop.permute.xlu0 %892
      %v895 = vsel %vm452, %v426, 0
      %v898 = vsel %vm452, %v893, 0
      %900 = vmatprep.subr.bf16.mxu0 0
      %901 = vmatpush1.bf16.xpose.msra.mxu0 %v898
      %902 = vmatprep.subr.bf16.mxu0 0
      %903 = vmatpush1.bf16.xpose.msra.mxu0 0
      %904 = vmatprep.subr.bf16.mxu0 0
      %905 = vmatpush1.bf16.xpose.msra.mxu0 0
      %906 = vmatprep.subr.bf16.mxu0 0
      %907 = vmatpush1.bf16.xpose.msra.mxu0 0
      %908 = vmatprep.subr.bf16.mxu0 0
      %909 = vmatpush1.bf16.xpose.msra.mxu0 0
      %910 = vmatprep.subr.bf16.mxu0 0
      %911 = vmatpush1.bf16.xpose.msra.mxu0 0
      %912 = vmatprep.subr.bf16.mxu0 0
      %913 = vmatpush1.bf16.xpose.msra.mxu0 0
      %914 = vmatprep.subr.bf16.mxu0 0
      %915 = vmatpush1.bf16.xpose.msra.mxu0 0
      %916 = vmatprep.subr.bf16.mxu0 0
      %917 = vmatpush1.bf16.xpose.msra.mxu0 0
      %918 = vmatprep.subr.bf16.mxu0 0
      %919 = vmatpush1.bf16.xpose.msra.mxu0 0
      %920 = vmatprep.subr.bf16.mxu0 0
      %921 = vmatpush1.bf16.xpose.msra.mxu0 0
      %922 = vmatprep.subr.bf16.mxu0 0
      %923 = vmatpush1.bf16.xpose.msra.mxu0 0
      %924 = vmatprep.subr.bf16.mxu0 0
      %925 = vmatpush1.bf16.xpose.msra.mxu0 0
      %926 = vmatprep.subr.bf16.mxu0 0
      %927 = vmatpush1.bf16.xpose.msra.mxu0 0
      %928 = vmatprep.subr.bf16.mxu0 0
      %929 = vmatpush1.bf16.xpose.msra.mxu0 0
      %930 = vmatprep.subr.bf16.mxu0 0
      %931 = vmatpush1.bf16.xpose.msra.mxu0 0
      %932 = vmatprep.mubr.bf16.mxu0 0
      %933 = vmatmul.mubr.bf16.gmra.mrb[0].mxu0 %v895
      %v934 = vpop.f32.mrb[0].mxu0
      %v935 = vadd.f32 0.0, %v934
      %v936 = vpop.f32.mrb[0].mxu0
      %v937 = vpop.f32.mrb[0].mxu0
      %v938 = vpop.f32.mrb[0].mxu0
      %939 = vdwg.mxu0
      %941 = vrot.lane.b32.xlu0 %v427, 112
      %v942 = vpop.permute.xlu0 %941
      %v944 = vsel %vm452, %v427, 0
      %v947 = vsel %vm452, %v942, 0
      %949 = vmatprep.subr.bf16.mxu0 0
      %950 = vmatpush1.bf16.xpose.msra.mxu0 %v947
      %951 = vmatprep.subr.bf16.mxu0 0
      %952 = vmatpush1.bf16.xpose.msra.mxu0 0
      %953 = vmatprep.subr.bf16.mxu0 0
      %954 = vmatpush1.bf16.xpose.msra.mxu0 0
      %955 = vmatprep.subr.bf16.mxu0 0
      %956 = vmatpush1.bf16.xpose.msra.mxu0 0
      %957 = vmatprep.subr.bf16.mxu0 0
      %958 = vmatpush1.bf16.xpose.msra.mxu0 0
      %959 = vmatprep.subr.bf16.mxu0 0
      %960 = vmatpush1.bf16.xpose.msra.mxu0 0
      %961 = vmatprep.subr.bf16.mxu0 0
      %962 = vmatpush1.bf16.xpose.msra.mxu0 0
      %963 = vmatprep.subr.bf16.mxu0 0
      %964 = vmatpush1.bf16.xpose.msra.mxu0 0
      %965 = vmatprep.subr.bf16.mxu0 0
      %966 = vmatpush1.bf16.xpose.msra.mxu0 0
      %967 = vmatprep.subr.bf16.mxu0 0
      %968 = vmatpush1.bf16.xpose.msra.mxu0 0
      %969 = vmatprep.subr.bf16.mxu0 0
      %970 = vmatpush1.bf16.xpose.msra.mxu0 0
      %971 = vmatprep.subr.bf16.mxu0 0
      %972 = vmatpush1.bf16.xpose.msra.mxu0 0
      %973 = vmatprep.subr.bf16.mxu0 0
      %974 = vmatpush1.bf16.xpose.msra.mxu0 0
      %975 = vmatprep.subr.bf16.mxu0 0
      %976 = vmatpush1.bf16.xpose.msra.mxu0 0
      %977 = vmatprep.subr.bf16.mxu0 0
      %978 = vmatpush1.bf16.xpose.msra.mxu0 0
      %979 = vmatprep.subr.bf16.mxu0 0
      %980 = vmatpush1.bf16.xpose.msra.mxu0 0
      %981 = vmatprep.mubr.bf16.mxu0 0
      %982 = vmatmul.mubr.bf16.gmra.mrb[0].mxu0 %v944
      %v983 = vpop.f32.mrb[0].mxu0
      %v984 = vadd.f32 0.0, %v983
      %v985 = vpop.f32.mrb[0].mxu0
      %v986 = vpop.f32.mrb[0].mxu0
      %v987 = vpop.f32.mrb[0].mxu0
      %988 = vdwg.mxu0
      %990 = vrot.lane.b32.xlu0 %v428, 112
      %v991 = vpop.permute.xlu0 %990
      %v993 = vsel %vm452, %v428, 0
      %v996 = vsel %vm452, %v991, 0
      %998 = vmatprep.subr.bf16.mxu0 0
      %999 = vmatpush1.bf16.xpose.msra.mxu0 %v996
      %1000 = vmatprep.subr.bf16.mxu0 0
      %1001 = vmatpush1.bf16.xpose.msra.mxu0 0
      %1002 = vmatprep.subr.bf16.mxu0 0
      %1003 = vmatpush1.bf16.xpose.msra.mxu0 0
      %1004 = vmatprep.subr.bf16.mxu0 0
      %1005 = vmatpush1.bf16.xpose.msra.mxu0 0
      %1006 = vmatprep.subr.bf16.mxu0 0
      %1007 = vmatpush1.bf16.xpose.msra.mxu0 0
      %1008 = vmatprep.subr.bf16.mxu0 0
      %1009 = vmatpush1.bf16.xpose.msra.mxu0 0
      %1010 = vmatprep.subr.bf16.mxu0 0
      %1011 = vmatpush1.bf16.xpose.msra.mxu0 0
      %1012 = vmatprep.subr.bf16.mxu0 0
      %1013 = vmatpush1.bf16.xpose.msra.mxu0 0
      %1014 = vmatprep.subr.bf16.mxu0 0
      %1015 = vmatpush1.bf16.xpose.msra.mxu0 0
      %1016 = vmatprep.subr.bf16.mxu0 0
      %1017 = vmatpush1.bf16.xpose.msra.mxu0 0
      %1018 = vmatprep.subr.bf16.mxu0 0
      %1019 = vmatpush1.bf16.xpose.msra.mxu0 0
      %1020 = vmatprep.subr.bf16.mxu0 0
      %1021 = vmatpush1.bf16.xpose.msra.mxu0 0
      %1022 = vmatprep.subr.bf16.mxu0 0
      %1023 = vmatpush1.bf16.xpose.msra.mxu0 0
      %1024 = vmatprep.subr.bf16.mxu0 0
      %1025 = vmatpush1.bf16.xpose.msra.mxu0 0
      %1026 = vmatprep.subr.bf16.mxu0 0
      %1027 = vmatpush1.bf16.xpose.msra.mxu0 0
      %1028 = vmatprep.subr.bf16.mxu0 0
      %1029 = vmatpush1.bf16.xpose.msra.mxu0 0
      %1030 = vmatprep.mubr.bf16.mxu0 0
      %1031 = vmatmul.mubr.bf16.gmra.mrb[0].mxu0 %v993
      %v1032 = vpop.f32.mrb[0].mxu0
      %v1033 = vadd.f32 0.0, %v1032
      %v1034 = vpop.f32.mrb[0].mxu0
      %v1035 = vpop.f32.mrb[0].mxu0
      %v1036 = vpop.f32.mrb[0].mxu0
      %1037 = vdwg.mxu0
      %1039 = vrot.lane.b32.xlu0 %v429, 112
      %v1040 = vpop.permute.xlu0 %1039
      %v1042 = vsel %vm452, %v429, 0
      %v1045 = vsel %vm452, %v1040, 0
      %1047 = vmatprep.subr.bf16.mxu0 0
      %1048 = vmatpush1.bf16.xpose.msra.mxu0 %v1045
      %1049 = vmatprep.subr.bf16.mxu0 0
      %1050 = vmatpush1.bf16.xpose.msra.mxu0 0
      %1051 = vmatprep.subr.bf16.mxu0 0
      %1052 = vmatpush1.bf16.xpose.msra.mxu0 0
      %1053 = vmatprep.subr.bf16.mxu0 0
      %1054 = vmatpush1.bf16.xpose.msra.mxu0 0
      %1055 = vmatprep.subr.bf16.mxu0 0
      %1056 = vmatpush1.bf16.xpose.msra.mxu0 0
      %1057 = vmatprep.subr.bf16.mxu0 0
      %1058 = vmatpush1.bf16.xpose.msra.mxu0 0
      %1059 = vmatprep.subr.bf16.mxu0 0
      %1060 = vmatpush1.bf16.xpose.msra.mxu0 0
      %1061 = vmatprep.subr.bf16.mxu0 0
      %1062 = vmatpush1.bf16.xpose.msra.mxu0 0
      %1063 = vmatprep.subr.bf16.mxu0 0
      %1064 = vmatpush1.bf16.xpose.msra.mxu0 0
      %1065 = vmatprep.subr.bf16.mxu0 0
      %1066 = vmatpush1.bf16.xpose.msra.mxu0 0
      %1067 = vmatprep.subr.bf16.mxu0 0
      %1068 = vmatpush1.bf16.xpose.msra.mxu0 0
      %1069 = vmatprep.subr.bf16.mxu0 0
      %1070 = vmatpush1.bf16.xpose.msra.mxu0 0
      %1071 = vmatprep.subr.bf16.mxu0 0
      %1072 = vmatpush1.bf16.xpose.msra.mxu0 0
      %1073 = vmatprep.subr.bf16.mxu0 0
      %1074 = vmatpush1.bf16.xpose.msra.mxu0 0
      %1075 = vmatprep.subr.bf16.mxu0 0
      %1076 = vmatpush1.bf16.xpose.msra.mxu0 0
      %1077 = vmatprep.subr.bf16.mxu0 0
      %1078 = vmatpush1.bf16.xpose.msra.mxu0 0
      %1079 = vmatprep.mubr.bf16.mxu0 0
      %1080 = vmatmul.mubr.bf16.gmra.mrb[0].mxu0 %v1042
      %v1081 = vpop.f32.mrb[0].mxu0
      %v1082 = vadd.f32 0.0, %v1081
      %v1083 = vpop.f32.mrb[0].mxu0
      %v1084 = vpop.f32.mrb[0].mxu0
      %v1085 = vpop.f32.mrb[0].mxu0
      %1086 = vdwg.mxu0
      %1088 = vrot.lane.b32.xlu0 %v430, 112
      %v1089 = vpop.permute.xlu0 %1088
      %v1091 = vsel %vm452, %v430, 0
      %v1094 = vsel %vm452, %v1089, 0
      %1096 = vmatprep.subr.bf16.mxu0 0
      %1097 = vmatpush1.bf16.xpose.msra.mxu0 %v1094
      %1098 = vmatprep.subr.bf16.mxu0 0
      %1099 = vmatpush1.bf16.xpose.msra.mxu0 0
      %1100 = vmatprep.subr.bf16.mxu0 0
      %1101 = vmatpush1.bf16.xpose.msra.mxu0 0
      %1102 = vmatprep.subr.bf16.mxu0 0
      %1103 = vmatpush1.bf16.xpose.msra.mxu0 0
      %1104 = vmatprep.subr.bf16.mxu0 0
      %1105 = vmatpush1.bf16.xpose.msra.mxu0 0
      %1106 = vmatprep.subr.bf16.mxu0 0
      %1107 = vmatpush1.bf16.xpose.msra.mxu0 0
      %1108 = vmatprep.subr.bf16.mxu0 0
      %1109 = vmatpush1.bf16.xpose.msra.mxu0 0
      %1110 = vmatprep.subr.bf16.mxu0 0
      %1111 = vmatpush1.bf16.xpose.msra.mxu0 0
      %1112 = vmatprep.subr.bf16.mxu0 0
      %1113 = vmatpush1.bf16.xpose.msra.mxu0 0
      %1114 = vmatprep.subr.bf16.mxu0 0
      %1115 = vmatpush1.bf16.xpose.msra.mxu0 0
      %1116 = vmatprep.subr.bf16.mxu0 0
      %1117 = vmatpush1.bf16.xpose.msra.mxu0 0
      %1118 = vmatprep.subr.bf16.mxu0 0
      %1119 = vmatpush1.bf16.xpose.msra.mxu0 0
      %1120 = vmatprep.subr.bf16.mxu0 0
      %1121 = vmatpush1.bf16.xpose.msra.mxu0 0
      %1122 = vmatprep.subr.bf16.mxu0 0
      %1123 = vmatpush1.bf16.xpose.msra.mxu0 0
      %1124 = vmatprep.subr.bf16.mxu0 0
      %1125 = vmatpush1.bf16.xpose.msra.mxu0 0
      %1126 = vmatprep.subr.bf16.mxu0 0
      %1127 = vmatpush1.bf16.xpose.msra.mxu0 0
      %1128 = vmatprep.mubr.bf16.mxu0 0
      %1129 = vmatmul.mubr.bf16.gmra.mrb[0].mxu0 %v1091
      %v1130 = vpop.f32.mrb[0].mxu0
      %v1131 = vadd.f32 0.0, %v1130
      %v1132 = vpop.f32.mrb[0].mxu0
      %v1133 = vpop.f32.mrb[0].mxu0
      %v1134 = vpop.f32.mrb[0].mxu0
      %1135 = vdwg.mxu0
      %1137 = vrot.lane.b32.xlu0 %v431, 112
      %v1138 = vpop.permute.xlu0 %1137
      %v1140 = vsel %vm452, %v431, 0
      %v1143 = vsel %vm452, %v1138, 0
      %1145 = vmatprep.subr.bf16.mxu0 0
      %1146 = vmatpush1.bf16.xpose.msra.mxu0 %v1143
      %1147 = vmatprep.subr.bf16.mxu0 0
      %1148 = vmatpush1.bf16.xpose.msra.mxu0 0
      %1149 = vmatprep.subr.bf16.mxu0 0
      %1150 = vmatpush1.bf16.xpose.msra.mxu0 0
      %1151 = vmatprep.subr.bf16.mxu0 0
      %1152 = vmatpush1.bf16.xpose.msra.mxu0 0
      %1153 = vmatprep.subr.bf16.mxu0 0
      %1154 = vmatpush1.bf16.xpose.msra.mxu0 0
      %1155 = vmatprep.subr.bf16.mxu0 0
      %1156 = vmatpush1.bf16.xpose.msra.mxu0 0
      %1157 = vmatprep.subr.bf16.mxu0 0
      %1158 = vmatpush1.bf16.xpose.msra.mxu0 0
      %1159 = vmatprep.subr.bf16.mxu0 0
      %1160 = vmatpush1.bf16.xpose.msra.mxu0 0
      %1161 = vmatprep.subr.bf16.mxu0 0
      %1162 = vmatpush1.bf16.xpose.msra.mxu0 0
      %1163 = vmatprep.subr.bf16.mxu0 0
      %1164 = vmatpush1.bf16.xpose.msra.mxu0 0
      %1165 = vmatprep.subr.bf16.mxu0 0
      %1166 = vmatpush1.bf16.xpose.msra.mxu0 0
      %1167 = vmatprep.subr.bf16.mxu0 0
      %1168 = vmatpush1.bf16.xpose.msra.mxu0 0
      %1169 = vmatprep.subr.bf16.mxu0 0
      %1170 = vmatpush1.bf16.xpose.msra.mxu0 0
      %1171 = vmatprep.subr.bf16.mxu0 0
      %1172 = vmatpush1.bf16.xpose.msra.mxu0 0
      %1173 = vmatprep.subr.bf16.mxu0 0
      %1174 = vmatpush1.bf16.xpose.msra.mxu0 0
      %1175 = vmatprep.subr.bf16.mxu0 0
      %1176 = vmatpush1.bf16.xpose.msra.mxu0 0
      %1177 = vmatprep.mubr.bf16.mxu0 0
      %1178 = vmatmul.mubr.bf16.gmra.mrb[0].mxu0 %v1140
      %v1179 = vpop.f32.mrb[0].mxu0
      %v1180 = vadd.f32 0.0, %v1179
      %v1181 = vpop.f32.mrb[0].mxu0
      %v1182 = vpop.f32.mrb[0].mxu0
      %v1183 = vpop.f32.mrb[0].mxu0
      %1184 = vdwg.mxu0
      %1186 = vrot.lane.b32.xlu0 %v432, 112
      %v1187 = vpop.permute.xlu0 %1186
      %v1189 = vsel %vm452, %v432, 0
      %v1192 = vsel %vm452, %v1187, 0
      %1194 = vmatprep.subr.bf16.mxu0 0
      %1195 = vmatpush1.bf16.xpose.msra.mxu0 %v1192
      %1196 = vmatprep.subr.bf16.mxu0 0
      %1197 = vmatpush1.bf16.xpose.msra.mxu0 0
      %1198 = vmatprep.subr.bf16.mxu0 0
      %1199 = vmatpush1.bf16.xpose.msra.mxu0 0
      %1200 = vmatprep.subr.bf16.mxu0 0
      %1201 = vmatpush1.bf16.xpose.msra.mxu0 0
      %1202 = vmatprep.subr.bf16.mxu0 0
      %1203 = vmatpush1.bf16.xpose.msra.mxu0 0
      %1204 = vmatprep.subr.bf16.mxu0 0
      %1205 = vmatpush1.bf16.xpose.msra.mxu0 0
      %1206 = vmatprep.subr.bf16.mxu0 0
      %1207 = vmatpush1.bf16.xpose.msra.mxu0 0
      %1208 = vmatprep.subr.bf16.mxu0 0
      %1209 = vmatpush1.bf16.xpose.msra.mxu0 0
      %1210 = vmatprep.subr.bf16.mxu0 0
      %1211 = vmatpush1.bf16.xpose.msra.mxu0 0
      %1212 = vmatprep.subr.bf16.mxu0 0
      %1213 = vmatpush1.bf16.xpose.msra.mxu0 0
      %1214 = vmatprep.subr.bf16.mxu0 0
      %1215 = vmatpush1.bf16.xpose.msra.mxu0 0
      %1216 = vmatprep.subr.bf16.mxu0 0
      %1217 = vmatpush1.bf16.xpose.msra.mxu0 0
      %1218 = vmatprep.subr.bf16.mxu0 0
      %1219 = vmatpush1.bf16.xpose.msra.mxu0 0
      %1220 = vmatprep.subr.bf16.mxu0 0
      %1221 = vmatpush1.bf16.xpose.msra.mxu0 0
      %1222 = vmatprep.subr.bf16.mxu0 0
      %1223 = vmatpush1.bf16.xpose.msra.mxu0 0
      %1224 = vmatprep.subr.bf16.mxu0 0
      %1225 = vmatpush1.bf16.xpose.msra.mxu0 0
      %1226 = vmatprep.mubr.bf16.mxu0 0
      %1227 = vmatmul.mubr.bf16.gmra.mrb[0].mxu0 %v1189
      %v1228 = vpop.f32.mrb[0].mxu0
      %v1229 = vadd.f32 0.0, %v1228
      %v1230 = vpop.f32.mrb[0].mxu0
      %v1231 = vpop.f32.mrb[0].mxu0
      %v1232 = vpop.f32.mrb[0].mxu0
      %1233 = vdwg.mxu0
      %1235 = vrot.lane.b32.xlu0 %v433, 112
      %v1236 = vpop.permute.xlu0 %1235
      %v1238 = vsel %vm452, %v433, 0
      %v1241 = vsel %vm452, %v1236, 0
      %1243 = vmatprep.subr.bf16.mxu0 0
      %1244 = vmatpush1.bf16.xpose.msra.mxu0 %v1241
      %1245 = vmatprep.subr.bf16.mxu0 0
      %1246 = vmatpush1.bf16.xpose.msra.mxu0 0
      %1247 = vmatprep.subr.bf16.mxu0 0
      %1248 = vmatpush1.bf16.xpose.msra.mxu0 0
      %1249 = vmatprep.subr.bf16.mxu0 0
      %1250 = vmatpush1.bf16.xpose.msra.mxu0 0
      %1251 = vmatprep.subr.bf16.mxu0 0
      %1252 = vmatpush1.bf16.xpose.msra.mxu0 0
      %1253 = vmatprep.subr.bf16.mxu0 0
      %1254 = vmatpush1.bf16.xpose.msra.mxu0 0
      %1255 = vmatprep.subr.bf16.mxu0 0
      %1256 = vmatpush1.bf16.xpose.msra.mxu0 0
      %1257 = vmatprep.subr.bf16.mxu0 0
      %1258 = vmatpush1.bf16.xpose.msra.mxu0 0
      %1259 = vmatprep.subr.bf16.mxu0 0
      %1260 = vmatpush1.bf16.xpose.msra.mxu0 0
      %1261 = vmatprep.subr.bf16.mxu0 0
      %1262 = vmatpush1.bf16.xpose.msra.mxu0 0
      %1263 = vmatprep.subr.bf16.mxu0 0
      %1264 = vmatpush1.bf16.xpose.msra.mxu0 0
      %1265 = vmatprep.subr.bf16.mxu0 0
      %1266 = vmatpush1.bf16.xpose.msra.mxu0 0
      %1267 = vmatprep.subr.bf16.mxu0 0
      %1268 = vmatpush1.bf16.xpose.msra.mxu0 0
      %1269 = vmatprep.subr.bf16.mxu0 0
      %1270 = vmatpush1.bf16.xpose.msra.mxu0 0
      %1271 = vmatprep.subr.bf16.mxu0 0
      %1272 = vmatpush1.bf16.xpose.msra.mxu0 0
      %1273 = vmatprep.subr.bf16.mxu0 0
      %1274 = vmatpush1.bf16.xpose.msra.mxu0 0
      %1275 = vmatprep.mubr.bf16.mxu0 0
      %1276 = vmatmul.mubr.bf16.gmra.mrb[0].mxu0 %v1238
      %v1277 = vpop.f32.mrb[0].mxu0
      %v1278 = vadd.f32 0.0, %v1277
      %v1279 = vpop.f32.mrb[0].mxu0
      %v1280 = vpop.f32.mrb[0].mxu0
      %v1281 = vpop.f32.mrb[0].mxu0
      %1282 = vdwg.mxu0
      %1284 = vrot.lane.b32.xlu0 %v434, 112
      %v1285 = vpop.permute.xlu0 %1284
      %v1287 = vsel %vm452, %v434, 0
      %v1290 = vsel %vm452, %v1285, 0
      %1292 = vmatprep.subr.bf16.mxu0 0
      %1293 = vmatpush1.bf16.xpose.msra.mxu0 %v1290
      %1294 = vmatprep.subr.bf16.mxu0 0
      %1295 = vmatpush1.bf16.xpose.msra.mxu0 0
      %1296 = vmatprep.subr.bf16.mxu0 0
      %1297 = vmatpush1.bf16.xpose.msra.mxu0 0
      %1298 = vmatprep.subr.bf16.mxu0 0
      %1299 = vmatpush1.bf16.xpose.msra.mxu0 0
      %1300 = vmatprep.subr.bf16.mxu0 0
      %1301 = vmatpush1.bf16.xpose.msra.mxu0 0
      %1302 = vmatprep.subr.bf16.mxu0 0
      %1303 = vmatpush1.bf16.xpose.msra.mxu0 0
      %1304 = vmatprep.subr.bf16.mxu0 0
      %1305 = vmatpush1.bf16.xpose.msra.mxu0 0
      %1306 = vmatprep.subr.bf16.mxu0 0
      %1307 = vmatpush1.bf16.xpose.msra.mxu0 0
      %1308 = vmatprep.subr.bf16.mxu0 0
      %1309 = vmatpush1.bf16.xpose.msra.mxu0 0
      %1310 = vmatprep.subr.bf16.mxu0 0
      %1311 = vmatpush1.bf16.xpose.msra.mxu0 0
      %1312 = vmatprep.subr.bf16.mxu0 0
      %1313 = vmatpush1.bf16.xpose.msra.mxu0 0
      %1314 = vmatprep.subr.bf16.mxu0 0
      %1315 = vmatpush1.bf16.xpose.msra.mxu0 0
      %1316 = vmatprep.subr.bf16.mxu0 0
      %1317 = vmatpush1.bf16.xpose.msra.mxu0 0
      %1318 = vmatprep.subr.bf16.mxu0 0
      %1319 = vmatpush1.bf16.xpose.msra.mxu0 0
      %1320 = vmatprep.subr.bf16.mxu0 0
      %1321 = vmatpush1.bf16.xpose.msra.mxu0 0
      %1322 = vmatprep.subr.bf16.mxu0 0
      %1323 = vmatpush1.bf16.xpose.msra.mxu0 0
      %1324 = vmatprep.mubr.bf16.mxu0 0
      %1325 = vmatmul.mubr.bf16.gmra.mrb[0].mxu0 %v1287
      %v1326 = vpop.f32.mrb[0].mxu0
      %v1327 = vadd.f32 0.0, %v1326
      %v1328 = vpop.f32.mrb[0].mxu0
      %v1329 = vpop.f32.mrb[0].mxu0
      %v1330 = vpop.f32.mrb[0].mxu0
      %1331 = vdwg.mxu0
      %1333 = vrot.lane.b32.xlu0 %v435, 112
      %v1334 = vpop.permute.xlu0 %1333
      %v1336 = vsel %vm452, %v435, 0
      %v1339 = vsel %vm452, %v1334, 0
      %1341 = vmatprep.subr.bf16.mxu0 0
      %1342 = vmatpush1.bf16.xpose.msra.mxu0 %v1339
      %1343 = vmatprep.subr.bf16.mxu0 0
      %1344 = vmatpush1.bf16.xpose.msra.mxu0 0
      %1345 = vmatprep.subr.bf16.mxu0 0
      %1346 = vmatpush1.bf16.xpose.msra.mxu0 0
      %1347 = vmatprep.subr.bf16.mxu0 0
      %1348 = vmatpush1.bf16.xpose.msra.mxu0 0
      %1349 = vmatprep.subr.bf16.mxu0 0
      %1350 = vmatpush1.bf16.xpose.msra.mxu0 0
      %1351 = vmatprep.subr.bf16.mxu0 0
      %1352 = vmatpush1.bf16.xpose.msra.mxu0 0
      %1353 = vmatprep.subr.bf16.mxu0 0
      %1354 = vmatpush1.bf16.xpose.msra.mxu0 0
      %1355 = vmatprep.subr.bf16.mxu0 0
      %1356 = vmatpush1.bf16.xpose.msra.mxu0 0
      %1357 = vmatprep.subr.bf16.mxu0 0
      %1358 = vmatpush1.bf16.xpose.msra.mxu0 0
      %1359 = vmatprep.subr.bf16.mxu0 0
      %1360 = vmatpush1.bf16.xpose.msra.mxu0 0
      %1361 = vmatprep.subr.bf16.mxu0 0
      %1362 = vmatpush1.bf16.xpose.msra.mxu0 0
      %1363 = vmatprep.subr.bf16.mxu0 0
      %1364 = vmatpush1.bf16.xpose.msra.mxu0 0
      %1365 = vmatprep.subr.bf16.mxu0 0
      %1366 = vmatpush1.bf16.xpose.msra.mxu0 0
      %1367 = vmatprep.subr.bf16.mxu0 0
      %1368 = vmatpush1.bf16.xpose.msra.mxu0 0
      %1369 = vmatprep.subr.bf16.mxu0 0
      %1370 = vmatpush1.bf16.xpose.msra.mxu0 0
      %1371 = vmatprep.subr.bf16.mxu0 0
      %1372 = vmatpush1.bf16.xpose.msra.mxu0 0
      %1373 = vmatprep.mubr.bf16.mxu0 0
      %1374 = vmatmul.mubr.bf16.gmra.mrb[0].mxu0 %v1336
      %v1375 = vpop.f32.mrb[0].mxu0
      %v1376 = vadd.f32 0.0, %v1375
      %v1377 = vpop.f32.mrb[0].mxu0
      %v1378 = vpop.f32.mrb[0].mxu0
      %v1379 = vpop.f32.mrb[0].mxu0
      %1380 = vdwg.mxu0
      %1382 = vrot.lane.b32.xlu0 %v436, 112
      %v1383 = vpop.permute.xlu0 %1382
      %v1385 = vsel %vm452, %v436, 0
      %v1388 = vsel %vm452, %v1383, 0
      %1390 = vmatprep.subr.bf16.mxu0 0
      %1391 = vmatpush1.bf16.xpose.msra.mxu0 %v1388
      %1392 = vmatprep.subr.bf16.mxu0 0
      %1393 = vmatpush1.bf16.xpose.msra.mxu0 0
      %1394 = vmatprep.subr.bf16.mxu0 0
      %1395 = vmatpush1.bf16.xpose.msra.mxu0 0
      %1396 = vmatprep.subr.bf16.mxu0 0
      %1397 = vmatpush1.bf16.xpose.msra.mxu0 0
      %1398 = vmatprep.subr.bf16.mxu0 0
      %1399 = vmatpush1.bf16.xpose.msra.mxu0 0
      %1400 = vmatprep.subr.bf16.mxu0 0
      %1401 = vmatpush1.bf16.xpose.msra.mxu0 0
      %1402 = vmatprep.subr.bf16.mxu0 0
      %1403 = vmatpush1.bf16.xpose.msra.mxu0 0
      %1404 = vmatprep.subr.bf16.mxu0 0
      %1405 = vmatpush1.bf16.xpose.msra.mxu0 0
      %1406 = vmatprep.subr.bf16.mxu0 0
      %1407 = vmatpush1.bf16.xpose.msra.mxu0 0
      %1408 = vmatprep.subr.bf16.mxu0 0
      %1409 = vmatpush1.bf16.xpose.msra.mxu0 0
      %1410 = vmatprep.subr.bf16.mxu0 0
      %1411 = vmatpush1.bf16.xpose.msra.mxu0 0
      %1412 = vmatprep.subr.bf16.mxu0 0
      %1413 = vmatpush1.bf16.xpose.msra.mxu0 0
      %1414 = vmatprep.subr.bf16.mxu0 0
      %1415 = vmatpush1.bf16.xpose.msra.mxu0 0
      %1416 = vmatprep.subr.bf16.mxu0 0
      %1417 = vmatpush1.bf16.xpose.msra.mxu0 0
      %1418 = vmatprep.subr.bf16.mxu0 0
      %1419 = vmatpush1.bf16.xpose.msra.mxu0 0
      %1420 = vmatprep.subr.bf16.mxu0 0
      %1421 = vmatpush1.bf16.xpose.msra.mxu0 0
      %1422 = vmatprep.mubr.bf16.mxu0 0
      %1423 = vmatmul.mubr.bf16.gmra.mrb[0].mxu0 %v1385
      %v1424 = vpop.f32.mrb[0].mxu0
      %v1425 = vadd.f32 0.0, %v1424
      %v1426 = vpop.f32.mrb[0].mxu0
      %v1427 = vpop.f32.mrb[0].mxu0
      %v1428 = vpop.f32.mrb[0].mxu0
      %1429 = vdwg.mxu0
      %1431 = vrot.lane.b32.xlu0 %v437, 112
      %v1432 = vpop.permute.xlu0 %1431
      %v1434 = vsel %vm452, %v437, 0
      %v1437 = vsel %vm452, %v1432, 0
      %1439 = vmatprep.subr.bf16.mxu0 0
      %1440 = vmatpush1.bf16.xpose.msra.mxu0 %v1437
      %1441 = vmatprep.subr.bf16.mxu0 0
      %1442 = vmatpush1.bf16.xpose.msra.mxu0 0
      %1443 = vmatprep.subr.bf16.mxu0 0
      %1444 = vmatpush1.bf16.xpose.msra.mxu0 0
      %1445 = vmatprep.subr.bf16.mxu0 0
      %1446 = vmatpush1.bf16.xpose.msra.mxu0 0
      %1447 = vmatprep.subr.bf16.mxu0 0
      %1448 = vmatpush1.bf16.xpose.msra.mxu0 0
      %1449 = vmatprep.subr.bf16.mxu0 0
      %1450 = vmatpush1.bf16.xpose.msra.mxu0 0
      %1451 = vmatprep.subr.bf16.mxu0 0
      %1452 = vmatpush1.bf16.xpose.msra.mxu0 0
      %1453 = vmatprep.subr.bf16.mxu0 0
      %1454 = vmatpush1.bf16.xpose.msra.mxu0 0
      %1455 = vmatprep.subr.bf16.mxu0 0
      %1456 = vmatpush1.bf16.xpose.msra.mxu0 0
      %1457 = vmatprep.subr.bf16.mxu0 0
      %1458 = vmatpush1.bf16.xpose.msra.mxu0 0
      %1459 = vmatprep.subr.bf16.mxu0 0
      %1460 = vmatpush1.bf16.xpose.msra.mxu0 0
      %1461 = vmatprep.subr.bf16.mxu0 0
      %1462 = vmatpush1.bf16.xpose.msra.mxu0 0
      %1463 = vmatprep.subr.bf16.mxu0 0
      %1464 = vmatpush1.bf16.xpose.msra.mxu0 0
      %1465 = vmatprep.subr.bf16.mxu0 0
      %1466 = vmatpush1.bf16.xpose.msra.mxu0 0
      %1467 = vmatprep.subr.bf16.mxu0 0
      %1468 = vmatpush1.bf16.xpose.msra.mxu0 0
      %1469 = vmatprep.subr.bf16.mxu0 0
      %1470 = vmatpush1.bf16.xpose.msra.mxu0 0
      %1471 = vmatprep.mubr.bf16.mxu0 0
      %1472 = vmatmul.mubr.bf16.gmra.mrb[0].mxu0 %v1434
      %v1473 = vpop.f32.mrb[0].mxu0
      %v1474 = vadd.f32 0.0, %v1473
      %v1475 = vpop.f32.mrb[0].mxu0
      %v1476 = vpop.f32.mrb[0].mxu0
      %v1477 = vpop.f32.mrb[0].mxu0
      %1478 = vdwg.mxu0
      %1480 = vrot.lane.b32.xlu0 %v438, 112
      %v1481 = vpop.permute.xlu0 %1480
      %v1483 = vsel %vm452, %v438, 0
      %v1486 = vsel %vm452, %v1481, 0
      %1488 = vmatprep.subr.bf16.mxu0 0
      %1489 = vmatpush1.bf16.xpose.msra.mxu0 %v1486
      %1490 = vmatprep.subr.bf16.mxu0 0
      %1491 = vmatpush1.bf16.xpose.msra.mxu0 0
      %1492 = vmatprep.subr.bf16.mxu0 0
      %1493 = vmatpush1.bf16.xpose.msra.mxu0 0
      %1494 = vmatprep.subr.bf16.mxu0 0
      %1495 = vmatpush1.bf16.xpose.msra.mxu0 0
      %1496 = vmatprep.subr.bf16.mxu0 0
      %1497 = vmatpush1.bf16.xpose.msra.mxu0 0
      %1498 = vmatprep.subr.bf16.mxu0 0
      %1499 = vmatpush1.bf16.xpose.msra.mxu0 0
      %1500 = vmatprep.subr.bf16.mxu0 0
      %1501 = vmatpush1.bf16.xpose.msra.mxu0 0
      %1502 = vmatprep.subr.bf16.mxu0 0
      %1503 = vmatpush1.bf16.xpose.msra.mxu0 0
      %1504 = vmatprep.subr.bf16.mxu0 0
      %1505 = vmatpush1.bf16.xpose.msra.mxu0 0
      %1506 = vmatprep.subr.bf16.mxu0 0
      %1507 = vmatpush1.bf16.xpose.msra.mxu0 0
      %1508 = vmatprep.subr.bf16.mxu0 0
      %1509 = vmatpush1.bf16.xpose.msra.mxu0 0
      %1510 = vmatprep.subr.bf16.mxu0 0
      %1511 = vmatpush1.bf16.xpose.msra.mxu0 0
      %1512 = vmatprep.subr.bf16.mxu0 0
      %1513 = vmatpush1.bf16.xpose.msra.mxu0 0
      %1514 = vmatprep.subr.bf16.mxu0 0
      %1515 = vmatpush1.bf16.xpose.msra.mxu0 0
      %1516 = vmatprep.subr.bf16.mxu0 0
      %1517 = vmatpush1.bf16.xpose.msra.mxu0 0
      %1518 = vmatprep.subr.bf16.mxu0 0
      %1519 = vmatpush1.bf16.xpose.msra.mxu0 0
      %1520 = vmatprep.mubr.bf16.mxu0 0
      %1521 = vmatmul.mubr.bf16.gmra.mrb[0].mxu0 %v1483
      %v1522 = vpop.f32.mrb[0].mxu0
      %v1523 = vadd.f32 0.0, %v1522
      %v1524 = vpop.f32.mrb[0].mxu0
      %v1525 = vpop.f32.mrb[0].mxu0
      %v1526 = vpop.f32.mrb[0].mxu0
      %1527 = vdwg.mxu0
      %1529 = vrot.lane.b32.xlu0 %v439, 112
      %v1530 = vpop.permute.xlu0 %1529
      %v1532 = vsel %vm452, %v439, 0
      %v1535 = vsel %vm452, %v1530, 0
      %1537 = vmatprep.subr.bf16.mxu0 0
      %1538 = vmatpush1.bf16.xpose.msra.mxu0 %v1535
      %1539 = vmatprep.subr.bf16.mxu0 0
      %1540 = vmatpush1.bf16.xpose.msra.mxu0 0
      %1541 = vmatprep.subr.bf16.mxu0 0
      %1542 = vmatpush1.bf16.xpose.msra.mxu0 0
      %1543 = vmatprep.subr.bf16.mxu0 0
      %1544 = vmatpush1.bf16.xpose.msra.mxu0 0
      %1545 = vmatprep.subr.bf16.mxu0 0
      %1546 = vmatpush1.bf16.xpose.msra.mxu0 0
      %1547 = vmatprep.subr.bf16.mxu0 0
      %1548 = vmatpush1.bf16.xpose.msra.mxu0 0
      %1549 = vmatprep.subr.bf16.mxu0 0
      %1550 = vmatpush1.bf16.xpose.msra.mxu0 0
      %1551 = vmatprep.subr.bf16.mxu0 0
      %1552 = vmatpush1.bf16.xpose.msra.mxu0 0
      %1553 = vmatprep.subr.bf16.mxu0 0
      %1554 = vmatpush1.bf16.xpose.msra.mxu0 0
      %1555 = vmatprep.subr.bf16.mxu0 0
      %1556 = vmatpush1.bf16.xpose.msra.mxu0 0
      %1557 = vmatprep.subr.bf16.mxu0 0
      %1558 = vmatpush1.bf16.xpose.msra.mxu0 0
      %1559 = vmatprep.subr.bf16.mxu0 0
      %1560 = vmatpush1.bf16.xpose.msra.mxu0 0
      %1561 = vmatprep.subr.bf16.mxu0 0
      %1562 = vmatpush1.bf16.xpose.msra.mxu0 0
      %1563 = vmatprep.subr.bf16.mxu0 0
      %1564 = vmatpush1.bf16.xpose.msra.mxu0 0
      %1565 = vmatprep.subr.bf16.mxu0 0
      %1566 = vmatpush1.bf16.xpose.msra.mxu0 0
      %1567 = vmatprep.subr.bf16.mxu0 0
      %1568 = vmatpush1.bf16.xpose.msra.mxu0 0
      %1569 = vmatprep.mubr.bf16.mxu0 0
      %1570 = vmatmul.mubr.bf16.gmra.mrb[0].mxu0 %v1532
      %v1571 = vpop.f32.mrb[0].mxu0
      %v1572 = vadd.f32 0.0, %v1571
      %v1573 = vpop.f32.mrb[0].mxu0
      %v1574 = vpop.f32.mrb[0].mxu0
      %v1575 = vpop.f32.mrb[0].mxu0
      %1576 = vdwg.mxu0
      %1578 = vrot.lane.b32.xlu0 %v440, 112
      %v1579 = vpop.permute.xlu0 %1578
      %v1581 = vsel %vm452, %v440, 0
      %v1584 = vsel %vm452, %v1579, 0
      %1586 = vmatprep.subr.bf16.mxu0 0
      %1587 = vmatpush1.bf16.xpose.msra.mxu0 %v1584
      %1588 = vmatprep.subr.bf16.mxu0 0
      %1589 = vmatpush1.bf16.xpose.msra.mxu0 0
      %1590 = vmatprep.subr.bf16.mxu0 0
      %1591 = vmatpush1.bf16.xpose.msra.mxu0 0
      %1592 = vmatprep.subr.bf16.mxu0 0
      %1593 = vmatpush1.bf16.xpose.msra.mxu0 0
      %1594 = vmatprep.subr.bf16.mxu0 0
      %1595 = vmatpush1.bf16.xpose.msra.mxu0 0
      %1596 = vmatprep.subr.bf16.mxu0 0
      %1597 = vmatpush1.bf16.xpose.msra.mxu0 0
      %1598 = vmatprep.subr.bf16.mxu0 0
      %1599 = vmatpush1.bf16.xpose.msra.mxu0 0
      %1600 = vmatprep.subr.bf16.mxu0 0
      %1601 = vmatpush1.bf16.xpose.msra.mxu0 0
      %1602 = vmatprep.subr.bf16.mxu0 0
      %1603 = vmatpush1.bf16.xpose.msra.mxu0 0
      %1604 = vmatprep.subr.bf16.mxu0 0
      %1605 = vmatpush1.bf16.xpose.msra.mxu0 0
      %1606 = vmatprep.subr.bf16.mxu0 0
      %1607 = vmatpush1.bf16.xpose.msra.mxu0 0
      %1608 = vmatprep.subr.bf16.mxu0 0
      %1609 = vmatpush1.bf16.xpose.msra.mxu0 0
      %1610 = vmatprep.subr.bf16.mxu0 0
      %1611 = vmatpush1.bf16.xpose.msra.mxu0 0
      %1612 = vmatprep.subr.bf16.mxu0 0
      %1613 = vmatpush1.bf16.xpose.msra.mxu0 0
      %1614 = vmatprep.subr.bf16.mxu0 0
      %1615 = vmatpush1.bf16.xpose.msra.mxu0 0
      %1616 = vmatprep.subr.bf16.mxu0 0
      %1617 = vmatpush1.bf16.xpose.msra.mxu0 0
      %1618 = vmatprep.mubr.bf16.mxu0 0
      %1619 = vmatmul.mubr.bf16.gmra.mrb[0].mxu0 %v1581
      %v1620 = vpop.f32.mrb[0].mxu0
      %v1621 = vadd.f32 0.0, %v1620
      %v1622 = vpop.f32.mrb[0].mxu0
      %v1623 = vpop.f32.mrb[0].mxu0
      %v1624 = vpop.f32.mrb[0].mxu0
      %1625 = vdwg.mxu0
      %1627 = vrot.lane.b32.xlu0 %v441, 112
      %v1628 = vpop.permute.xlu0 %1627
      %v1630 = vsel %vm452, %v441, 0
      %v1633 = vsel %vm452, %v1628, 0
      %1635 = vmatprep.subr.bf16.mxu0 0
      %1636 = vmatpush1.bf16.xpose.msra.mxu0 %v1633
      %1637 = vmatprep.subr.bf16.mxu0 0
      %1638 = vmatpush1.bf16.xpose.msra.mxu0 0
      %1639 = vmatprep.subr.bf16.mxu0 0
      %1640 = vmatpush1.bf16.xpose.msra.mxu0 0
      %1641 = vmatprep.subr.bf16.mxu0 0
      %1642 = vmatpush1.bf16.xpose.msra.mxu0 0
      %1643 = vmatprep.subr.bf16.mxu0 0
      %1644 = vmatpush1.bf16.xpose.msra.mxu0 0
      %1645 = vmatprep.subr.bf16.mxu0 0
      %1646 = vmatpush1.bf16.xpose.msra.mxu0 0
      %1647 = vmatprep.subr.bf16.mxu0 0
      %1648 = vmatpush1.bf16.xpose.msra.mxu0 0
      %1649 = vmatprep.subr.bf16.mxu0 0
      %1650 = vmatpush1.bf16.xpose.msra.mxu0 0
      %1651 = vmatprep.subr.bf16.mxu0 0
      %1652 = vmatpush1.bf16.xpose.msra.mxu0 0
      %1653 = vmatprep.subr.bf16.mxu0 0
      %1654 = vmatpush1.bf16.xpose.msra.mxu0 0
      %1655 = vmatprep.subr.bf16.mxu0 0
      %1656 = vmatpush1.bf16.xpose.msra.mxu0 0
      %1657 = vmatprep.subr.bf16.mxu0 0
      %1658 = vmatpush1.bf16.xpose.msra.mxu0 0
      %1659 = vmatprep.subr.bf16.mxu0 0
      %1660 = vmatpush1.bf16.xpose.msra.mxu0 0
      %1661 = vmatprep.subr.bf16.mxu0 0
      %1662 = vmatpush1.bf16.xpose.msra.mxu0 0
      %1663 = vmatprep.subr.bf16.mxu0 0
      %1664 = vmatpush1.bf16.xpose.msra.mxu0 0
      %1665 = vmatprep.subr.bf16.mxu0 0
      %1666 = vmatpush1.bf16.xpose.msra.mxu0 0
      %1667 = vmatprep.mubr.bf16.mxu0 0
      %1668 = vmatmul.mubr.bf16.gmra.mrb[0].mxu0 %v1630
      %v1669 = vpop.f32.mrb[0].mxu0
      %v1670 = vadd.f32 0.0, %v1669
      %v1671 = vpop.f32.mrb[0].mxu0
      %v1672 = vpop.f32.mrb[0].mxu0
      %v1673 = vpop.f32.mrb[0].mxu0
      %1674 = vdwg.mxu0
      %1676 = vrot.lane.b32.xlu0 %v442, 112
      %v1677 = vpop.permute.xlu0 %1676
      %v1679 = vsel %vm452, %v442, 0
      %v1682 = vsel %vm452, %v1677, 0
      %1684 = vmatprep.subr.bf16.mxu0 0
      %1685 = vmatpush1.bf16.xpose.msra.mxu0 %v1682
      %1686 = vmatprep.subr.bf16.mxu0 0
      %1687 = vmatpush1.bf16.xpose.msra.mxu0 0
      %1688 = vmatprep.subr.bf16.mxu0 0
      %1689 = vmatpush1.bf16.xpose.msra.mxu0 0
      %1690 = vmatprep.subr.bf16.mxu0 0
      %1691 = vmatpush1.bf16.xpose.msra.mxu0 0
      %1692 = vmatprep.subr.bf16.mxu0 0
      %1693 = vmatpush1.bf16.xpose.msra.mxu0 0
      %1694 = vmatprep.subr.bf16.mxu0 0
      %1695 = vmatpush1.bf16.xpose.msra.mxu0 0
      %1696 = vmatprep.subr.bf16.mxu0 0
      %1697 = vmatpush1.bf16.xpose.msra.mxu0 0
      %1698 = vmatprep.subr.bf16.mxu0 0
      %1699 = vmatpush1.bf16.xpose.msra.mxu0 0
      %1700 = vmatprep.subr.bf16.mxu0 0
      %1701 = vmatpush1.bf16.xpose.msra.mxu0 0
      %1702 = vmatprep.subr.bf16.mxu0 0
      %1703 = vmatpush1.bf16.xpose.msra.mxu0 0
      %1704 = vmatprep.subr.bf16.mxu0 0
      %1705 = vmatpush1.bf16.xpose.msra.mxu0 0
      %1706 = vmatprep.subr.bf16.mxu0 0
      %1707 = vmatpush1.bf16.xpose.msra.mxu0 0
      %1708 = vmatprep.subr.bf16.mxu0 0
      %1709 = vmatpush1.bf16.xpose.msra.mxu0 0
      %1710 = vmatprep.subr.bf16.mxu0 0
      %1711 = vmatpush1.bf16.xpose.msra.mxu0 0
      %1712 = vmatprep.subr.bf16.mxu0 0
      %1713 = vmatpush1.bf16.xpose.msra.mxu0 0
      %1714 = vmatprep.subr.bf16.mxu0 0
      %1715 = vmatpush1.bf16.xpose.msra.mxu0 0
      %1716 = vmatprep.mubr.bf16.mxu0 0
      %1717 = vmatmul.mubr.bf16.gmra.mrb[0].mxu0 %v1679
      %v1718 = vpop.f32.mrb[0].mxu0
      %v1719 = vadd.f32 0.0, %v1718
      %v1720 = vpop.f32.mrb[0].mxu0
      %v1721 = vpop.f32.mrb[0].mxu0
      %v1722 = vpop.f32.mrb[0].mxu0
      %1723 = vdwg.mxu0
      %1725 = vrot.lane.b32.xlu0 %v443, 112
      %v1726 = vpop.permute.xlu0 %1725
      %v1728 = vsel %vm452, %v443, 0
      %v1731 = vsel %vm452, %v1726, 0
      %1733 = vmatprep.subr.bf16.mxu0 0
      %1734 = vmatpush1.bf16.xpose.msra.mxu0 %v1731
      %1735 = vmatprep.subr.bf16.mxu0 0
      %1736 = vmatpush1.bf16.xpose.msra.mxu0 0
      %1737 = vmatprep.subr.bf16.mxu0 0
      %1738 = vmatpush1.bf16.xpose.msra.mxu0 0
      %1739 = vmatprep.subr.bf16.mxu0 0
      %1740 = vmatpush1.bf16.xpose.msra.mxu0 0
      %1741 = vmatprep.subr.bf16.mxu0 0
      %1742 = vmatpush1.bf16.xpose.msra.mxu0 0
      %1743 = vmatprep.subr.bf16.mxu0 0
      %1744 = vmatpush1.bf16.xpose.msra.mxu0 0
      %1745 = vmatprep.subr.bf16.mxu0 0
      %1746 = vmatpush1.bf16.xpose.msra.mxu0 0
      %1747 = vmatprep.subr.bf16.mxu0 0
      %1748 = vmatpush1.bf16.xpose.msra.mxu0 0
      %1749 = vmatprep.subr.bf16.mxu0 0
      %1750 = vmatpush1.bf16.xpose.msra.mxu0 0
      %1751 = vmatprep.subr.bf16.mxu0 0
      %1752 = vmatpush1.bf16.xpose.msra.mxu0 0
      %1753 = vmatprep.subr.bf16.mxu0 0
      %1754 = vmatpush1.bf16.xpose.msra.mxu0 0
      %1755 = vmatprep.subr.bf16.mxu0 0
      %1756 = vmatpush1.bf16.xpose.msra.mxu0 0
      %1757 = vmatprep.subr.bf16.mxu0 0
      %1758 = vmatpush1.bf16.xpose.msra.mxu0 0
      %1759 = vmatprep.subr.bf16.mxu0 0
      %1760 = vmatpush1.bf16.xpose.msra.mxu0 0
      %1761 = vmatprep.subr.bf16.mxu0 0
      %1762 = vmatpush1.bf16.xpose.msra.mxu0 0
      %1763 = vmatprep.subr.bf16.mxu0 0
      %1764 = vmatpush1.bf16.xpose.msra.mxu0 0
      %1765 = vmatprep.mubr.bf16.mxu0 0
      %1766 = vmatmul.mubr.bf16.gmra.mrb[0].mxu0 %v1728
      %v1767 = vpop.f32.mrb[0].mxu0
      %v1768 = vadd.f32 0.0, %v1767
      %v1769 = vpop.f32.mrb[0].mxu0
      %v1770 = vpop.f32.mrb[0].mxu0
      %v1771 = vpop.f32.mrb[0].mxu0
      %1772 = vdwg.mxu0
      %1774 = vrot.lane.b32.xlu0 %v444, 112
      %v1775 = vpop.permute.xlu0 %1774
      %v1777 = vsel %vm452, %v444, 0
      %v1780 = vsel %vm452, %v1775, 0
      %1782 = vmatprep.subr.bf16.mxu0 0
      %1783 = vmatpush1.bf16.xpose.msra.mxu0 %v1780
      %1784 = vmatprep.subr.bf16.mxu0 0
      %1785 = vmatpush1.bf16.xpose.msra.mxu0 0
      %1786 = vmatprep.subr.bf16.mxu0 0
      %1787 = vmatpush1.bf16.xpose.msra.mxu0 0
      %1788 = vmatprep.subr.bf16.mxu0 0
      %1789 = vmatpush1.bf16.xpose.msra.mxu0 0
      %1790 = vmatprep.subr.bf16.mxu0 0
      %1791 = vmatpush1.bf16.xpose.msra.mxu0 0
      %1792 = vmatprep.subr.bf16.mxu0 0
      %1793 = vmatpush1.bf16.xpose.msra.mxu0 0
      %1794 = vmatprep.subr.bf16.mxu0 0
      %1795 = vmatpush1.bf16.xpose.msra.mxu0 0
      %1796 = vmatprep.subr.bf16.mxu0 0
      %1797 = vmatpush1.bf16.xpose.msra.mxu0 0
      %1798 = vmatprep.subr.bf16.mxu0 0
      %1799 = vmatpush1.bf16.xpose.msra.mxu0 0
      %1800 = vmatprep.subr.bf16.mxu0 0
      %1801 = vmatpush1.bf16.xpose.msra.mxu0 0
      %1802 = vmatprep.subr.bf16.mxu0 0
      %1803 = vmatpush1.bf16.xpose.msra.mxu0 0
      %1804 = vmatprep.subr.bf16.mxu0 0
      %1805 = vmatpush1.bf16.xpose.msra.mxu0 0
      %1806 = vmatprep.subr.bf16.mxu0 0
      %1807 = vmatpush1.bf16.xpose.msra.mxu0 0
      %1808 = vmatprep.subr.bf16.mxu0 0
      %1809 = vmatpush1.bf16.xpose.msra.mxu0 0
      %1810 = vmatprep.subr.bf16.mxu0 0
      %1811 = vmatpush1.bf16.xpose.msra.mxu0 0
      %1812 = vmatprep.subr.bf16.mxu0 0
      %1813 = vmatpush1.bf16.xpose.msra.mxu0 0
      %1814 = vmatprep.mubr.bf16.mxu0 0
      %1815 = vmatmul.mubr.bf16.gmra.mrb[0].mxu0 %v1777
      %v1816 = vpop.f32.mrb[0].mxu0
      %v1817 = vadd.f32 0.0, %v1816
      %v1818 = vpop.f32.mrb[0].mxu0
      %v1819 = vpop.f32.mrb[0].mxu0
      %v1820 = vpop.f32.mrb[0].mxu0
      %1821 = vdwg.mxu0
      %1823 = vrot.lane.b32.xlu0 %v445, 112
      %v1824 = vpop.permute.xlu0 %1823
      %v1826 = vsel %vm452, %v445, 0
      %v1829 = vsel %vm452, %v1824, 0
      %1831 = vmatprep.subr.bf16.mxu0 0
      %1832 = vmatpush1.bf16.xpose.msra.mxu0 %v1829
      %1833 = vmatprep.subr.bf16.mxu0 0
      %1834 = vmatpush1.bf16.xpose.msra.mxu0 0
      %1835 = vmatprep.subr.bf16.mxu0 0
      %1836 = vmatpush1.bf16.xpose.msra.mxu0 0
      %1837 = vmatprep.subr.bf16.mxu0 0
      %1838 = vmatpush1.bf16.xpose.msra.mxu0 0
      %1839 = vmatprep.subr.bf16.mxu0 0
      %1840 = vmatpush1.bf16.xpose.msra.mxu0 0
      %1841 = vmatprep.subr.bf16.mxu0 0
      %1842 = vmatpush1.bf16.xpose.msra.mxu0 0
      %1843 = vmatprep.subr.bf16.mxu0 0
      %1844 = vmatpush1.bf16.xpose.msra.mxu0 0
      %1845 = vmatprep.subr.bf16.mxu0 0
      %1846 = vmatpush1.bf16.xpose.msra.mxu0 0
      %1847 = vmatprep.subr.bf16.mxu0 0
      %1848 = vmatpush1.bf16.xpose.msra.mxu0 0
      %1849 = vmatprep.subr.bf16.mxu0 0
      %1850 = vmatpush1.bf16.xpose.msra.mxu0 0
      %1851 = vmatprep.subr.bf16.mxu0 0
      %1852 = vmatpush1.bf16.xpose.msra.mxu0 0
      %1853 = vmatprep.subr.bf16.mxu0 0
      %1854 = vmatpush1.bf16.xpose.msra.mxu0 0
      %1855 = vmatprep.subr.bf16.mxu0 0
      %1856 = vmatpush1.bf16.xpose.msra.mxu0 0
      %1857 = vmatprep.subr.bf16.mxu0 0
      %1858 = vmatpush1.bf16.xpose.msra.mxu0 0
      %1859 = vmatprep.subr.bf16.mxu0 0
      %1860 = vmatpush1.bf16.xpose.msra.mxu0 0
      %1861 = vmatprep.subr.bf16.mxu0 0
      %1862 = vmatpush1.bf16.xpose.msra.mxu0 0
      %1863 = vmatprep.mubr.bf16.mxu0 0
      %1864 = vmatmul.mubr.bf16.gmra.mrb[0].mxu0 %v1826
      %v1865 = vpop.f32.mrb[0].mxu0
      %v1866 = vadd.f32 0.0, %v1865
      %v1867 = vpop.f32.mrb[0].mxu0
      %v1868 = vpop.f32.mrb[0].mxu0
      %v1869 = vpop.f32.mrb[0].mxu0
      %1870 = vdwg.mxu0
      %1872 = vrot.lane.b32.xlu0 %v446, 112
      %v1873 = vpop.permute.xlu0 %1872
      %v1875 = vsel %vm452, %v446, 0
      %v1878 = vsel %vm452, %v1873, 0
      %1880 = vmatprep.subr.bf16.mxu0 0
      %1881 = vmatpush1.bf16.xpose.msra.mxu0 %v1878
      %1882 = vmatprep.subr.bf16.mxu0 0
      %1883 = vmatpush1.bf16.xpose.msra.mxu0 0
      %1884 = vmatprep.subr.bf16.mxu0 0
      %1885 = vmatpush1.bf16.xpose.msra.mxu0 0
      %1886 = vmatprep.subr.bf16.mxu0 0
      %1887 = vmatpush1.bf16.xpose.msra.mxu0 0
      %1888 = vmatprep.subr.bf16.mxu0 0
      %1889 = vmatpush1.bf16.xpose.msra.mxu0 0
      %1890 = vmatprep.subr.bf16.mxu0 0
      %1891 = vmatpush1.bf16.xpose.msra.mxu0 0
      %1892 = vmatprep.subr.bf16.mxu0 0
      %1893 = vmatpush1.bf16.xpose.msra.mxu0 0
      %1894 = vmatprep.subr.bf16.mxu0 0
      %1895 = vmatpush1.bf16.xpose.msra.mxu0 0
      %1896 = vmatprep.subr.bf16.mxu0 0
      %1897 = vmatpush1.bf16.xpose.msra.mxu0 0
      %1898 = vmatprep.subr.bf16.mxu0 0
      %1899 = vmatpush1.bf16.xpose.msra.mxu0 0
      %1900 = vmatprep.subr.bf16.mxu0 0
      %1901 = vmatpush1.bf16.xpose.msra.mxu0 0
      %1902 = vmatprep.subr.bf16.mxu0 0
      %1903 = vmatpush1.bf16.xpose.msra.mxu0 0
      %1904 = vmatprep.subr.bf16.mxu0 0
      %1905 = vmatpush1.bf16.xpose.msra.mxu0 0
      %1906 = vmatprep.subr.bf16.mxu0 0
      %1907 = vmatpush1.bf16.xpose.msra.mxu0 0
      %1908 = vmatprep.subr.bf16.mxu0 0
      %1909 = vmatpush1.bf16.xpose.msra.mxu0 0
      %1910 = vmatprep.subr.bf16.mxu0 0
      %1911 = vmatpush1.bf16.xpose.msra.mxu0 0
      %1912 = vmatprep.mubr.bf16.mxu0 0
      %1913 = vmatmul.mubr.bf16.gmra.mrb[0].mxu0 %v1875
      %v1914 = vpop.f32.mrb[0].mxu0
      %v1915 = vadd.f32 0.0, %v1914
      %v1916 = vpop.f32.mrb[0].mxu0
      %v1917 = vpop.f32.mrb[0].mxu0
      %v1918 = vpop.f32.mrb[0].mxu0
      %1919 = vdwg.mxu0
      %1921 = vrot.lane.b32.xlu0 %v447, 112
      %v1922 = vpop.permute.xlu0 %1921
      %v1924 = vsel %vm452, %v447, 0
      %v1927 = vsel %vm452, %v1922, 0
      %1929 = vmatprep.subr.bf16.mxu0 0
      %1930 = vmatpush1.bf16.xpose.msra.mxu0 %v1927
      %1931 = vmatprep.subr.bf16.mxu0 0
      %1932 = vmatpush1.bf16.xpose.msra.mxu0 0
      %1933 = vmatprep.subr.bf16.mxu0 0
      %1934 = vmatpush1.bf16.xpose.msra.mxu0 0
      %1935 = vmatprep.subr.bf16.mxu0 0
      %1936 = vmatpush1.bf16.xpose.msra.mxu0 0
      %1937 = vmatprep.subr.bf16.mxu0 0
      %1938 = vmatpush1.bf16.xpose.msra.mxu0 0
      %1939 = vmatprep.subr.bf16.mxu0 0
      %1940 = vmatpush1.bf16.xpose.msra.mxu0 0
      %1941 = vmatprep.subr.bf16.mxu0 0
      %1942 = vmatpush1.bf16.xpose.msra.mxu0 0
      %1943 = vmatprep.subr.bf16.mxu0 0
      %1944 = vmatpush1.bf16.xpose.msra.mxu0 0
      %1945 = vmatprep.subr.bf16.mxu0 0
      %1946 = vmatpush1.bf16.xpose.msra.mxu0 0
      %1947 = vmatprep.subr.bf16.mxu0 0
      %1948 = vmatpush1.bf16.xpose.msra.mxu0 0
      %1949 = vmatprep.subr.bf16.mxu0 0
      %1950 = vmatpush1.bf16.xpose.msra.mxu0 0
      %1951 = vmatprep.subr.bf16.mxu0 0
      %1952 = vmatpush1.bf16.xpose.msra.mxu0 0
      %1953 = vmatprep.subr.bf16.mxu0 0
      %1954 = vmatpush1.bf16.xpose.msra.mxu0 0
      %1955 = vmatprep.subr.bf16.mxu0 0
      %1956 = vmatpush1.bf16.xpose.msra.mxu0 0
      %1957 = vmatprep.subr.bf16.mxu0 0
      %1958 = vmatpush1.bf16.xpose.msra.mxu0 0
      %1959 = vmatprep.subr.bf16.mxu0 0
      %1960 = vmatpush1.bf16.xpose.msra.mxu0 0
      %1961 = vmatprep.mubr.bf16.mxu0 0
      %1962 = vmatmul.mubr.bf16.gmra.mrb[0].mxu0 %v1924
      %v1963 = vpop.f32.mrb[0].mxu0
      %v1964 = vadd.f32 0.0, %v1963
      %v1965 = vpop.f32.mrb[0].mxu0
      %v1966 = vpop.f32.mrb[0].mxu0
      %v1967 = vpop.f32.mrb[0].mxu0
      %1968 = vdwg.mxu0
      %1970 = vrot.lane.b32.xlu0 %v448, 112
      %v1971 = vpop.permute.xlu0 %1970
      %v1973 = vsel %vm452, %v448, 0
      %v1976 = vsel %vm452, %v1971, 0
      %1978 = vmatprep.subr.bf16.mxu0 0
      %1979 = vmatpush1.bf16.xpose.msra.mxu0 %v1976
      %1980 = vmatprep.subr.bf16.mxu0 0
      %1981 = vmatpush1.bf16.xpose.msra.mxu0 0
      %1982 = vmatprep.subr.bf16.mxu0 0
      %1983 = vmatpush1.bf16.xpose.msra.mxu0 0
      %1984 = vmatprep.subr.bf16.mxu0 0
      %1985 = vmatpush1.bf16.xpose.msra.mxu0 0
      %1986 = vmatprep.subr.bf16.mxu0 0
      %1987 = vmatpush1.bf16.xpose.msra.mxu0 0
      %1988 = vmatprep.subr.bf16.mxu0 0
      %1989 = vmatpush1.bf16.xpose.msra.mxu0 0
      %1990 = vmatprep.subr.bf16.mxu0 0
      %1991 = vmatpush1.bf16.xpose.msra.mxu0 0
      %1992 = vmatprep.subr.bf16.mxu0 0
      %1993 = vmatpush1.bf16.xpose.msra.mxu0 0
      %1994 = vmatprep.subr.bf16.mxu0 0
      %1995 = vmatpush1.bf16.xpose.msra.mxu0 0
      %1996 = vmatprep.subr.bf16.mxu0 0
      %1997 = vmatpush1.bf16.xpose.msra.mxu0 0
      %1998 = vmatprep.subr.bf16.mxu0 0
      %1999 = vmatpush1.bf16.xpose.msra.mxu0 0
      %2000 = vmatprep.subr.bf16.mxu0 0
      %2001 = vmatpush1.bf16.xpose.msra.mxu0 0
      %2002 = vmatprep.subr.bf16.mxu0 0
      %2003 = vmatpush1.bf16.xpose.msra.mxu0 0
      %2004 = vmatprep.subr.bf16.mxu0 0
      %2005 = vmatpush1.bf16.xpose.msra.mxu0 0
      %2006 = vmatprep.subr.bf16.mxu0 0
      %2007 = vmatpush1.bf16.xpose.msra.mxu0 0
      %2008 = vmatprep.subr.bf16.mxu0 0
      %2009 = vmatpush1.bf16.xpose.msra.mxu0 0
      %2010 = vmatprep.mubr.bf16.mxu0 0
      %2011 = vmatmul.mubr.bf16.gmra.mrb[0].mxu0 %v1973
      %v2012 = vpop.f32.mrb[0].mxu0
      %v2013 = vadd.f32 0.0, %v2012
      %v2014 = vpop.f32.mrb[0].mxu0
      %v2015 = vpop.f32.mrb[0].mxu0
      %v2016 = vpop.f32.mrb[0].mxu0
      %2017 = vdwg.mxu0
      %v2018 = vmul.f32 %v494, 0.25
      %v2019 = vmul.f32 %v543, 0.25
      %v2020 = vmul.f32 %v592, 0.25
      %v2021 = vmul.f32 %v641, 0.25
      %v2022 = vmul.f32 %v690, 0.25
      %v2023 = vmul.f32 %v739, 0.25
      %v2024 = vmul.f32 %v788, 0.25
      %v2025 = vmul.f32 %v837, 0.25
      %v2026 = vmul.f32 %v886, 0.25
      %v2027 = vmul.f32 %v935, 0.25
      %v2028 = vmul.f32 %v984, 0.25
      %v2029 = vmul.f32 %v1033, 0.25
      %v2030 = vmul.f32 %v1082, 0.25
      %v2031 = vmul.f32 %v1131, 0.25
      %v2032 = vmul.f32 %v1180, 0.25
      %v2033 = vmul.f32 %v1229, 0.25
      %v2034 = vmul.f32 %v1278, 0.25
      %v2035 = vmul.f32 %v1327, 0.25
      %v2036 = vmul.f32 %v1376, 0.25
      %v2037 = vmul.f32 %v1425, 0.25
      %v2038 = vmul.f32 %v1474, 0.25
      %v2039 = vmul.f32 %v1523, 0.25
      %v2040 = vmul.f32 %v1572, 0.25
      %v2041 = vmul.f32 %v1621, 0.25
      %v2042 = vmul.f32 %v1670, 0.25
      %v2043 = vmul.f32 %v1719, 0.25
      %v2044 = vmul.f32 %v1768, 0.25
      %v2045 = vmul.f32 %v1817, 0.25
      %v2046 = vmul.f32 %v1866, 0.25
      %v2047 = vmul.f32 %v1915, 0.25
      %v2048 = vmul.f32 %v1964, 0.25
      %v2049 = vmul.f32 %v2013, 0.25
      %v2050 = vsel %vm416, 1, 0
      %vm2051 = vcmp.eq.s32.totalorder %v2050, 1
      %v2052 = vsel %vm2051, %v2018, -1e+30
      %v2053 = vsel %vm2051, %v2019, -1e+30
      %v2054 = vsel %vm2051, %v2020, -1e+30
      %v2055 = vsel %vm2051, %v2021, -1e+30
      %v2056 = vsel %vm2051, %v2022, -1e+30
      %v2057 = vsel %vm2051, %v2023, -1e+30
      %v2058 = vsel %vm2051, %v2024, -1e+30
      %v2059 = vsel %vm2051, %v2025, -1e+30
      %v2060 = vsel %vm2051, %v2026, -1e+30
      %v2061 = vsel %vm2051, %v2027, -1e+30
      %v2062 = vsel %vm2051, %v2028, -1e+30
      %v2063 = vsel %vm2051, %v2029, -1e+30
      %v2064 = vsel %vm2051, %v2030, -1e+30
      %v2065 = vsel %vm2051, %v2031, -1e+30
      %v2066 = vsel %vm2051, %v2032, -1e+30
      %v2067 = vsel %vm2051, %v2033, -1e+30
      %v2068 = vsel %vm2051, %v2034, -1e+30
      %v2069 = vsel %vm2051, %v2035, -1e+30
      %v2070 = vsel %vm2051, %v2036, -1e+30
      %v2071 = vsel %vm2051, %v2037, -1e+30
      %v2072 = vsel %vm2051, %v2038, -1e+30
      %v2073 = vsel %vm2051, %v2039, -1e+30
      %v2074 = vsel %vm2051, %v2040, -1e+30
      %v2075 = vsel %vm2051, %v2041, -1e+30
      %v2076 = vsel %vm2051, %v2042, -1e+30
      %v2077 = vsel %vm2051, %v2043, -1e+30
      %v2078 = vsel %vm2051, %v2044, -1e+30
      %v2079 = vsel %vm2051, %v2045, -1e+30
      %v2080 = vsel %vm2051, %v2046, -1e+30
      %v2081 = vsel %vm2051, %v2047, -1e+30
      %v2082 = vsel %vm2051, %v2048, -1e+30
      %v2083 = vsel %vm2051, %v2049, -1e+30
      %vm2084 = vcmask 64512
      %v2085 = vsel %vm2084, %v2052, -inf
      %2086 = vmax.xlane.f32.xlu0 %v2085
      %v2087 = vpop.xlane.xlu0 %2086
      %v2088 = vsel %vm2084, %v2053, -inf
      %2089 = vmax.xlane.f32.xlu0 %v2088
      %v2090 = vpop.xlane.xlu0 %2089
      %v2091 = vsel %vm2084, %v2054, -inf
      %2092 = vmax.xlane.f32.xlu0 %v2091
      %v2093 = vpop.xlane.xlu0 %2092
      %v2094 = vsel %vm2084, %v2055, -inf
      %2095 = vmax.xlane.f32.xlu0 %v2094
      %v2096 = vpop.xlane.xlu0 %2095
      %v2097 = vsel %vm2084, %v2056, -inf
      %2098 = vmax.xlane.f32.xlu0 %v2097
      %v2099 = vpop.xlane.xlu0 %2098
      %v2100 = vsel %vm2084, %v2057, -inf
      %2101 = vmax.xlane.f32.xlu0 %v2100
      %v2102 = vpop.xlane.xlu0 %2101
      %v2103 = vsel %vm2084, %v2058, -inf
      %2104 = vmax.xlane.f32.xlu0 %v2103
      %v2105 = vpop.xlane.xlu0 %2104
      %v2106 = vsel %vm2084, %v2059, -inf
      %2107 = vmax.xlane.f32.xlu0 %v2106
      %v2108 = vpop.xlane.xlu0 %2107
      %v2109 = vsel %vm2084, %v2060, -inf
      %2110 = vmax.xlane.f32.xlu0 %v2109
      %v2111 = vpop.xlane.xlu0 %2110
      %v2112 = vsel %vm2084, %v2061, -inf
      %2113 = vmax.xlane.f32.xlu0 %v2112
      %v2114 = vpop.xlane.xlu0 %2113
      %v2115 = vsel %vm2084, %v2062, -inf
      %2116 = vmax.xlane.f32.xlu0 %v2115
      %v2117 = vpop.xlane.xlu0 %2116
      %v2118 = vsel %vm2084, %v2063, -inf
      %2119 = vmax.xlane.f32.xlu0 %v2118
      %v2120 = vpop.xlane.xlu0 %2119
      %v2121 = vsel %vm2084, %v2064, -inf
      %2122 = vmax.xlane.f32.xlu0 %v2121
      %v2123 = vpop.xlane.xlu0 %2122
      %v2124 = vsel %vm2084, %v2065, -inf
      %2125 = vmax.xlane.f32.xlu0 %v2124
      %v2126 = vpop.xlane.xlu0 %2125
      %v2127 = vsel %vm2084, %v2066, -inf
      %2128 = vmax.xlane.f32.xlu0 %v2127
      %v2129 = vpop.xlane.xlu0 %2128
      %v2130 = vsel %vm2084, %v2067, -inf
      %2131 = vmax.xlane.f32.xlu0 %v2130
      %v2132 = vpop.xlane.xlu0 %2131
      %v2133 = vsel %vm2084, %v2068, -inf
      %2134 = vmax.xlane.f32.xlu0 %v2133
      %v2135 = vpop.xlane.xlu0 %2134
      %v2136 = vsel %vm2084, %v2069, -inf
      %2137 = vmax.xlane.f32.xlu0 %v2136
      %v2138 = vpop.xlane.xlu0 %2137
      %v2139 = vsel %vm2084, %v2070, -inf
      %2140 = vmax.xlane.f32.xlu0 %v2139
      %v2141 = vpop.xlane.xlu0 %2140
      %v2142 = vsel %vm2084, %v2071, -inf
      %2143 = vmax.xlane.f32.xlu0 %v2142
      %v2144 = vpop.xlane.xlu0 %2143
      %v2145 = vsel %vm2084, %v2072, -inf
      %2146 = vmax.xlane.f32.xlu0 %v2145
      %v2147 = vpop.xlane.xlu0 %2146
      %v2148 = vsel %vm2084, %v2073, -inf
      %2149 = vmax.xlane.f32.xlu0 %v2148
      %v2150 = vpop.xlane.xlu0 %2149
      %v2151 = vsel %vm2084, %v2074, -inf
      %2152 = vmax.xlane.f32.xlu0 %v2151
      %v2153 = vpop.xlane.xlu0 %2152
      %v2154 = vsel %vm2084, %v2075, -inf
      %2155 = vmax.xlane.f32.xlu0 %v2154
      %v2156 = vpop.xlane.xlu0 %2155
      %v2157 = vsel %vm2084, %v2076, -inf
      %2158 = vmax.xlane.f32.xlu0 %v2157
      %v2159 = vpop.xlane.xlu0 %2158
      %v2160 = vsel %vm2084, %v2077, -inf
      %2161 = vmax.xlane.f32.xlu0 %v2160
      %v2162 = vpop.xlane.xlu0 %2161
      %v2163 = vsel %vm2084, %v2078, -inf
      %2164 = vmax.xlane.f32.xlu0 %v2163
      %v2165 = vpop.xlane.xlu0 %2164
      %v2166 = vsel %vm2084, %v2079, -inf
      %2167 = vmax.xlane.f32.xlu0 %v2166
      %v2168 = vpop.xlane.xlu0 %2167
      %v2169 = vsel %vm2084, %v2080, -inf
      %2170 = vmax.xlane.f32.xlu0 %v2169
      %v2171 = vpop.xlane.xlu0 %2170
      %v2172 = vsel %vm2084, %v2081, -inf
      %2173 = vmax.xlane.f32.xlu0 %v2172
      %v2174 = vpop.xlane.xlu0 %2173
      %v2175 = vsel %vm2084, %v2082, -inf
      %2176 = vmax.xlane.f32.xlu0 %v2175
      %v2177 = vpop.xlane.xlu0 %2176
      %v2178 = vsel %vm2084, %v2083, -inf
      %2179 = vmax.xlane.f32.xlu0 %v2178
      %v2180 = vpop.xlane.xlu0 %2179
      %v2181 = vsub.f32 %v2052, %v2087
      %v2182 = vsub.f32 %v2053, %v2090
      %v2183 = vsub.f32 %v2054, %v2093
      %v2184 = vsub.f32 %v2055, %v2096
      %v2185 = vsub.f32 %v2056, %v2099
      %v2186 = vsub.f32 %v2057, %v2102
      %v2187 = vsub.f32 %v2058, %v2105
      %v2188 = vsub.f32 %v2059, %v2108
      %v2189 = vsub.f32 %v2060, %v2111
      %v2190 = vsub.f32 %v2061, %v2114
      %v2191 = vsub.f32 %v2062, %v2117
      %v2192 = vsub.f32 %v2063, %v2120
      %v2193 = vsub.f32 %v2064, %v2123
      %v2194 = vsub.f32 %v2065, %v2126
      %v2195 = vsub.f32 %v2066, %v2129
      %v2196 = vsub.f32 %v2067, %v2132
      %v2197 = vsub.f32 %v2068, %v2135
      %v2198 = vsub.f32 %v2069, %v2138
      %v2199 = vsub.f32 %v2070, %v2141
      %v2200 = vsub.f32 %v2071, %v2144
      %v2201 = vsub.f32 %v2072, %v2147
      %v2202 = vsub.f32 %v2073, %v2150
      %v2203 = vsub.f32 %v2074, %v2153
      %v2204 = vsub.f32 %v2075, %v2156
      %v2205 = vsub.f32 %v2076, %v2159
      %v2206 = vsub.f32 %v2077, %v2162
      %v2207 = vsub.f32 %v2078, %v2165
      %v2208 = vsub.f32 %v2079, %v2168
      %v2209 = vsub.f32 %v2080, %v2171
      %v2210 = vsub.f32 %v2081, %v2174
      %v2211 = vsub.f32 %v2082, %v2177
      %v2212 = vsub.f32 %v2083, %v2180
      %v2213 = vmul.f32 %v2181, 1.442695
      %v2214 = vpow.pop %v2213
      %v2215 = vmul.f32 %v2182, 1.442695
      %v2216 = vpow.pop %v2215
      %v2217 = vmul.f32 %v2183, 1.442695
      %v2218 = vpow.pop %v2217
      %v2219 = vmul.f32 %v2184, 1.442695
      %v2220 = vpow.pop %v2219
      %v2221 = vmul.f32 %v2185, 1.442695
      %v2222 = vpow.pop %v2221
      %v2223 = vmul.f32 %v2186, 1.442695
      %v2224 = vpow.pop %v2223
      %v2225 = vmul.f32 %v2187, 1.442695
      %v2226 = vpow.pop %v2225
      %v2227 = vmul.f32 %v2188, 1.442695
      %v2228 = vpow.pop %v2227
      %v2229 = vmul.f32 %v2189, 1.442695
      %v2230 = vpow.pop %v2229
      %v2231 = vmul.f32 %v2190, 1.442695
      %v2232 = vpow.pop %v2231
      %v2233 = vmul.f32 %v2191, 1.442695
      %v2234 = vpow.pop %v2233
      %v2235 = vmul.f32 %v2192, 1.442695
      %v2236 = vpow.pop %v2235
      %v2237 = vmul.f32 %v2193, 1.442695
      %v2238 = vpow.pop %v2237
      %v2239 = vmul.f32 %v2194, 1.442695
      %v2240 = vpow.pop %v2239
      %v2241 = vmul.f32 %v2195, 1.442695
      %v2242 = vpow.pop %v2241
      %v2243 = vmul.f32 %v2196, 1.442695
      %v2244 = vpow.pop %v2243
      %v2245 = vmul.f32 %v2197, 1.442695
      %v2246 = vpow.pop %v2245
      %v2247 = vmul.f32 %v2198, 1.442695
      %v2248 = vpow.pop %v2247
      %v2249 = vmul.f32 %v2199, 1.442695
      %v2250 = vpow.pop %v2249
      %v2251 = vmul.f32 %v2200, 1.442695
      %v2252 = vpow.pop %v2251
      %v2253 = vmul.f32 %v2201, 1.442695
      %v2254 = vpow.pop %v2253
      %v2255 = vmul.f32 %v2202, 1.442695
      %v2256 = vpow.pop %v2255
      %v2257 = vmul.f32 %v2203, 1.442695
      %v2258 = vpow.pop %v2257
      %v2259 = vmul.f32 %v2204, 1.442695
      %v2260 = vpow.pop %v2259
      %v2261 = vmul.f32 %v2205, 1.442695
      %v2262 = vpow.pop %v2261
      %v2263 = vmul.f32 %v2206, 1.442695
      %v2264 = vpow.pop %v2263
      %v2265 = vmul.f32 %v2207, 1.442695
      %v2266 = vpow.pop %v2265
      %v2267 = vmul.f32 %v2208, 1.442695
      %v2268 = vpow.pop %v2267
      %v2269 = vmul.f32 %v2209, 1.442695
      %v2270 = vpow.pop %v2269
      %v2271 = vmul.f32 %v2210, 1.442695
      %v2272 = vpow.pop %v2271
      %v2273 = vmul.f32 %v2211, 1.442695
      %v2274 = vpow.pop %v2273
      %v2275 = vmul.f32 %v2212, 1.442695
      %v2276 = vpow.pop %v2275
      %v2277 = vsel %vm2084, %v2214, 0.0
      %2278 = vadd.xlane.f32.xlu0 %v2277
      %v2279 = vpop.xlane.xlu0 %2278
      %v2280 = vsel %vm2084, %v2216, 0.0
      %2281 = vadd.xlane.f32.xlu0 %v2280
      %v2282 = vpop.xlane.xlu0 %2281
      %v2283 = vsel %vm2084, %v2218, 0.0
      %2284 = vadd.xlane.f32.xlu0 %v2283
      %v2285 = vpop.xlane.xlu0 %2284
      %v2286 = vsel %vm2084, %v2220, 0.0
      %2287 = vadd.xlane.f32.xlu0 %v2286
      %v2288 = vpop.xlane.xlu0 %2287
      %v2289 = vsel %vm2084, %v2222, 0.0
      %2290 = vadd.xlane.f32.xlu0 %v2289
      %v2291 = vpop.xlane.xlu0 %2290
      %v2292 = vsel %vm2084, %v2224, 0.0
      %2293 = vadd.xlane.f32.xlu0 %v2292
      %v2294 = vpop.xlane.xlu0 %2293
      %v2295 = vsel %vm2084, %v2226, 0.0
      %2296 = vadd.xlane.f32.xlu0 %v2295
      %v2297 = vpop.xlane.xlu0 %2296
      %v2298 = vsel %vm2084, %v2228, 0.0
      %2299 = vadd.xlane.f32.xlu0 %v2298
      %v2300 = vpop.xlane.xlu0 %2299
      %v2301 = vsel %vm2084, %v2230, 0.0
      %2302 = vadd.xlane.f32.xlu0 %v2301
      %v2303 = vpop.xlane.xlu0 %2302
      %v2304 = vsel %vm2084, %v2232, 0.0
      %2305 = vadd.xlane.f32.xlu0 %v2304
      %v2306 = vpop.xlane.xlu0 %2305
      %v2307 = vsel %vm2084, %v2234, 0.0
      %2308 = vadd.xlane.f32.xlu0 %v2307
      %v2309 = vpop.xlane.xlu0 %2308
      %v2310 = vsel %vm2084, %v2236, 0.0
      %2311 = vadd.xlane.f32.xlu0 %v2310
      %v2312 = vpop.xlane.xlu0 %2311
      %v2313 = vsel %vm2084, %v2238, 0.0
      %2314 = vadd.xlane.f32.xlu0 %v2313
      %v2315 = vpop.xlane.xlu0 %2314
      %v2316 = vsel %vm2084, %v2240, 0.0
      %2317 = vadd.xlane.f32.xlu0 %v2316
      %v2318 = vpop.xlane.xlu0 %2317
      %v2319 = vsel %vm2084, %v2242, 0.0
      %2320 = vadd.xlane.f32.xlu0 %v2319
      %v2321 = vpop.xlane.xlu0 %2320
      %v2322 = vsel %vm2084, %v2244, 0.0
      %2323 = vadd.xlane.f32.xlu0 %v2322
      %v2324 = vpop.xlane.xlu0 %2323
      %v2325 = vsel %vm2084, %v2246, 0.0
      %2326 = vadd.xlane.f32.xlu0 %v2325
      %v2327 = vpop.xlane.xlu0 %2326
      %v2328 = vsel %vm2084, %v2248, 0.0
      %2329 = vadd.xlane.f32.xlu0 %v2328
      %v2330 = vpop.xlane.xlu0 %2329
      %v2331 = vsel %vm2084, %v2250, 0.0
      %2332 = vadd.xlane.f32.xlu0 %v2331
      %v2333 = vpop.xlane.xlu0 %2332
      %v2334 = vsel %vm2084, %v2252, 0.0
      %2335 = vadd.xlane.f32.xlu0 %v2334
      %v2336 = vpop.xlane.xlu0 %2335
      %v2337 = vsel %vm2084, %v2254, 0.0
      %2338 = vadd.xlane.f32.xlu0 %v2337
      %v2339 = vpop.xlane.xlu0 %2338
      %v2340 = vsel %vm2084, %v2256, 0.0
      %2341 = vadd.xlane.f32.xlu0 %v2340
      %v2342 = vpop.xlane.xlu0 %2341
      %v2343 = vsel %vm2084, %v2258, 0.0
      %2344 = vadd.xlane.f32.xlu0 %v2343
      %v2345 = vpop.xlane.xlu0 %2344
      %v2346 = vsel %vm2084, %v2260, 0.0
      %2347 = vadd.xlane.f32.xlu0 %v2346
      %v2348 = vpop.xlane.xlu0 %2347
      %v2349 = vsel %vm2084, %v2262, 0.0
      %2350 = vadd.xlane.f32.xlu0 %v2349
      %v2351 = vpop.xlane.xlu0 %2350
      %v2352 = vsel %vm2084, %v2264, 0.0
      %2353 = vadd.xlane.f32.xlu0 %v2352
      %v2354 = vpop.xlane.xlu0 %2353
      %v2355 = vsel %vm2084, %v2266, 0.0
      %2356 = vadd.xlane.f32.xlu0 %v2355
      %v2357 = vpop.xlane.xlu0 %2356
      %v2358 = vsel %vm2084, %v2268, 0.0
      %2359 = vadd.xlane.f32.xlu0 %v2358
      %v2360 = vpop.xlane.xlu0 %2359
      %v2361 = vsel %vm2084, %v2270, 0.0
      %2362 = vadd.xlane.f32.xlu0 %v2361
      %v2363 = vpop.xlane.xlu0 %2362
      %v2364 = vsel %vm2084, %v2272, 0.0
      %2365 = vadd.xlane.f32.xlu0 %v2364
      %v2366 = vpop.xlane.xlu0 %2365
      %v2367 = vsel %vm2084, %v2274, 0.0
      %2368 = vadd.xlane.f32.xlu0 %v2367
      %v2369 = vpop.xlane.xlu0 %2368
      %v2370 = vsel %vm2084, %v2276, 0.0
      %2371 = vadd.xlane.f32.xlu0 %v2370
      %v2372 = vpop.xlane.xlu0 %2371
      %v2373 = vrcp.pop %v2279
      %v2374 = vmul.f32 %v2214, %v2373
      %v2375 = vrcp.pop %v2282
      %v2376 = vmul.f32 %v2216, %v2375
      %v2377 = vrcp.pop %v2285
      %v2378 = vmul.f32 %v2218, %v2377
      %v2379 = vrcp.pop %v2288
      %v2380 = vmul.f32 %v2220, %v2379
      %v2381 = vrcp.pop %v2291
      %v2382 = vmul.f32 %v2222, %v2381
      %v2383 = vrcp.pop %v2294
      %v2384 = vmul.f32 %v2224, %v2383
      %v2385 = vrcp.pop %v2297
      %v2386 = vmul.f32 %v2226, %v2385
      %v2387 = vrcp.pop %v2300
      %v2388 = vmul.f32 %v2228, %v2387
      %v2389 = vrcp.pop %v2303
      %v2390 = vmul.f32 %v2230, %v2389
      %v2391 = vrcp.pop %v2306
      %v2392 = vmul.f32 %v2232, %v2391
      %v2393 = vrcp.pop %v2309
      %v2394 = vmul.f32 %v2234, %v2393
      %v2395 = vrcp.pop %v2312
      %v2396 = vmul.f32 %v2236, %v2395
      %v2397 = vrcp.pop %v2315
      %v2398 = vmul.f32 %v2238, %v2397
      %v2399 = vrcp.pop %v2318
      %v2400 = vmul.f32 %v2240, %v2399
      %v2401 = vrcp.pop %v2321
      %v2402 = vmul.f32 %v2242, %v2401
      %v2403 = vrcp.pop %v2324
      %v2404 = vmul.f32 %v2244, %v2403
      %v2405 = vrcp.pop %v2327
      %v2406 = vmul.f32 %v2246, %v2405
      %v2407 = vrcp.pop %v2330
      %v2408 = vmul.f32 %v2248, %v2407
      %v2409 = vrcp.pop %v2333
      %v2410 = vmul.f32 %v2250, %v2409
      %v2411 = vrcp.pop %v2336
      %v2412 = vmul.f32 %v2252, %v2411
      %v2413 = vrcp.pop %v2339
      %v2414 = vmul.f32 %v2254, %v2413
      %v2415 = vrcp.pop %v2342
      %v2416 = vmul.f32 %v2256, %v2415
      %v2417 = vrcp.pop %v2345
      %v2418 = vmul.f32 %v2258, %v2417
      %v2419 = vrcp.pop %v2348
      %v2420 = vmul.f32 %v2260, %v2419
      %v2421 = vrcp.pop %v2351
      %v2422 = vmul.f32 %v2262, %v2421
      %v2423 = vrcp.pop %v2354
      %v2424 = vmul.f32 %v2264, %v2423
      %v2425 = vrcp.pop %v2357
      %v2426 = vmul.f32 %v2266, %v2425
      %v2427 = vrcp.pop %v2360
      %v2428 = vmul.f32 %v2268, %v2427
      %v2429 = vrcp.pop %v2363
      %v2430 = vmul.f32 %v2270, %v2429
      %v2431 = vrcp.pop %v2366
      %v2432 = vmul.f32 %v2272, %v2431
      %v2433 = vrcp.pop %v2369
      %v2434 = vmul.f32 %v2274, %v2433
      %v2435 = vrcp.pop %v2372
      %v2436 = vmul.f32 %v2276, %v2435
      %v2437 = vpack.c.bf16 %v2374, %v2374
      %v2438 = vpack.c.bf16 %v2376, %v2376
      %v2439 = vpack.c.bf16 %v2378, %v2378
      %v2440 = vpack.c.bf16 %v2380, %v2380
      %v2441 = vpack.c.bf16 %v2382, %v2382
      %v2442 = vpack.c.bf16 %v2384, %v2384
      %v2443 = vpack.c.bf16 %v2386, %v2386
      %v2444 = vpack.c.bf16 %v2388, %v2388
      %v2445 = vpack.c.bf16 %v2390, %v2390
      %v2446 = vpack.c.bf16 %v2392, %v2392
      %v2447 = vpack.c.bf16 %v2394, %v2394
      %v2448 = vpack.c.bf16 %v2396, %v2396
      %v2449 = vpack.c.bf16 %v2398, %v2398
      %v2450 = vpack.c.bf16 %v2400, %v2400
      %v2451 = vpack.c.bf16 %v2402, %v2402
      %v2452 = vpack.c.bf16 %v2404, %v2404
      %v2453 = vpack.c.bf16 %v2406, %v2406
      %v2454 = vpack.c.bf16 %v2408, %v2408
      %v2455 = vpack.c.bf16 %v2410, %v2410
      %v2456 = vpack.c.bf16 %v2412, %v2412
      %v2457 = vpack.c.bf16 %v2414, %v2414
      %v2458 = vpack.c.bf16 %v2416, %v2416
      %v2459 = vpack.c.bf16 %v2418, %v2418
      %v2460 = vpack.c.bf16 %v2420, %v2420
      %v2461 = vpack.c.bf16 %v2422, %v2422
      %v2462 = vpack.c.bf16 %v2424, %v2424
      %v2463 = vpack.c.bf16 %v2426, %v2426
      %v2464 = vpack.c.bf16 %v2428, %v2428
      %v2465 = vpack.c.bf16 %v2430, %v2430
      %v2466 = vpack.c.bf16 %v2432, %v2432
      %v2467 = vpack.c.bf16 %v2434, %v2434
      %v2468 = vpack.c.bf16 %v2436, %v2436
      %2469 = vrot.lane.b32.xlu0 %v417, 96
      %v2470 = vpop.permute.xlu0 %2469
      %v2472 = vsel %vm2084, %v2437, 0
      %vm2474 = vcmask 1043456
      %v2476 = vsel %vm2474, %v2470, 0
      %2478 = vmatprep.subr.bf16.mxu0 0
      %2479 = vmatpush1.bf16.msra.mxu0 %v2476
      %2480 = vmatprep.subr.bf16.mxu0 0
      %2481 = vmatpush1.bf16.msra.mxu0 0
      %2482 = vmatprep.subr.bf16.mxu0 0
      %2483 = vmatpush1.bf16.msra.mxu0 0
      %2484 = vmatprep.subr.bf16.mxu0 0
      %2485 = vmatpush1.bf16.msra.mxu0 0
      %2486 = vmatprep.subr.bf16.mxu0 0
      %2487 = vmatpush1.bf16.msra.mxu0 0
      %2488 = vmatprep.subr.bf16.mxu0 0
      %2489 = vmatpush1.bf16.msra.mxu0 0
      %2490 = vmatprep.subr.bf16.mxu0 0
      %2491 = vmatpush1.bf16.msra.mxu0 0
      %2492 = vmatprep.subr.bf16.mxu0 0
      %2493 = vmatpush1.bf16.msra.mxu0 0
      %2494 = vmatprep.subr.bf16.mxu0 0
      %2495 = vmatpush1.bf16.msra.mxu0 0
      %2496 = vmatprep.subr.bf16.mxu0 0
      %2497 = vmatpush1.bf16.msra.mxu0 0
      %2498 = vmatprep.subr.bf16.mxu0 0
      %2499 = vmatpush1.bf16.msra.mxu0 0
      %2500 = vmatprep.subr.bf16.mxu0 0
      %2501 = vmatpush1.bf16.msra.mxu0 0
      %2502 = vmatprep.subr.bf16.mxu0 0
      %2503 = vmatpush1.bf16.msra.mxu0 0
      %2504 = vmatprep.subr.bf16.mxu0 0
      %2505 = vmatpush1.bf16.msra.mxu0 0
      %2506 = vmatprep.subr.bf16.mxu0 0
      %2507 = vmatpush1.bf16.msra.mxu0 0
      %2508 = vmatprep.subr.bf16.mxu0 0
      %2509 = vmatpush1.bf16.msra.mxu0 0
      %2510 = vmatprep.mubr.bf16.mxu0 0
      %2511 = vmatmul.mubr.bf16.gmra.mrb[0].mxu0 %v2472
      %v2512 = vpop.f32.mrb[0].mxu0
      %v2513 = vadd.f32 0.0, %v2512
      %v2514 = vpop.f32.mrb[0].mxu0
      %v2515 = vpop.f32.mrb[0].mxu0
      %v2516 = vpop.f32.mrb[0].mxu0
      %2517 = vdwg.mxu0
      %2518 = vrot.lane.b32.xlu0 %v418, 96
      %v2519 = vpop.permute.xlu0 %2518
      %v2521 = vsel %vm2084, %v2438, 0
      %v2524 = vsel %vm2474, %v2519, 0
      %2526 = vmatprep.subr.bf16.mxu0 0
      %2527 = vmatpush1.bf16.msra.mxu0 %v2524
      %2528 = vmatprep.subr.bf16.mxu0 0
      %2529 = vmatpush1.bf16.msra.mxu0 0
      %2530 = vmatprep.subr.bf16.mxu0 0
      %2531 = vmatpush1.bf16.msra.mxu0 0
      %2532 = vmatprep.subr.bf16.mxu0 0
      %2533 = vmatpush1.bf16.msra.mxu0 0
      %2534 = vmatprep.subr.bf16.mxu0 0
      %2535 = vmatpush1.bf16.msra.mxu0 0
      %2536 = vmatprep.subr.bf16.mxu0 0
      %2537 = vmatpush1.bf16.msra.mxu0 0
      %2538 = vmatprep.subr.bf16.mxu0 0
      %2539 = vmatpush1.bf16.msra.mxu0 0
      %2540 = vmatprep.subr.bf16.mxu0 0
      %2541 = vmatpush1.bf16.msra.mxu0 0
      %2542 = vmatprep.subr.bf16.mxu0 0
      %2543 = vmatpush1.bf16.msra.mxu0 0
      %2544 = vmatprep.subr.bf16.mxu0 0
      %2545 = vmatpush1.bf16.msra.mxu0 0
      %2546 = vmatprep.subr.bf16.mxu0 0
      %2547 = vmatpush1.bf16.msra.mxu0 0
      %2548 = vmatprep.subr.bf16.mxu0 0
      %2549 = vmatpush1.bf16.msra.mxu0 0
      %2550 = vmatprep.subr.bf16.mxu0 0
      %2551 = vmatpush1.bf16.msra.mxu0 0
      %2552 = vmatprep.subr.bf16.mxu0 0
      %2553 = vmatpush1.bf16.msra.mxu0 0
      %2554 = vmatprep.subr.bf16.mxu0 0
      %2555 = vmatpush1.bf16.msra.mxu0 0
      %2556 = vmatprep.subr.bf16.mxu0 0
      %2557 = vmatpush1.bf16.msra.mxu0 0
      %2558 = vmatprep.mubr.bf16.mxu0 0
      %2559 = vmatmul.mubr.bf16.gmra.mrb[0].mxu0 %v2521
      %v2560 = vpop.f32.mrb[0].mxu0
      %v2561 = vadd.f32 0.0, %v2560
      %v2562 = vpop.f32.mrb[0].mxu0
      %v2563 = vpop.f32.mrb[0].mxu0
      %v2564 = vpop.f32.mrb[0].mxu0
      %2565 = vdwg.mxu0
      %2566 = vrot.lane.b32.xlu0 %v419, 96
      %v2567 = vpop.permute.xlu0 %2566
      %v2569 = vsel %vm2084, %v2439, 0
      %v2572 = vsel %vm2474, %v2567, 0
      %2574 = vmatprep.subr.bf16.mxu0 0
      %2575 = vmatpush1.bf16.msra.mxu0 %v2572
      %2576 = vmatprep.subr.bf16.mxu0 0
      %2577 = vmatpush1.bf16.msra.mxu0 0
      %2578 = vmatprep.subr.bf16.mxu0 0
      %2579 = vmatpush1.bf16.msra.mxu0 0
      %2580 = vmatprep.subr.bf16.mxu0 0
      %2581 = vmatpush1.bf16.msra.mxu0 0
      %2582 = vmatprep.subr.bf16.mxu0 0
      %2583 = vmatpush1.bf16.msra.mxu0 0
      %2584 = vmatprep.subr.bf16.mxu0 0
      %2585 = vmatpush1.bf16.msra.mxu0 0
      %2586 = vmatprep.subr.bf16.mxu0 0
      %2587 = vmatpush1.bf16.msra.mxu0 0
      %2588 = vmatprep.subr.bf16.mxu0 0
      %2589 = vmatpush1.bf16.msra.mxu0 0
      %2590 = vmatprep.subr.bf16.mxu0 0
      %2591 = vmatpush1.bf16.msra.mxu0 0
      %2592 = vmatprep.subr.bf16.mxu0 0
      %2593 = vmatpush1.bf16.msra.mxu0 0
      %2594 = vmatprep.subr.bf16.mxu0 0
      %2595 = vmatpush1.bf16.msra.mxu0 0
      %2596 = vmatprep.subr.bf16.mxu0 0
      %2597 = vmatpush1.bf16.msra.mxu0 0
      %2598 = vmatprep.subr.bf16.mxu0 0
      %2599 = vmatpush1.bf16.msra.mxu0 0
      %2600 = vmatprep.subr.bf16.mxu0 0
      %2601 = vmatpush1.bf16.msra.mxu0 0
      %2602 = vmatprep.subr.bf16.mxu0 0
      %2603 = vmatpush1.bf16.msra.mxu0 0
      %2604 = vmatprep.subr.bf16.mxu0 0
      %2605 = vmatpush1.bf16.msra.mxu0 0
      %2606 = vmatprep.mubr.bf16.mxu0 0
      %2607 = vmatmul.mubr.bf16.gmra.mrb[0].mxu0 %v2569
      %v2608 = vpop.f32.mrb[0].mxu0
      %v2609 = vadd.f32 0.0, %v2608
      %v2610 = vpop.f32.mrb[0].mxu0
      %v2611 = vpop.f32.mrb[0].mxu0
      %v2612 = vpop.f32.mrb[0].mxu0
      %2613 = vdwg.mxu0
      %2614 = vrot.lane.b32.xlu0 %v420, 96
      %v2615 = vpop.permute.xlu0 %2614
      %v2617 = vsel %vm2084, %v2440, 0
      %v2620 = vsel %vm2474, %v2615, 0
      %2622 = vmatprep.subr.bf16.mxu0 0
      %2623 = vmatpush1.bf16.msra.mxu0 %v2620
      %2624 = vmatprep.subr.bf16.mxu0 0
      %2625 = vmatpush1.bf16.msra.mxu0 0
      %2626 = vmatprep.subr.bf16.mxu0 0
      %2627 = vmatpush1.bf16.msra.mxu0 0
      %2628 = vmatprep.subr.bf16.mxu0 0
      %2629 = vmatpush1.bf16.msra.mxu0 0
      %2630 = vmatprep.subr.bf16.mxu0 0
      %2631 = vmatpush1.bf16.msra.mxu0 0
      %2632 = vmatprep.subr.bf16.mxu0 0
      %2633 = vmatpush1.bf16.msra.mxu0 0
      %2634 = vmatprep.subr.bf16.mxu0 0
      %2635 = vmatpush1.bf16.msra.mxu0 0
      %2636 = vmatprep.subr.bf16.mxu0 0
      %2637 = vmatpush1.bf16.msra.mxu0 0
      %2638 = vmatprep.subr.bf16.mxu0 0
      %2639 = vmatpush1.bf16.msra.mxu0 0
      %2640 = vmatprep.subr.bf16.mxu0 0
      %2641 = vmatpush1.bf16.msra.mxu0 0
      %2642 = vmatprep.subr.bf16.mxu0 0
      %2643 = vmatpush1.bf16.msra.mxu0 0
      %2644 = vmatprep.subr.bf16.mxu0 0
      %2645 = vmatpush1.bf16.msra.mxu0 0
      %2646 = vmatprep.subr.bf16.mxu0 0
      %2647 = vmatpush1.bf16.msra.mxu0 0
      %2648 = vmatprep.subr.bf16.mxu0 0
      %2649 = vmatpush1.bf16.msra.mxu0 0
      %2650 = vmatprep.subr.bf16.mxu0 0
      %2651 = vmatpush1.bf16.msra.mxu0 0
      %2652 = vmatprep.subr.bf16.mxu0 0
      %2653 = vmatpush1.bf16.msra.mxu0 0
      %2654 = vmatprep.mubr.bf16.mxu0 0
      %2655 = vmatmul.mubr.bf16.gmra.mrb[0].mxu0 %v2617
      %v2656 = vpop.f32.mrb[0].mxu0
      %v2657 = vadd.f32 0.0, %v2656
      %v2658 = vpop.f32.mrb[0].mxu0
      %v2659 = vpop.f32.mrb[0].mxu0
      %v2660 = vpop.f32.mrb[0].mxu0
      %2661 = vdwg.mxu0
      %2662 = vrot.lane.b32.xlu0 %v421, 96
      %v2663 = vpop.permute.xlu0 %2662
      %v2665 = vsel %vm2084, %v2441, 0
      %v2668 = vsel %vm2474, %v2663, 0
      %2670 = vmatprep.subr.bf16.mxu0 0
      %2671 = vmatpush1.bf16.msra.mxu0 %v2668
      %2672 = vmatprep.subr.bf16.mxu0 0
      %2673 = vmatpush1.bf16.msra.mxu0 0
      %2674 = vmatprep.subr.bf16.mxu0 0
      %2675 = vmatpush1.bf16.msra.mxu0 0
      %2676 = vmatprep.subr.bf16.mxu0 0
      %2677 = vmatpush1.bf16.msra.mxu0 0
      %2678 = vmatprep.subr.bf16.mxu0 0
      %2679 = vmatpush1.bf16.msra.mxu0 0
      %2680 = vmatprep.subr.bf16.mxu0 0
      %2681 = vmatpush1.bf16.msra.mxu0 0
      %2682 = vmatprep.subr.bf16.mxu0 0
      %2683 = vmatpush1.bf16.msra.mxu0 0
      %2684 = vmatprep.subr.bf16.mxu0 0
      %2685 = vmatpush1.bf16.msra.mxu0 0
      %2686 = vmatprep.subr.bf16.mxu0 0
      %2687 = vmatpush1.bf16.msra.mxu0 0
      %2688 = vmatprep.subr.bf16.mxu0 0
      %2689 = vmatpush1.bf16.msra.mxu0 0
      %2690 = vmatprep.subr.bf16.mxu0 0
      %2691 = vmatpush1.bf16.msra.mxu0 0
      %2692 = vmatprep.subr.bf16.mxu0 0
      %2693 = vmatpush1.bf16.msra.mxu0 0
      %2694 = vmatprep.subr.bf16.mxu0 0
      %2695 = vmatpush1.bf16.msra.mxu0 0
      %2696 = vmatprep.subr.bf16.mxu0 0
      %2697 = vmatpush1.bf16.msra.mxu0 0
      %2698 = vmatprep.subr.bf16.mxu0 0
      %2699 = vmatpush1.bf16.msra.mxu0 0
      %2700 = vmatprep.subr.bf16.mxu0 0
      %2701 = vmatpush1.bf16.msra.mxu0 0
      %2702 = vmatprep.mubr.bf16.mxu0 0
      %2703 = vmatmul.mubr.bf16.gmra.mrb[0].mxu0 %v2665
      %v2704 = vpop.f32.mrb[0].mxu0
      %v2705 = vadd.f32 0.0, %v2704
      %v2706 = vpop.f32.mrb[0].mxu0
      %v2707 = vpop.f32.mrb[0].mxu0
      %v2708 = vpop.f32.mrb[0].mxu0
      %2709 = vdwg.mxu0
      %2710 = vrot.lane.b32.xlu0 %v422, 96
      %v2711 = vpop.permute.xlu0 %2710
      %v2713 = vsel %vm2084, %v2442, 0
      %v2716 = vsel %vm2474, %v2711, 0
      %2718 = vmatprep.subr.bf16.mxu0 0
      %2719 = vmatpush1.bf16.msra.mxu0 %v2716
      %2720 = vmatprep.subr.bf16.mxu0 0
      %2721 = vmatpush1.bf16.msra.mxu0 0
      %2722 = vmatprep.subr.bf16.mxu0 0
      %2723 = vmatpush1.bf16.msra.mxu0 0
      %2724 = vmatprep.subr.bf16.mxu0 0
      %2725 = vmatpush1.bf16.msra.mxu0 0
      %2726 = vmatprep.subr.bf16.mxu0 0
      %2727 = vmatpush1.bf16.msra.mxu0 0
      %2728 = vmatprep.subr.bf16.mxu0 0
      %2729 = vmatpush1.bf16.msra.mxu0 0
      %2730 = vmatprep.subr.bf16.mxu0 0
      %2731 = vmatpush1.bf16.msra.mxu0 0
      %2732 = vmatprep.subr.bf16.mxu0 0
      %2733 = vmatpush1.bf16.msra.mxu0 0
      %2734 = vmatprep.subr.bf16.mxu0 0
      %2735 = vmatpush1.bf16.msra.mxu0 0
      %2736 = vmatprep.subr.bf16.mxu0 0
      %2737 = vmatpush1.bf16.msra.mxu0 0
      %2738 = vmatprep.subr.bf16.mxu0 0
      %2739 = vmatpush1.bf16.msra.mxu0 0
      %2740 = vmatprep.subr.bf16.mxu0 0
      %2741 = vmatpush1.bf16.msra.mxu0 0
      %2742 = vmatprep.subr.bf16.mxu0 0
      %2743 = vmatpush1.bf16.msra.mxu0 0
      %2744 = vmatprep.subr.bf16.mxu0 0
      %2745 = vmatpush1.bf16.msra.mxu0 0
      %2746 = vmatprep.subr.bf16.mxu0 0
      %2747 = vmatpush1.bf16.msra.mxu0 0
      %2748 = vmatprep.subr.bf16.mxu0 0
      %2749 = vmatpush1.bf16.msra.mxu0 0
      %2750 = vmatprep.mubr.bf16.mxu0 0
      %2751 = vmatmul.mubr.bf16.gmra.mrb[0].mxu0 %v2713
      %v2752 = vpop.f32.mrb[0].mxu0
      %v2753 = vadd.f32 0.0, %v2752
      %v2754 = vpop.f32.mrb[0].mxu0
      %v2755 = vpop.f32.mrb[0].mxu0
      %v2756 = vpop.f32.mrb[0].mxu0
      %2757 = vdwg.mxu0
      %2758 = vrot.lane.b32.xlu0 %v423, 96
      %v2759 = vpop.permute.xlu0 %2758
      %v2761 = vsel %vm2084, %v2443, 0
      %v2764 = vsel %vm2474, %v2759, 0
      %2766 = vmatprep.subr.bf16.mxu0 0
      %2767 = vmatpush1.bf16.msra.mxu0 %v2764
      %2768 = vmatprep.subr.bf16.mxu0 0
      %2769 = vmatpush1.bf16.msra.mxu0 0
      %2770 = vmatprep.subr.bf16.mxu0 0
      %2771 = vmatpush1.bf16.msra.mxu0 0
      %2772 = vmatprep.subr.bf16.mxu0 0
      %2773 = vmatpush1.bf16.msra.mxu0 0
      %2774 = vmatprep.subr.bf16.mxu0 0
      %2775 = vmatpush1.bf16.msra.mxu0 0
      %2776 = vmatprep.subr.bf16.mxu0 0
      %2777 = vmatpush1.bf16.msra.mxu0 0
      %2778 = vmatprep.subr.bf16.mxu0 0
      %2779 = vmatpush1.bf16.msra.mxu0 0
      %2780 = vmatprep.subr.bf16.mxu0 0
      %2781 = vmatpush1.bf16.msra.mxu0 0
      %2782 = vmatprep.subr.bf16.mxu0 0
      %2783 = vmatpush1.bf16.msra.mxu0 0
      %2784 = vmatprep.subr.bf16.mxu0 0
      %2785 = vmatpush1.bf16.msra.mxu0 0
      %2786 = vmatprep.subr.bf16.mxu0 0
      %2787 = vmatpush1.bf16.msra.mxu0 0
      %2788 = vmatprep.subr.bf16.mxu0 0
      %2789 = vmatpush1.bf16.msra.mxu0 0
      %2790 = vmatprep.subr.bf16.mxu0 0
      %2791 = vmatpush1.bf16.msra.mxu0 0
      %2792 = vmatprep.subr.bf16.mxu0 0
      %2793 = vmatpush1.bf16.msra.mxu0 0
      %2794 = vmatprep.subr.bf16.mxu0 0
      %2795 = vmatpush1.bf16.msra.mxu0 0
      %2796 = vmatprep.subr.bf16.mxu0 0
      %2797 = vmatpush1.bf16.msra.mxu0 0
      %2798 = vmatprep.mubr.bf16.mxu0 0
      %2799 = vmatmul.mubr.bf16.gmra.mrb[0].mxu0 %v2761
      %v2800 = vpop.f32.mrb[0].mxu0
      %v2801 = vadd.f32 0.0, %v2800
      %v2802 = vpop.f32.mrb[0].mxu0
      %v2803 = vpop.f32.mrb[0].mxu0
      %v2804 = vpop.f32.mrb[0].mxu0
      %2805 = vdwg.mxu0
      %2806 = vrot.lane.b32.xlu0 %v424, 96
      %v2807 = vpop.permute.xlu0 %2806
      %v2809 = vsel %vm2084, %v2444, 0
      %v2812 = vsel %vm2474, %v2807, 0
      %2814 = vmatprep.subr.bf16.mxu0 0
      %2815 = vmatpush1.bf16.msra.mxu0 %v2812
      %2816 = vmatprep.subr.bf16.mxu0 0
      %2817 = vmatpush1.bf16.msra.mxu0 0
      %2818 = vmatprep.subr.bf16.mxu0 0
      %2819 = vmatpush1.bf16.msra.mxu0 0
      %2820 = vmatprep.subr.bf16.mxu0 0
      %2821 = vmatpush1.bf16.msra.mxu0 0
      %2822 = vmatprep.subr.bf16.mxu0 0
      %2823 = vmatpush1.bf16.msra.mxu0 0
      %2824 = vmatprep.subr.bf16.mxu0 0
      %2825 = vmatpush1.bf16.msra.mxu0 0
      %2826 = vmatprep.subr.bf16.mxu0 0
      %2827 = vmatpush1.bf16.msra.mxu0 0
      %2828 = vmatprep.subr.bf16.mxu0 0
      %2829 = vmatpush1.bf16.msra.mxu0 0
      %2830 = vmatprep.subr.bf16.mxu0 0
      %2831 = vmatpush1.bf16.msra.mxu0 0
      %2832 = vmatprep.subr.bf16.mxu0 0
      %2833 = vmatpush1.bf16.msra.mxu0 0
      %2834 = vmatprep.subr.bf16.mxu0 0
      %2835 = vmatpush1.bf16.msra.mxu0 0
      %2836 = vmatprep.subr.bf16.mxu0 0
      %2837 = vmatpush1.bf16.msra.mxu0 0
      %2838 = vmatprep.subr.bf16.mxu0 0
      %2839 = vmatpush1.bf16.msra.mxu0 0
      %2840 = vmatprep.subr.bf16.mxu0 0
      %2841 = vmatpush1.bf16.msra.mxu0 0
      %2842 = vmatprep.subr.bf16.mxu0 0
      %2843 = vmatpush1.bf16.msra.mxu0 0
      %2844 = vmatprep.subr.bf16.mxu0 0
      %2845 = vmatpush1.bf16.msra.mxu0 0
      %2846 = vmatprep.mubr.bf16.mxu0 0
      %2847 = vmatmul.mubr.bf16.gmra.mrb[0].mxu0 %v2809
      %v2848 = vpop.f32.mrb[0].mxu0
      %v2849 = vadd.f32 0.0, %v2848
      %v2850 = vpop.f32.mrb[0].mxu0
      %v2851 = vpop.f32.mrb[0].mxu0
      %v2852 = vpop.f32.mrb[0].mxu0
      %2853 = vdwg.mxu0
      %2854 = vrot.lane.b32.xlu0 %v425, 96
      %v2855 = vpop.permute.xlu0 %2854
      %v2857 = vsel %vm2084, %v2445, 0
      %v2860 = vsel %vm2474, %v2855, 0
      %2862 = vmatprep.subr.bf16.mxu0 0
      %2863 = vmatpush1.bf16.msra.mxu0 %v2860
      %2864 = vmatprep.subr.bf16.mxu0 0
      %2865 = vmatpush1.bf16.msra.mxu0 0
      %2866 = vmatprep.subr.bf16.mxu0 0
      %2867 = vmatpush1.bf16.msra.mxu0 0
      %2868 = vmatprep.subr.bf16.mxu0 0
      %2869 = vmatpush1.bf16.msra.mxu0 0
      %2870 = vmatprep.subr.bf16.mxu0 0
      %2871 = vmatpush1.bf16.msra.mxu0 0
      %2872 = vmatprep.subr.bf16.mxu0 0
      %2873 = vmatpush1.bf16.msra.mxu0 0
      %2874 = vmatprep.subr.bf16.mxu0 0
      %2875 = vmatpush1.bf16.msra.mxu0 0
      %2876 = vmatprep.subr.bf16.mxu0 0
      %2877 = vmatpush1.bf16.msra.mxu0 0
      %2878 = vmatprep.subr.bf16.mxu0 0
      %2879 = vmatpush1.bf16.msra.mxu0 0
      %2880 = vmatprep.subr.bf16.mxu0 0
      %2881 = vmatpush1.bf16.msra.mxu0 0
      %2882 = vmatprep.subr.bf16.mxu0 0
      %2883 = vmatpush1.bf16.msra.mxu0 0
      %2884 = vmatprep.subr.bf16.mxu0 0
      %2885 = vmatpush1.bf16.msra.mxu0 0
      %2886 = vmatprep.subr.bf16.mxu0 0
      %2887 = vmatpush1.bf16.msra.mxu0 0
      %2888 = vmatprep.subr.bf16.mxu0 0
      %2889 = vmatpush1.bf16.msra.mxu0 0
      %2890 = vmatprep.subr.bf16.mxu0 0
      %2891 = vmatpush1.bf16.msra.mxu0 0
      %2892 = vmatprep.subr.bf16.mxu0 0
      %2893 = vmatpush1.bf16.msra.mxu0 0
      %2894 = vmatprep.mubr.bf16.mxu0 0
      %2895 = vmatmul.mubr.bf16.gmra.mrb[0].mxu0 %v2857
      %v2896 = vpop.f32.mrb[0].mxu0
      %v2897 = vadd.f32 0.0, %v2896
      %v2898 = vpop.f32.mrb[0].mxu0
      %v2899 = vpop.f32.mrb[0].mxu0
      %v2900 = vpop.f32.mrb[0].mxu0
      %2901 = vdwg.mxu0
      %2902 = vrot.lane.b32.xlu0 %v426, 96
      %v2903 = vpop.permute.xlu0 %2902
      %v2905 = vsel %vm2084, %v2446, 0
      %v2908 = vsel %vm2474, %v2903, 0
      %2910 = vmatprep.subr.bf16.mxu0 0
      %2911 = vmatpush1.bf16.msra.mxu0 %v2908
      %2912 = vmatprep.subr.bf16.mxu0 0
      %2913 = vmatpush1.bf16.msra.mxu0 0
      %2914 = vmatprep.subr.bf16.mxu0 0
      %2915 = vmatpush1.bf16.msra.mxu0 0
      %2916 = vmatprep.subr.bf16.mxu0 0
      %2917 = vmatpush1.bf16.msra.mxu0 0
      %2918 = vmatprep.subr.bf16.mxu0 0
      %2919 = vmatpush1.bf16.msra.mxu0 0
      %2920 = vmatprep.subr.bf16.mxu0 0
      %2921 = vmatpush1.bf16.msra.mxu0 0
      %2922 = vmatprep.subr.bf16.mxu0 0
      %2923 = vmatpush1.bf16.msra.mxu0 0
      %2924 = vmatprep.subr.bf16.mxu0 0
      %2925 = vmatpush1.bf16.msra.mxu0 0
      %2926 = vmatprep.subr.bf16.mxu0 0
      %2927 = vmatpush1.bf16.msra.mxu0 0
      %2928 = vmatprep.subr.bf16.mxu0 0
      %2929 = vmatpush1.bf16.msra.mxu0 0
      %2930 = vmatprep.subr.bf16.mxu0 0
      %2931 = vmatpush1.bf16.msra.mxu0 0
      %2932 = vmatprep.subr.bf16.mxu0 0
      %2933 = vmatpush1.bf16.msra.mxu0 0
      %2934 = vmatprep.subr.bf16.mxu0 0
      %2935 = vmatpush1.bf16.msra.mxu0 0
      %2936 = vmatprep.subr.bf16.mxu0 0
      %2937 = vmatpush1.bf16.msra.mxu0 0
      %2938 = vmatprep.subr.bf16.mxu0 0
      %2939 = vmatpush1.bf16.msra.mxu0 0
      %2940 = vmatprep.subr.bf16.mxu0 0
      %2941 = vmatpush1.bf16.msra.mxu0 0
      %2942 = vmatprep.mubr.bf16.mxu0 0
      %2943 = vmatmul.mubr.bf16.gmra.mrb[0].mxu0 %v2905
      %v2944 = vpop.f32.mrb[0].mxu0
      %v2945 = vadd.f32 0.0, %v2944
      %v2946 = vpop.f32.mrb[0].mxu0
      %v2947 = vpop.f32.mrb[0].mxu0
      %v2948 = vpop.f32.mrb[0].mxu0
      %2949 = vdwg.mxu0
      %2950 = vrot.lane.b32.xlu0 %v427, 96
      %v2951 = vpop.permute.xlu0 %2950
      %v2953 = vsel %vm2084, %v2447, 0
      %v2956 = vsel %vm2474, %v2951, 0
      %2958 = vmatprep.subr.bf16.mxu0 0
      %2959 = vmatpush1.bf16.msra.mxu0 %v2956
      %2960 = vmatprep.subr.bf16.mxu0 0
      %2961 = vmatpush1.bf16.msra.mxu0 0
      %2962 = vmatprep.subr.bf16.mxu0 0
      %2963 = vmatpush1.bf16.msra.mxu0 0
      %2964 = vmatprep.subr.bf16.mxu0 0
      %2965 = vmatpush1.bf16.msra.mxu0 0
      %2966 = vmatprep.subr.bf16.mxu0 0
      %2967 = vmatpush1.bf16.msra.mxu0 0
      %2968 = vmatprep.subr.bf16.mxu0 0
      %2969 = vmatpush1.bf16.msra.mxu0 0
      %2970 = vmatprep.subr.bf16.mxu0 0
      %2971 = vmatpush1.bf16.msra.mxu0 0
      %2972 = vmatprep.subr.bf16.mxu0 0
      %2973 = vmatpush1.bf16.msra.mxu0 0
      %2974 = vmatprep.subr.bf16.mxu0 0
      %2975 = vmatpush1.bf16.msra.mxu0 0
      %2976 = vmatprep.subr.bf16.mxu0 0
      %2977 = vmatpush1.bf16.msra.mxu0 0
      %2978 = vmatprep.subr.bf16.mxu0 0
      %2979 = vmatpush1.bf16.msra.mxu0 0
      %2980 = vmatprep.subr.bf16.mxu0 0
      %2981 = vmatpush1.bf16.msra.mxu0 0
      %2982 = vmatprep.subr.bf16.mxu0 0
      %2983 = vmatpush1.bf16.msra.mxu0 0
      %2984 = vmatprep.subr.bf16.mxu0 0
      %2985 = vmatpush1.bf16.msra.mxu0 0
      %2986 = vmatprep.subr.bf16.mxu0 0
      %2987 = vmatpush1.bf16.msra.mxu0 0
      %2988 = vmatprep.subr.bf16.mxu0 0
      %2989 = vmatpush1.bf16.msra.mxu0 0
      %2990 = vmatprep.mubr.bf16.mxu0 0
      %2991 = vmatmul.mubr.bf16.gmra.mrb[0].mxu0 %v2953
      %v2992 = vpop.f32.mrb[0].mxu0
      %v2993 = vadd.f32 0.0, %v2992
      %v2994 = vpop.f32.mrb[0].mxu0
      %v2995 = vpop.f32.mrb[0].mxu0
      %v2996 = vpop.f32.mrb[0].mxu0
      %2997 = vdwg.mxu0
      %2998 = vrot.lane.b32.xlu0 %v428, 96
      %v2999 = vpop.permute.xlu0 %2998
      %v3001 = vsel %vm2084, %v2448, 0
      %v3004 = vsel %vm2474, %v2999, 0
      %3006 = vmatprep.subr.bf16.mxu0 0
      %3007 = vmatpush1.bf16.msra.mxu0 %v3004
      %3008 = vmatprep.subr.bf16.mxu0 0
      %3009 = vmatpush1.bf16.msra.mxu0 0
      %3010 = vmatprep.subr.bf16.mxu0 0
      %3011 = vmatpush1.bf16.msra.mxu0 0
      %3012 = vmatprep.subr.bf16.mxu0 0
      %3013 = vmatpush1.bf16.msra.mxu0 0
      %3014 = vmatprep.subr.bf16.mxu0 0
      %3015 = vmatpush1.bf16.msra.mxu0 0
      %3016 = vmatprep.subr.bf16.mxu0 0
      %3017 = vmatpush1.bf16.msra.mxu0 0
      %3018 = vmatprep.subr.bf16.mxu0 0
      %3019 = vmatpush1.bf16.msra.mxu0 0
      %3020 = vmatprep.subr.bf16.mxu0 0
      %3021 = vmatpush1.bf16.msra.mxu0 0
      %3022 = vmatprep.subr.bf16.mxu0 0
      %3023 = vmatpush1.bf16.msra.mxu0 0
      %3024 = vmatprep.subr.bf16.mxu0 0
      %3025 = vmatpush1.bf16.msra.mxu0 0
      %3026 = vmatprep.subr.bf16.mxu0 0
      %3027 = vmatpush1.bf16.msra.mxu0 0
      %3028 = vmatprep.subr.bf16.mxu0 0
      %3029 = vmatpush1.bf16.msra.mxu0 0
      %3030 = vmatprep.subr.bf16.mxu0 0
      %3031 = vmatpush1.bf16.msra.mxu0 0
      %3032 = vmatprep.subr.bf16.mxu0 0
      %3033 = vmatpush1.bf16.msra.mxu0 0
      %3034 = vmatprep.subr.bf16.mxu0 0
      %3035 = vmatpush1.bf16.msra.mxu0 0
      %3036 = vmatprep.subr.bf16.mxu0 0
      %3037 = vmatpush1.bf16.msra.mxu0 0
      %3038 = vmatprep.mubr.bf16.mxu0 0
      %3039 = vmatmul.mubr.bf16.gmra.mrb[0].mxu0 %v3001
      %v3040 = vpop.f32.mrb[0].mxu0
      %v3041 = vadd.f32 0.0, %v3040
      %v3042 = vpop.f32.mrb[0].mxu0
      %v3043 = vpop.f32.mrb[0].mxu0
      %v3044 = vpop.f32.mrb[0].mxu0
      %3045 = vdwg.mxu0
      %3046 = vrot.lane.b32.xlu0 %v429, 96
      %v3047 = vpop.permute.xlu0 %3046
      %v3049 = vsel %vm2084, %v2449, 0
      %v3052 = vsel %vm2474, %v3047, 0
      %3054 = vmatprep.subr.bf16.mxu0 0
      %3055 = vmatpush1.bf16.msra.mxu0 %v3052
      %3056 = vmatprep.subr.bf16.mxu0 0
      %3057 = vmatpush1.bf16.msra.mxu0 0
      %3058 = vmatprep.subr.bf16.mxu0 0
      %3059 = vmatpush1.bf16.msra.mxu0 0
      %3060 = vmatprep.subr.bf16.mxu0 0
      %3061 = vmatpush1.bf16.msra.mxu0 0
      %3062 = vmatprep.subr.bf16.mxu0 0
      %3063 = vmatpush1.bf16.msra.mxu0 0
      %3064 = vmatprep.subr.bf16.mxu0 0
      %3065 = vmatpush1.bf16.msra.mxu0 0
      %3066 = vmatprep.subr.bf16.mxu0 0
      %3067 = vmatpush1.bf16.msra.mxu0 0
      %3068 = vmatprep.subr.bf16.mxu0 0
      %3069 = vmatpush1.bf16.msra.mxu0 0
      %3070 = vmatprep.subr.bf16.mxu0 0
      %3071 = vmatpush1.bf16.msra.mxu0 0
      %3072 = vmatprep.subr.bf16.mxu0 0
      %3073 = vmatpush1.bf16.msra.mxu0 0
      %3074 = vmatprep.subr.bf16.mxu0 0
      %3075 = vmatpush1.bf16.msra.mxu0 0
      %3076 = vmatprep.subr.bf16.mxu0 0
      %3077 = vmatpush1.bf16.msra.mxu0 0
      %3078 = vmatprep.subr.bf16.mxu0 0
      %3079 = vmatpush1.bf16.msra.mxu0 0
      %3080 = vmatprep.subr.bf16.mxu0 0
      %3081 = vmatpush1.bf16.msra.mxu0 0
      %3082 = vmatprep.subr.bf16.mxu0 0
      %3083 = vmatpush1.bf16.msra.mxu0 0
      %3084 = vmatprep.subr.bf16.mxu0 0
      %3085 = vmatpush1.bf16.msra.mxu0 0
      %3086 = vmatprep.mubr.bf16.mxu0 0
      %3087 = vmatmul.mubr.bf16.gmra.mrb[0].mxu0 %v3049
      %v3088 = vpop.f32.mrb[0].mxu0
      %v3089 = vadd.f32 0.0, %v3088
      %v3090 = vpop.f32.mrb[0].mxu0
      %v3091 = vpop.f32.mrb[0].mxu0
      %v3092 = vpop.f32.mrb[0].mxu0
      %3093 = vdwg.mxu0
      %3094 = vrot.lane.b32.xlu0 %v430, 96
      %v3095 = vpop.permute.xlu0 %3094
      %v3097 = vsel %vm2084, %v2450, 0
      %v3100 = vsel %vm2474, %v3095, 0
      %3102 = vmatprep.subr.bf16.mxu0 0
      %3103 = vmatpush1.bf16.msra.mxu0 %v3100
      %3104 = vmatprep.subr.bf16.mxu0 0
      %3105 = vmatpush1.bf16.msra.mxu0 0
      %3106 = vmatprep.subr.bf16.mxu0 0
      %3107 = vmatpush1.bf16.msra.mxu0 0
      %3108 = vmatprep.subr.bf16.mxu0 0
      %3109 = vmatpush1.bf16.msra.mxu0 0
      %3110 = vmatprep.subr.bf16.mxu0 0
      %3111 = vmatpush1.bf16.msra.mxu0 0
      %3112 = vmatprep.subr.bf16.mxu0 0
      %3113 = vmatpush1.bf16.msra.mxu0 0
      %3114 = vmatprep.subr.bf16.mxu0 0
      %3115 = vmatpush1.bf16.msra.mxu0 0
      %3116 = vmatprep.subr.bf16.mxu0 0
      %3117 = vmatpush1.bf16.msra.mxu0 0
      %3118 = vmatprep.subr.bf16.mxu0 0
      %3119 = vmatpush1.bf16.msra.mxu0 0
      %3120 = vmatprep.subr.bf16.mxu0 0
      %3121 = vmatpush1.bf16.msra.mxu0 0
      %3122 = vmatprep.subr.bf16.mxu0 0
      %3123 = vmatpush1.bf16.msra.mxu0 0
      %3124 = vmatprep.subr.bf16.mxu0 0
      %3125 = vmatpush1.bf16.msra.mxu0 0
      %3126 = vmatprep.subr.bf16.mxu0 0
      %3127 = vmatpush1.bf16.msra.mxu0 0
      %3128 = vmatprep.subr.bf16.mxu0 0
      %3129 = vmatpush1.bf16.msra.mxu0 0
      %3130 = vmatprep.subr.bf16.mxu0 0
      %3131 = vmatpush1.bf16.msra.mxu0 0
      %3132 = vmatprep.subr.bf16.mxu0 0
      %3133 = vmatpush1.bf16.msra.mxu0 0
      %3134 = vmatprep.mubr.bf16.mxu0 0
      %3135 = vmatmul.mubr.bf16.gmra.mrb[0].mxu0 %v3097
      %v3136 = vpop.f32.mrb[0].mxu0
      %v3137 = vadd.f32 0.0, %v3136
      %v3138 = vpop.f32.mrb[0].mxu0
      %v3139 = vpop.f32.mrb[0].mxu0
      %v3140 = vpop.f32.mrb[0].mxu0
      %3141 = vdwg.mxu0
      %3142 = vrot.lane.b32.xlu0 %v431, 96
      %v3143 = vpop.permute.xlu0 %3142
      %v3145 = vsel %vm2084, %v2451, 0
      %v3148 = vsel %vm2474, %v3143, 0
      %3150 = vmatprep.subr.bf16.mxu0 0
      %3151 = vmatpush1.bf16.msra.mxu0 %v3148
      %3152 = vmatprep.subr.bf16.mxu0 0
      %3153 = vmatpush1.bf16.msra.mxu0 0
      %3154 = vmatprep.subr.bf16.mxu0 0
      %3155 = vmatpush1.bf16.msra.mxu0 0
      %3156 = vmatprep.subr.bf16.mxu0 0
      %3157 = vmatpush1.bf16.msra.mxu0 0
      %3158 = vmatprep.subr.bf16.mxu0 0
      %3159 = vmatpush1.bf16.msra.mxu0 0
      %3160 = vmatprep.subr.bf16.mxu0 0
      %3161 = vmatpush1.bf16.msra.mxu0 0
      %3162 = vmatprep.subr.bf16.mxu0 0
      %3163 = vmatpush1.bf16.msra.mxu0 0
      %3164 = vmatprep.subr.bf16.mxu0 0
      %3165 = vmatpush1.bf16.msra.mxu0 0
      %3166 = vmatprep.subr.bf16.mxu0 0
      %3167 = vmatpush1.bf16.msra.mxu0 0
      %3168 = vmatprep.subr.bf16.mxu0 0
      %3169 = vmatpush1.bf16.msra.mxu0 0
      %3170 = vmatprep.subr.bf16.mxu0 0
      %3171 = vmatpush1.bf16.msra.mxu0 0
      %3172 = vmatprep.subr.bf16.mxu0 0
      %3173 = vmatpush1.bf16.msra.mxu0 0
      %3174 = vmatprep.subr.bf16.mxu0 0
      %3175 = vmatpush1.bf16.msra.mxu0 0
      %3176 = vmatprep.subr.bf16.mxu0 0
      %3177 = vmatpush1.bf16.msra.mxu0 0
      %3178 = vmatprep.subr.bf16.mxu0 0
      %3179 = vmatpush1.bf16.msra.mxu0 0
      %3180 = vmatprep.subr.bf16.mxu0 0
      %3181 = vmatpush1.bf16.msra.mxu0 0
      %3182 = vmatprep.mubr.bf16.mxu0 0
      %3183 = vmatmul.mubr.bf16.gmra.mrb[0].mxu0 %v3145
      %v3184 = vpop.f32.mrb[0].mxu0
      %v3185 = vadd.f32 0.0, %v3184
      %v3186 = vpop.f32.mrb[0].mxu0
      %v3187 = vpop.f32.mrb[0].mxu0
      %v3188 = vpop.f32.mrb[0].mxu0
      %3189 = vdwg.mxu0
      %3190 = vrot.lane.b32.xlu0 %v432, 96
      %v3191 = vpop.permute.xlu0 %3190
      %v3193 = vsel %vm2084, %v2452, 0
      %v3196 = vsel %vm2474, %v3191, 0
      %3198 = vmatprep.subr.bf16.mxu0 0
      %3199 = vmatpush1.bf16.msra.mxu0 %v3196
      %3200 = vmatprep.subr.bf16.mxu0 0
      %3201 = vmatpush1.bf16.msra.mxu0 0
      %3202 = vmatprep.subr.bf16.mxu0 0
      %3203 = vmatpush1.bf16.msra.mxu0 0
      %3204 = vmatprep.subr.bf16.mxu0 0
      %3205 = vmatpush1.bf16.msra.mxu0 0
      %3206 = vmatprep.subr.bf16.mxu0 0
      %3207 = vmatpush1.bf16.msra.mxu0 0
      %3208 = vmatprep.subr.bf16.mxu0 0
      %3209 = vmatpush1.bf16.msra.mxu0 0
      %3210 = vmatprep.subr.bf16.mxu0 0
      %3211 = vmatpush1.bf16.msra.mxu0 0
      %3212 = vmatprep.subr.bf16.mxu0 0
      %3213 = vmatpush1.bf16.msra.mxu0 0
      %3214 = vmatprep.subr.bf16.mxu0 0
      %3215 = vmatpush1.bf16.msra.mxu0 0
      %3216 = vmatprep.subr.bf16.mxu0 0
      %3217 = vmatpush1.bf16.msra.mxu0 0
      %3218 = vmatprep.subr.bf16.mxu0 0
      %3219 = vmatpush1.bf16.msra.mxu0 0
      %3220 = vmatprep.subr.bf16.mxu0 0
      %3221 = vmatpush1.bf16.msra.mxu0 0
      %3222 = vmatprep.subr.bf16.mxu0 0
      %3223 = vmatpush1.bf16.msra.mxu0 0
      %3224 = vmatprep.subr.bf16.mxu0 0
      %3225 = vmatpush1.bf16.msra.mxu0 0
      %3226 = vmatprep.subr.bf16.mxu0 0
      %3227 = vmatpush1.bf16.msra.mxu0 0
      %3228 = vmatprep.subr.bf16.mxu0 0
      %3229 = vmatpush1.bf16.msra.mxu0 0
      %3230 = vmatprep.mubr.bf16.mxu0 0
      %3231 = vmatmul.mubr.bf16.gmra.mrb[0].mxu0 %v3193
      %v3232 = vpop.f32.mrb[0].mxu0
      %v3233 = vadd.f32 0.0, %v3232
      %v3234 = vpop.f32.mrb[0].mxu0
      %v3235 = vpop.f32.mrb[0].mxu0
      %v3236 = vpop.f32.mrb[0].mxu0
      %3237 = vdwg.mxu0
      %3238 = vrot.lane.b32.xlu0 %v433, 96
      %v3239 = vpop.permute.xlu0 %3238
      %v3241 = vsel %vm2084, %v2453, 0
      %v3244 = vsel %vm2474, %v3239, 0
      %3246 = vmatprep.subr.bf16.mxu0 0
      %3247 = vmatpush1.bf16.msra.mxu0 %v3244
      %3248 = vmatprep.subr.bf16.mxu0 0
      %3249 = vmatpush1.bf16.msra.mxu0 0
      %3250 = vmatprep.subr.bf16.mxu0 0
      %3251 = vmatpush1.bf16.msra.mxu0 0
      %3252 = vmatprep.subr.bf16.mxu0 0
      %3253 = vmatpush1.bf16.msra.mxu0 0
      %3254 = vmatprep.subr.bf16.mxu0 0
      %3255 = vmatpush1.bf16.msra.mxu0 0
      %3256 = vmatprep.subr.bf16.mxu0 0
      %3257 = vmatpush1.bf16.msra.mxu0 0
      %3258 = vmatprep.subr.bf16.mxu0 0
      %3259 = vmatpush1.bf16.msra.mxu0 0
      %3260 = vmatprep.subr.bf16.mxu0 0
      %3261 = vmatpush1.bf16.msra.mxu0 0
      %3262 = vmatprep.subr.bf16.mxu0 0
      %3263 = vmatpush1.bf16.msra.mxu0 0
      %3264 = vmatprep.subr.bf16.mxu0 0
      %3265 = vmatpush1.bf16.msra.mxu0 0
      %3266 = vmatprep.subr.bf16.mxu0 0
      %3267 = vmatpush1.bf16.msra.mxu0 0
      %3268 = vmatprep.subr.bf16.mxu0 0
      %3269 = vmatpush1.bf16.msra.mxu0 0
      %3270 = vmatprep.subr.bf16.mxu0 0
      %3271 = vmatpush1.bf16.msra.mxu0 0
      %3272 = vmatprep.subr.bf16.mxu0 0
      %3273 = vmatpush1.bf16.msra.mxu0 0
      %3274 = vmatprep.subr.bf16.mxu0 0
      %3275 = vmatpush1.bf16.msra.mxu0 0
      %3276 = vmatprep.subr.bf16.mxu0 0
      %3277 = vmatpush1.bf16.msra.mxu0 0
      %3278 = vmatprep.mubr.bf16.mxu0 0
      %3279 = vmatmul.mubr.bf16.gmra.mrb[0].mxu0 %v3241
      %v3280 = vpop.f32.mrb[0].mxu0
      %v3281 = vadd.f32 0.0, %v3280
      %v3282 = vpop.f32.mrb[0].mxu0
      %v3283 = vpop.f32.mrb[0].mxu0
      %v3284 = vpop.f32.mrb[0].mxu0
      %3285 = vdwg.mxu0
      %3286 = vrot.lane.b32.xlu0 %v434, 96
      %v3287 = vpop.permute.xlu0 %3286
      %v3289 = vsel %vm2084, %v2454, 0
      %v3292 = vsel %vm2474, %v3287, 0
      %3294 = vmatprep.subr.bf16.mxu0 0
      %3295 = vmatpush1.bf16.msra.mxu0 %v3292
      %3296 = vmatprep.subr.bf16.mxu0 0
      %3297 = vmatpush1.bf16.msra.mxu0 0
      %3298 = vmatprep.subr.bf16.mxu0 0
      %3299 = vmatpush1.bf16.msra.mxu0 0
      %3300 = vmatprep.subr.bf16.mxu0 0
      %3301 = vmatpush1.bf16.msra.mxu0 0
      %3302 = vmatprep.subr.bf16.mxu0 0
      %3303 = vmatpush1.bf16.msra.mxu0 0
      %3304 = vmatprep.subr.bf16.mxu0 0
      %3305 = vmatpush1.bf16.msra.mxu0 0
      %3306 = vmatprep.subr.bf16.mxu0 0
      %3307 = vmatpush1.bf16.msra.mxu0 0
      %3308 = vmatprep.subr.bf16.mxu0 0
      %3309 = vmatpush1.bf16.msra.mxu0 0
      %3310 = vmatprep.subr.bf16.mxu0 0
      %3311 = vmatpush1.bf16.msra.mxu0 0
      %3312 = vmatprep.subr.bf16.mxu0 0
      %3313 = vmatpush1.bf16.msra.mxu0 0
      %3314 = vmatprep.subr.bf16.mxu0 0
      %3315 = vmatpush1.bf16.msra.mxu0 0
      %3316 = vmatprep.subr.bf16.mxu0 0
      %3317 = vmatpush1.bf16.msra.mxu0 0
      %3318 = vmatprep.subr.bf16.mxu0 0
      %3319 = vmatpush1.bf16.msra.mxu0 0
      %3320 = vmatprep.subr.bf16.mxu0 0
      %3321 = vmatpush1.bf16.msra.mxu0 0
      %3322 = vmatprep.subr.bf16.mxu0 0
      %3323 = vmatpush1.bf16.msra.mxu0 0
      %3324 = vmatprep.subr.bf16.mxu0 0
      %3325 = vmatpush1.bf16.msra.mxu0 0
      %3326 = vmatprep.mubr.bf16.mxu0 0
      %3327 = vmatmul.mubr.bf16.gmra.mrb[0].mxu0 %v3289
      %v3328 = vpop.f32.mrb[0].mxu0
      %v3329 = vadd.f32 0.0, %v3328
      %v3330 = vpop.f32.mrb[0].mxu0
      %v3331 = vpop.f32.mrb[0].mxu0
      %v3332 = vpop.f32.mrb[0].mxu0
      %3333 = vdwg.mxu0
      %3334 = vrot.lane.b32.xlu0 %v435, 96
      %v3335 = vpop.permute.xlu0 %3334
      %v3337 = vsel %vm2084, %v2455, 0
      %v3340 = vsel %vm2474, %v3335, 0
      %3342 = vmatprep.subr.bf16.mxu0 0
      %3343 = vmatpush1.bf16.msra.mxu0 %v3340
      %3344 = vmatprep.subr.bf16.mxu0 0
      %3345 = vmatpush1.bf16.msra.mxu0 0
      %3346 = vmatprep.subr.bf16.mxu0 0
      %3347 = vmatpush1.bf16.msra.mxu0 0
      %3348 = vmatprep.subr.bf16.mxu0 0
      %3349 = vmatpush1.bf16.msra.mxu0 0
      %3350 = vmatprep.subr.bf16.mxu0 0
      %3351 = vmatpush1.bf16.msra.mxu0 0
      %3352 = vmatprep.subr.bf16.mxu0 0
      %3353 = vmatpush1.bf16.msra.mxu0 0
      %3354 = vmatprep.subr.bf16.mxu0 0
      %3355 = vmatpush1.bf16.msra.mxu0 0
      %3356 = vmatprep.subr.bf16.mxu0 0
      %3357 = vmatpush1.bf16.msra.mxu0 0
      %3358 = vmatprep.subr.bf16.mxu0 0
      %3359 = vmatpush1.bf16.msra.mxu0 0
      %3360 = vmatprep.subr.bf16.mxu0 0
      %3361 = vmatpush1.bf16.msra.mxu0 0
      %3362 = vmatprep.subr.bf16.mxu0 0
      %3363 = vmatpush1.bf16.msra.mxu0 0
      %3364 = vmatprep.subr.bf16.mxu0 0
      %3365 = vmatpush1.bf16.msra.mxu0 0
      %3366 = vmatprep.subr.bf16.mxu0 0
      %3367 = vmatpush1.bf16.msra.mxu0 0
      %3368 = vmatprep.subr.bf16.mxu0 0
      %3369 = vmatpush1.bf16.msra.mxu0 0
      %3370 = vmatprep.subr.bf16.mxu0 0
      %3371 = vmatpush1.bf16.msra.mxu0 0
      %3372 = vmatprep.subr.bf16.mxu0 0
      %3373 = vmatpush1.bf16.msra.mxu0 0
      %3374 = vmatprep.mubr.bf16.mxu0 0
      %3375 = vmatmul.mubr.bf16.gmra.mrb[0].mxu0 %v3337
      %v3376 = vpop.f32.mrb[0].mxu0
      %v3377 = vadd.f32 0.0, %v3376
      %v3378 = vpop.f32.mrb[0].mxu0
      %v3379 = vpop.f32.mrb[0].mxu0
      %v3380 = vpop.f32.mrb[0].mxu0
      %3381 = vdwg.mxu0
      %3382 = vrot.lane.b32.xlu0 %v436, 96
      %v3383 = vpop.permute.xlu0 %3382
      %v3385 = vsel %vm2084, %v2456, 0
      %v3388 = vsel %vm2474, %v3383, 0
      %3390 = vmatprep.subr.bf16.mxu0 0
      %3391 = vmatpush1.bf16.msra.mxu0 %v3388
      %3392 = vmatprep.subr.bf16.mxu0 0
      %3393 = vmatpush1.bf16.msra.mxu0 0
      %3394 = vmatprep.subr.bf16.mxu0 0
      %3395 = vmatpush1.bf16.msra.mxu0 0
      %3396 = vmatprep.subr.bf16.mxu0 0
      %3397 = vmatpush1.bf16.msra.mxu0 0
      %3398 = vmatprep.subr.bf16.mxu0 0
      %3399 = vmatpush1.bf16.msra.mxu0 0
      %3400 = vmatprep.subr.bf16.mxu0 0
      %3401 = vmatpush1.bf16.msra.mxu0 0
      %3402 = vmatprep.subr.bf16.mxu0 0
      %3403 = vmatpush1.bf16.msra.mxu0 0
      %3404 = vmatprep.subr.bf16.mxu0 0
      %3405 = vmatpush1.bf16.msra.mxu0 0
      %3406 = vmatprep.subr.bf16.mxu0 0
      %3407 = vmatpush1.bf16.msra.mxu0 0
      %3408 = vmatprep.subr.bf16.mxu0 0
      %3409 = vmatpush1.bf16.msra.mxu0 0
      %3410 = vmatprep.subr.bf16.mxu0 0
      %3411 = vmatpush1.bf16.msra.mxu0 0
      %3412 = vmatprep.subr.bf16.mxu0 0
      %3413 = vmatpush1.bf16.msra.mxu0 0
      %3414 = vmatprep.subr.bf16.mxu0 0
      %3415 = vmatpush1.bf16.msra.mxu0 0
      %3416 = vmatprep.subr.bf16.mxu0 0
      %3417 = vmatpush1.bf16.msra.mxu0 0
      %3418 = vmatprep.subr.bf16.mxu0 0
      %3419 = vmatpush1.bf16.msra.mxu0 0
      %3420 = vmatprep.subr.bf16.mxu0 0
      %3421 = vmatpush1.bf16.msra.mxu0 0
      %3422 = vmatprep.mubr.bf16.mxu0 0
      %3423 = vmatmul.mubr.bf16.gmra.mrb[0].mxu0 %v3385
      %v3424 = vpop.f32.mrb[0].mxu0
      %v3425 = vadd.f32 0.0, %v3424
      %v3426 = vpop.f32.mrb[0].mxu0
      %v3427 = vpop.f32.mrb[0].mxu0
      %v3428 = vpop.f32.mrb[0].mxu0
      %3429 = vdwg.mxu0
      %3430 = vrot.lane.b32.xlu0 %v437, 96
      %v3431 = vpop.permute.xlu0 %3430
      %v3433 = vsel %vm2084, %v2457, 0
      %v3436 = vsel %vm2474, %v3431, 0
      %3438 = vmatprep.subr.bf16.mxu0 0
      %3439 = vmatpush1.bf16.msra.mxu0 %v3436
      %3440 = vmatprep.subr.bf16.mxu0 0
      %3441 = vmatpush1.bf16.msra.mxu0 0
      %3442 = vmatprep.subr.bf16.mxu0 0
      %3443 = vmatpush1.bf16.msra.mxu0 0
      %3444 = vmatprep.subr.bf16.mxu0 0
      %3445 = vmatpush1.bf16.msra.mxu0 0
      %3446 = vmatprep.subr.bf16.mxu0 0
      %3447 = vmatpush1.bf16.msra.mxu0 0
      %3448 = vmatprep.subr.bf16.mxu0 0
      %3449 = vmatpush1.bf16.msra.mxu0 0
      %3450 = vmatprep.subr.bf16.mxu0 0
      %3451 = vmatpush1.bf16.msra.mxu0 0
      %3452 = vmatprep.subr.bf16.mxu0 0
      %3453 = vmatpush1.bf16.msra.mxu0 0
      %3454 = vmatprep.subr.bf16.mxu0 0
      %3455 = vmatpush1.bf16.msra.mxu0 0
      %3456 = vmatprep.subr.bf16.mxu0 0
      %3457 = vmatpush1.bf16.msra.mxu0 0
      %3458 = vmatprep.subr.bf16.mxu0 0
      %3459 = vmatpush1.bf16.msra.mxu0 0
      %3460 = vmatprep.subr.bf16.mxu0 0
      %3461 = vmatpush1.bf16.msra.mxu0 0
      %3462 = vmatprep.subr.bf16.mxu0 0
      %3463 = vmatpush1.bf16.msra.mxu0 0
      %3464 = vmatprep.subr.bf16.mxu0 0
      %3465 = vmatpush1.bf16.msra.mxu0 0
      %3466 = vmatprep.subr.bf16.mxu0 0
      %3467 = vmatpush1.bf16.msra.mxu0 0
      %3468 = vmatprep.subr.bf16.mxu0 0
      %3469 = vmatpush1.bf16.msra.mxu0 0
      %3470 = vmatprep.mubr.bf16.mxu0 0
      %3471 = vmatmul.mubr.bf16.gmra.mrb[0].mxu0 %v3433
      %v3472 = vpop.f32.mrb[0].mxu0
      %v3473 = vadd.f32 0.0, %v3472
      %v3474 = vpop.f32.mrb[0].mxu0
      %v3475 = vpop.f32.mrb[0].mxu0
      %v3476 = vpop.f32.mrb[0].mxu0
      %3477 = vdwg.mxu0
      %3478 = vrot.lane.b32.xlu0 %v438, 96
      %v3479 = vpop.permute.xlu0 %3478
      %v3481 = vsel %vm2084, %v2458, 0
      %v3484 = vsel %vm2474, %v3479, 0
      %3486 = vmatprep.subr.bf16.mxu0 0
      %3487 = vmatpush1.bf16.msra.mxu0 %v3484
      %3488 = vmatprep.subr.bf16.mxu0 0
      %3489 = vmatpush1.bf16.msra.mxu0 0
      %3490 = vmatprep.subr.bf16.mxu0 0
      %3491 = vmatpush1.bf16.msra.mxu0 0
      %3492 = vmatprep.subr.bf16.mxu0 0
      %3493 = vmatpush1.bf16.msra.mxu0 0
      %3494 = vmatprep.subr.bf16.mxu0 0
      %3495 = vmatpush1.bf16.msra.mxu0 0
      %3496 = vmatprep.subr.bf16.mxu0 0
      %3497 = vmatpush1.bf16.msra.mxu0 0
      %3498 = vmatprep.subr.bf16.mxu0 0
      %3499 = vmatpush1.bf16.msra.mxu0 0
      %3500 = vmatprep.subr.bf16.mxu0 0
      %3501 = vmatpush1.bf16.msra.mxu0 0
      %3502 = vmatprep.subr.bf16.mxu0 0
      %3503 = vmatpush1.bf16.msra.mxu0 0
      %3504 = vmatprep.subr.bf16.mxu0 0
      %3505 = vmatpush1.bf16.msra.mxu0 0
      %3506 = vmatprep.subr.bf16.mxu0 0
      %3507 = vmatpush1.bf16.msra.mxu0 0
      %3508 = vmatprep.subr.bf16.mxu0 0
      %3509 = vmatpush1.bf16.msra.mxu0 0
      %3510 = vmatprep.subr.bf16.mxu0 0
      %3511 = vmatpush1.bf16.msra.mxu0 0
      %3512 = vmatprep.subr.bf16.mxu0 0
      %3513 = vmatpush1.bf16.msra.mxu0 0
      %3514 = vmatprep.subr.bf16.mxu0 0
      %3515 = vmatpush1.bf16.msra.mxu0 0
      %3516 = vmatprep.subr.bf16.mxu0 0
      %3517 = vmatpush1.bf16.msra.mxu0 0
      %3518 = vmatprep.mubr.bf16.mxu0 0
      %3519 = vmatmul.mubr.bf16.gmra.mrb[0].mxu0 %v3481
      %v3520 = vpop.f32.mrb[0].mxu0
      %v3521 = vadd.f32 0.0, %v3520
      %v3522 = vpop.f32.mrb[0].mxu0
      %v3523 = vpop.f32.mrb[0].mxu0
      %v3524 = vpop.f32.mrb[0].mxu0
      %3525 = vdwg.mxu0
      %3526 = vrot.lane.b32.xlu0 %v439, 96
      %v3527 = vpop.permute.xlu0 %3526
      %v3529 = vsel %vm2084, %v2459, 0
      %v3532 = vsel %vm2474, %v3527, 0
      %3534 = vmatprep.subr.bf16.mxu0 0
      %3535 = vmatpush1.bf16.msra.mxu0 %v3532
      %3536 = vmatprep.subr.bf16.mxu0 0
      %3537 = vmatpush1.bf16.msra.mxu0 0
      %3538 = vmatprep.subr.bf16.mxu0 0
      %3539 = vmatpush1.bf16.msra.mxu0 0
      %3540 = vmatprep.subr.bf16.mxu0 0
      %3541 = vmatpush1.bf16.msra.mxu0 0
      %3542 = vmatprep.subr.bf16.mxu0 0
      %3543 = vmatpush1.bf16.msra.mxu0 0
      %3544 = vmatprep.subr.bf16.mxu0 0
      %3545 = vmatpush1.bf16.msra.mxu0 0
      %3546 = vmatprep.subr.bf16.mxu0 0
      %3547 = vmatpush1.bf16.msra.mxu0 0
      %3548 = vmatprep.subr.bf16.mxu0 0
      %3549 = vmatpush1.bf16.msra.mxu0 0
      %3550 = vmatprep.subr.bf16.mxu0 0
      %3551 = vmatpush1.bf16.msra.mxu0 0
      %3552 = vmatprep.subr.bf16.mxu0 0
      %3553 = vmatpush1.bf16.msra.mxu0 0
      %3554 = vmatprep.subr.bf16.mxu0 0
      %3555 = vmatpush1.bf16.msra.mxu0 0
      %3556 = vmatprep.subr.bf16.mxu0 0
      %3557 = vmatpush1.bf16.msra.mxu0 0
      %3558 = vmatprep.subr.bf16.mxu0 0
      %3559 = vmatpush1.bf16.msra.mxu0 0
      %3560 = vmatprep.subr.bf16.mxu0 0
      %3561 = vmatpush1.bf16.msra.mxu0 0
      %3562 = vmatprep.subr.bf16.mxu0 0
      %3563 = vmatpush1.bf16.msra.mxu0 0
      %3564 = vmatprep.subr.bf16.mxu0 0
      %3565 = vmatpush1.bf16.msra.mxu0 0
      %3566 = vmatprep.mubr.bf16.mxu0 0
      %3567 = vmatmul.mubr.bf16.gmra.mrb[0].mxu0 %v3529
      %v3568 = vpop.f32.mrb[0].mxu0
      %v3569 = vadd.f32 0.0, %v3568
      %v3570 = vpop.f32.mrb[0].mxu0
      %v3571 = vpop.f32.mrb[0].mxu0
      %v3572 = vpop.f32.mrb[0].mxu0
      %3573 = vdwg.mxu0
      %3574 = vrot.lane.b32.xlu0 %v440, 96
      %v3575 = vpop.permute.xlu0 %3574
      %v3577 = vsel %vm2084, %v2460, 0
      %v3580 = vsel %vm2474, %v3575, 0
      %3582 = vmatprep.subr.bf16.mxu0 0
      %3583 = vmatpush1.bf16.msra.mxu0 %v3580
      %3584 = vmatprep.subr.bf16.mxu0 0
      %3585 = vmatpush1.bf16.msra.mxu0 0
      %3586 = vmatprep.subr.bf16.mxu0 0
      %3587 = vmatpush1.bf16.msra.mxu0 0
      %3588 = vmatprep.subr.bf16.mxu0 0
      %3589 = vmatpush1.bf16.msra.mxu0 0
      %3590 = vmatprep.subr.bf16.mxu0 0
      %3591 = vmatpush1.bf16.msra.mxu0 0
      %3592 = vmatprep.subr.bf16.mxu0 0
      %3593 = vmatpush1.bf16.msra.mxu0 0
      %3594 = vmatprep.subr.bf16.mxu0 0
      %3595 = vmatpush1.bf16.msra.mxu0 0
      %3596 = vmatprep.subr.bf16.mxu0 0
      %3597 = vmatpush1.bf16.msra.mxu0 0
      %3598 = vmatprep.subr.bf16.mxu0 0
      %3599 = vmatpush1.bf16.msra.mxu0 0
      %3600 = vmatprep.subr.bf16.mxu0 0
      %3601 = vmatpush1.bf16.msra.mxu0 0
      %3602 = vmatprep.subr.bf16.mxu0 0
      %3603 = vmatpush1.bf16.msra.mxu0 0
      %3604 = vmatprep.subr.bf16.mxu0 0
      %3605 = vmatpush1.bf16.msra.mxu0 0
      %3606 = vmatprep.subr.bf16.mxu0 0
      %3607 = vmatpush1.bf16.msra.mxu0 0
      %3608 = vmatprep.subr.bf16.mxu0 0
      %3609 = vmatpush1.bf16.msra.mxu0 0
      %3610 = vmatprep.subr.bf16.mxu0 0
      %3611 = vmatpush1.bf16.msra.mxu0 0
      %3612 = vmatprep.subr.bf16.mxu0 0
      %3613 = vmatpush1.bf16.msra.mxu0 0
      %3614 = vmatprep.mubr.bf16.mxu0 0
      %3615 = vmatmul.mubr.bf16.gmra.mrb[0].mxu0 %v3577
      %v3616 = vpop.f32.mrb[0].mxu0
      %v3617 = vadd.f32 0.0, %v3616
      %v3618 = vpop.f32.mrb[0].mxu0
      %v3619 = vpop.f32.mrb[0].mxu0
      %v3620 = vpop.f32.mrb[0].mxu0
      %3621 = vdwg.mxu0
      %3622 = vrot.lane.b32.xlu0 %v441, 96
      %v3623 = vpop.permute.xlu0 %3622
      %v3625 = vsel %vm2084, %v2461, 0
      %v3628 = vsel %vm2474, %v3623, 0
      %3630 = vmatprep.subr.bf16.mxu0 0
      %3631 = vmatpush1.bf16.msra.mxu0 %v3628
      %3632 = vmatprep.subr.bf16.mxu0 0
      %3633 = vmatpush1.bf16.msra.mxu0 0
      %3634 = vmatprep.subr.bf16.mxu0 0
      %3635 = vmatpush1.bf16.msra.mxu0 0
      %3636 = vmatprep.subr.bf16.mxu0 0
      %3637 = vmatpush1.bf16.msra.mxu0 0
      %3638 = vmatprep.subr.bf16.mxu0 0
      %3639 = vmatpush1.bf16.msra.mxu0 0
      %3640 = vmatprep.subr.bf16.mxu0 0
      %3641 = vmatpush1.bf16.msra.mxu0 0
      %3642 = vmatprep.subr.bf16.mxu0 0
      %3643 = vmatpush1.bf16.msra.mxu0 0
      %3644 = vmatprep.subr.bf16.mxu0 0
      %3645 = vmatpush1.bf16.msra.mxu0 0
      %3646 = vmatprep.subr.bf16.mxu0 0
      %3647 = vmatpush1.bf16.msra.mxu0 0
      %3648 = vmatprep.subr.bf16.mxu0 0
      %3649 = vmatpush1.bf16.msra.mxu0 0
      %3650 = vmatprep.subr.bf16.mxu0 0
      %3651 = vmatpush1.bf16.msra.mxu0 0
      %3652 = vmatprep.subr.bf16.mxu0 0
      %3653 = vmatpush1.bf16.msra.mxu0 0
      %3654 = vmatprep.subr.bf16.mxu0 0
      %3655 = vmatpush1.bf16.msra.mxu0 0
      %3656 = vmatprep.subr.bf16.mxu0 0
      %3657 = vmatpush1.bf16.msra.mxu0 0
      %3658 = vmatprep.subr.bf16.mxu0 0
      %3659 = vmatpush1.bf16.msra.mxu0 0
      %3660 = vmatprep.subr.bf16.mxu0 0
      %3661 = vmatpush1.bf16.msra.mxu0 0
      %3662 = vmatprep.mubr.bf16.mxu0 0
      %3663 = vmatmul.mubr.bf16.gmra.mrb[0].mxu0 %v3625
      %v3664 = vpop.f32.mrb[0].mxu0
      %v3665 = vadd.f32 0.0, %v3664
      %v3666 = vpop.f32.mrb[0].mxu0
      %v3667 = vpop.f32.mrb[0].mxu0
      %v3668 = vpop.f32.mrb[0].mxu0
      %3669 = vdwg.mxu0
      %3670 = vrot.lane.b32.xlu0 %v442, 96
      %v3671 = vpop.permute.xlu0 %3670
      %v3673 = vsel %vm2084, %v2462, 0
      %v3676 = vsel %vm2474, %v3671, 0
      %3678 = vmatprep.subr.bf16.mxu0 0
      %3679 = vmatpush1.bf16.msra.mxu0 %v3676
      %3680 = vmatprep.subr.bf16.mxu0 0
      %3681 = vmatpush1.bf16.msra.mxu0 0
      %3682 = vmatprep.subr.bf16.mxu0 0
      %3683 = vmatpush1.bf16.msra.mxu0 0
      %3684 = vmatprep.subr.bf16.mxu0 0
      %3685 = vmatpush1.bf16.msra.mxu0 0
      %3686 = vmatprep.subr.bf16.mxu0 0
      %3687 = vmatpush1.bf16.msra.mxu0 0
      %3688 = vmatprep.subr.bf16.mxu0 0
      %3689 = vmatpush1.bf16.msra.mxu0 0
      %3690 = vmatprep.subr.bf16.mxu0 0
      %3691 = vmatpush1.bf16.msra.mxu0 0
      %3692 = vmatprep.subr.bf16.mxu0 0
      %3693 = vmatpush1.bf16.msra.mxu0 0
      %3694 = vmatprep.subr.bf16.mxu0 0
      %3695 = vmatpush1.bf16.msra.mxu0 0
      %3696 = vmatprep.subr.bf16.mxu0 0
      %3697 = vmatpush1.bf16.msra.mxu0 0
      %3698 = vmatprep.subr.bf16.mxu0 0
      %3699 = vmatpush1.bf16.msra.mxu0 0
      %3700 = vmatprep.subr.bf16.mxu0 0
      %3701 = vmatpush1.bf16.msra.mxu0 0
      %3702 = vmatprep.subr.bf16.mxu0 0
      %3703 = vmatpush1.bf16.msra.mxu0 0
      %3704 = vmatprep.subr.bf16.mxu0 0
      %3705 = vmatpush1.bf16.msra.mxu0 0
      %3706 = vmatprep.subr.bf16.mxu0 0
      %3707 = vmatpush1.bf16.msra.mxu0 0
      %3708 = vmatprep.subr.bf16.mxu0 0
      %3709 = vmatpush1.bf16.msra.mxu0 0
      %3710 = vmatprep.mubr.bf16.mxu0 0
      %3711 = vmatmul.mubr.bf16.gmra.mrb[0].mxu0 %v3673
      %v3712 = vpop.f32.mrb[0].mxu0
      %v3713 = vadd.f32 0.0, %v3712
      %v3714 = vpop.f32.mrb[0].mxu0
      %v3715 = vpop.f32.mrb[0].mxu0
      %v3716 = vpop.f32.mrb[0].mxu0
      %3717 = vdwg.mxu0
      %3718 = vrot.lane.b32.xlu0 %v443, 96
      %v3719 = vpop.permute.xlu0 %3718
      %v3721 = vsel %vm2084, %v2463, 0
      %v3724 = vsel %vm2474, %v3719, 0
      %3726 = vmatprep.subr.bf16.mxu0 0
      %3727 = vmatpush1.bf16.msra.mxu0 %v3724
      %3728 = vmatprep.subr.bf16.mxu0 0
      %3729 = vmatpush1.bf16.msra.mxu0 0
      %3730 = vmatprep.subr.bf16.mxu0 0
      %3731 = vmatpush1.bf16.msra.mxu0 0
      %3732 = vmatprep.subr.bf16.mxu0 0
      %3733 = vmatpush1.bf16.msra.mxu0 0
      %3734 = vmatprep.subr.bf16.mxu0 0
      %3735 = vmatpush1.bf16.msra.mxu0 0
      %3736 = vmatprep.subr.bf16.mxu0 0
      %3737 = vmatpush1.bf16.msra.mxu0 0
      %3738 = vmatprep.subr.bf16.mxu0 0
      %3739 = vmatpush1.bf16.msra.mxu0 0
      %3740 = vmatprep.subr.bf16.mxu0 0
      %3741 = vmatpush1.bf16.msra.mxu0 0
      %3742 = vmatprep.subr.bf16.mxu0 0
      %3743 = vmatpush1.bf16.msra.mxu0 0
      %3744 = vmatprep.subr.bf16.mxu0 0
      %3745 = vmatpush1.bf16.msra.mxu0 0
      %3746 = vmatprep.subr.bf16.mxu0 0
      %3747 = vmatpush1.bf16.msra.mxu0 0
      %3748 = vmatprep.subr.bf16.mxu0 0
      %3749 = vmatpush1.bf16.msra.mxu0 0
      %3750 = vmatprep.subr.bf16.mxu0 0
      %3751 = vmatpush1.bf16.msra.mxu0 0
      %3752 = vmatprep.subr.bf16.mxu0 0
      %3753 = vmatpush1.bf16.msra.mxu0 0
      %3754 = vmatprep.subr.bf16.mxu0 0
      %3755 = vmatpush1.bf16.msra.mxu0 0
      %3756 = vmatprep.subr.bf16.mxu0 0
      %3757 = vmatpush1.bf16.msra.mxu0 0
      %3758 = vmatprep.mubr.bf16.mxu0 0
      %3759 = vmatmul.mubr.bf16.gmra.mrb[0].mxu0 %v3721
      %v3760 = vpop.f32.mrb[0].mxu0
      %v3761 = vadd.f32 0.0, %v3760
      %v3762 = vpop.f32.mrb[0].mxu0
      %v3763 = vpop.f32.mrb[0].mxu0
      %v3764 = vpop.f32.mrb[0].mxu0
      %3765 = vdwg.mxu0
      %3766 = vrot.lane.b32.xlu0 %v444, 96
      %v3767 = vpop.permute.xlu0 %3766
      %v3769 = vsel %vm2084, %v2464, 0
      %v3772 = vsel %vm2474, %v3767, 0
      %3774 = vmatprep.subr.bf16.mxu0 0
      %3775 = vmatpush1.bf16.msra.mxu0 %v3772
      %3776 = vmatprep.subr.bf16.mxu0 0
      %3777 = vmatpush1.bf16.msra.mxu0 0
      %3778 = vmatprep.subr.bf16.mxu0 0
      %3779 = vmatpush1.bf16.msra.mxu0 0
      %3780 = vmatprep.subr.bf16.mxu0 0
      %3781 = vmatpush1.bf16.msra.mxu0 0
      %3782 = vmatprep.subr.bf16.mxu0 0
      %3783 = vmatpush1.bf16.msra.mxu0 0
      %3784 = vmatprep.subr.bf16.mxu0 0
      %3785 = vmatpush1.bf16.msra.mxu0 0
      %3786 = vmatprep.subr.bf16.mxu0 0
      %3787 = vmatpush1.bf16.msra.mxu0 0
      %3788 = vmatprep.subr.bf16.mxu0 0
      %3789 = vmatpush1.bf16.msra.mxu0 0
      %3790 = vmatprep.subr.bf16.mxu0 0
      %3791 = vmatpush1.bf16.msra.mxu0 0
      %3792 = vmatprep.subr.bf16.mxu0 0
      %3793 = vmatpush1.bf16.msra.mxu0 0
      %3794 = vmatprep.subr.bf16.mxu0 0
      %3795 = vmatpush1.bf16.msra.mxu0 0
      %3796 = vmatprep.subr.bf16.mxu0 0
      %3797 = vmatpush1.bf16.msra.mxu0 0
      %3798 = vmatprep.subr.bf16.mxu0 0
      %3799 = vmatpush1.bf16.msra.mxu0 0
      %3800 = vmatprep.subr.bf16.mxu0 0
      %3801 = vmatpush1.bf16.msra.mxu0 0
      %3802 = vmatprep.subr.bf16.mxu0 0
      %3803 = vmatpush1.bf16.msra.mxu0 0
      %3804 = vmatprep.subr.bf16.mxu0 0
      %3805 = vmatpush1.bf16.msra.mxu0 0
      %3806 = vmatprep.mubr.bf16.mxu0 0
      %3807 = vmatmul.mubr.bf16.gmra.mrb[0].mxu0 %v3769
      %v3808 = vpop.f32.mrb[0].mxu0
      %v3809 = vadd.f32 0.0, %v3808
      %v3810 = vpop.f32.mrb[0].mxu0
      %v3811 = vpop.f32.mrb[0].mxu0
      %v3812 = vpop.f32.mrb[0].mxu0
      %3813 = vdwg.mxu0
      %3814 = vrot.lane.b32.xlu0 %v445, 96
      %v3815 = vpop.permute.xlu0 %3814
      %v3817 = vsel %vm2084, %v2465, 0
      %v3820 = vsel %vm2474, %v3815, 0
      %3822 = vmatprep.subr.bf16.mxu0 0
      %3823 = vmatpush1.bf16.msra.mxu0 %v3820
      %3824 = vmatprep.subr.bf16.mxu0 0
      %3825 = vmatpush1.bf16.msra.mxu0 0
      %3826 = vmatprep.subr.bf16.mxu0 0
      %3827 = vmatpush1.bf16.msra.mxu0 0
      %3828 = vmatprep.subr.bf16.mxu0 0
      %3829 = vmatpush1.bf16.msra.mxu0 0
      %3830 = vmatprep.subr.bf16.mxu0 0
      %3831 = vmatpush1.bf16.msra.mxu0 0
      %3832 = vmatprep.subr.bf16.mxu0 0
      %3833 = vmatpush1.bf16.msra.mxu0 0
      %3834 = vmatprep.subr.bf16.mxu0 0
      %3835 = vmatpush1.bf16.msra.mxu0 0
      %3836 = vmatprep.subr.bf16.mxu0 0
      %3837 = vmatpush1.bf16.msra.mxu0 0
      %3838 = vmatprep.subr.bf16.mxu0 0
      %3839 = vmatpush1.bf16.msra.mxu0 0
      %3840 = vmatprep.subr.bf16.mxu0 0
      %3841 = vmatpush1.bf16.msra.mxu0 0
      %3842 = vmatprep.subr.bf16.mxu0 0
      %3843 = vmatpush1.bf16.msra.mxu0 0
      %3844 = vmatprep.subr.bf16.mxu0 0
      %3845 = vmatpush1.bf16.msra.mxu0 0
      %3846 = vmatprep.subr.bf16.mxu0 0
      %3847 = vmatpush1.bf16.msra.mxu0 0
      %3848 = vmatprep.subr.bf16.mxu0 0
      %3849 = vmatpush1.bf16.msra.mxu0 0
      %3850 = vmatprep.subr.bf16.mxu0 0
      %3851 = vmatpush1.bf16.msra.mxu0 0
      %3852 = vmatprep.subr.bf16.mxu0 0
      %3853 = vmatpush1.bf16.msra.mxu0 0
      %3854 = vmatprep.mubr.bf16.mxu0 0
      %3855 = vmatmul.mubr.bf16.gmra.mrb[0].mxu0 %v3817
      %v3856 = vpop.f32.mrb[0].mxu0
      %v3857 = vadd.f32 0.0, %v3856
      %v3858 = vpop.f32.mrb[0].mxu0
      %v3859 = vpop.f32.mrb[0].mxu0
      %v3860 = vpop.f32.mrb[0].mxu0
      %3861 = vdwg.mxu0
      %3862 = vrot.lane.b32.xlu0 %v446, 96
      %v3863 = vpop.permute.xlu0 %3862
      %v3865 = vsel %vm2084, %v2466, 0
      %v3868 = vsel %vm2474, %v3863, 0
      %3870 = vmatprep.subr.bf16.mxu0 0
      %3871 = vmatpush1.bf16.msra.mxu0 %v3868
      %3872 = vmatprep.subr.bf16.mxu0 0
      %3873 = vmatpush1.bf16.msra.mxu0 0
      %3874 = vmatprep.subr.bf16.mxu0 0
      %3875 = vmatpush1.bf16.msra.mxu0 0
      %3876 = vmatprep.subr.bf16.mxu0 0
      %3877 = vmatpush1.bf16.msra.mxu0 0
      %3878 = vmatprep.subr.bf16.mxu0 0
      %3879 = vmatpush1.bf16.msra.mxu0 0
      %3880 = vmatprep.subr.bf16.mxu0 0
      %3881 = vmatpush1.bf16.msra.mxu0 0
      %3882 = vmatprep.subr.bf16.mxu0 0
      %3883 = vmatpush1.bf16.msra.mxu0 0
      %3884 = vmatprep.subr.bf16.mxu0 0
      %3885 = vmatpush1.bf16.msra.mxu0 0
      %3886 = vmatprep.subr.bf16.mxu0 0
      %3887 = vmatpush1.bf16.msra.mxu0 0
      %3888 = vmatprep.subr.bf16.mxu0 0
      %3889 = vmatpush1.bf16.msra.mxu0 0
      %3890 = vmatprep.subr.bf16.mxu0 0
      %3891 = vmatpush1.bf16.msra.mxu0 0
      %3892 = vmatprep.subr.bf16.mxu0 0
      %3893 = vmatpush1.bf16.msra.mxu0 0
      %3894 = vmatprep.subr.bf16.mxu0 0
      %3895 = vmatpush1.bf16.msra.mxu0 0
      %3896 = vmatprep.subr.bf16.mxu0 0
      %3897 = vmatpush1.bf16.msra.mxu0 0
      %3898 = vmatprep.subr.bf16.mxu0 0
      %3899 = vmatpush1.bf16.msra.mxu0 0
      %3900 = vmatprep.subr.bf16.mxu0 0
      %3901 = vmatpush1.bf16.msra.mxu0 0
      %3902 = vmatprep.mubr.bf16.mxu0 0
      %3903 = vmatmul.mubr.bf16.gmra.mrb[0].mxu0 %v3865
      %v3904 = vpop.f32.mrb[0].mxu0
      %v3905 = vadd.f32 0.0, %v3904
      %v3906 = vpop.f32.mrb[0].mxu0
      %v3907 = vpop.f32.mrb[0].mxu0
      %v3908 = vpop.f32.mrb[0].mxu0
      %3909 = vdwg.mxu0
      %3910 = vrot.lane.b32.xlu0 %v447, 96
      %v3911 = vpop.permute.xlu0 %3910
      %v3913 = vsel %vm2084, %v2467, 0
      %v3916 = vsel %vm2474, %v3911, 0
      %3918 = vmatprep.subr.bf16.mxu0 0
      %3919 = vmatpush1.bf16.msra.mxu0 %v3916
      %3920 = vmatprep.subr.bf16.mxu0 0
      %3921 = vmatpush1.bf16.msra.mxu0 0
      %3922 = vmatprep.subr.bf16.mxu0 0
      %3923 = vmatpush1.bf16.msra.mxu0 0
      %3924 = vmatprep.subr.bf16.mxu0 0
      %3925 = vmatpush1.bf16.msra.mxu0 0
      %3926 = vmatprep.subr.bf16.mxu0 0
      %3927 = vmatpush1.bf16.msra.mxu0 0
      %3928 = vmatprep.subr.bf16.mxu0 0
      %3929 = vmatpush1.bf16.msra.mxu0 0
      %3930 = vmatprep.subr.bf16.mxu0 0
      %3931 = vmatpush1.bf16.msra.mxu0 0
      %3932 = vmatprep.subr.bf16.mxu0 0
      %3933 = vmatpush1.bf16.msra.mxu0 0
      %3934 = vmatprep.subr.bf16.mxu0 0
      %3935 = vmatpush1.bf16.msra.mxu0 0
      %3936 = vmatprep.subr.bf16.mxu0 0
      %3937 = vmatpush1.bf16.msra.mxu0 0
      %3938 = vmatprep.subr.bf16.mxu0 0
      %3939 = vmatpush1.bf16.msra.mxu0 0
      %3940 = vmatprep.subr.bf16.mxu0 0
      %3941 = vmatpush1.bf16.msra.mxu0 0
      %3942 = vmatprep.subr.bf16.mxu0 0
      %3943 = vmatpush1.bf16.msra.mxu0 0
      %3944 = vmatprep.subr.bf16.mxu0 0
      %3945 = vmatpush1.bf16.msra.mxu0 0
      %3946 = vmatprep.subr.bf16.mxu0 0
      %3947 = vmatpush1.bf16.msra.mxu0 0
      %3948 = vmatprep.subr.bf16.mxu0 0
      %3949 = vmatpush1.bf16.msra.mxu0 0
      %3950 = vmatprep.mubr.bf16.mxu0 0
      %3951 = vmatmul.mubr.bf16.gmra.mrb[0].mxu0 %v3913
      %v3952 = vpop.f32.mrb[0].mxu0
      %v3953 = vadd.f32 0.0, %v3952
      %v3954 = vpop.f32.mrb[0].mxu0
      %v3955 = vpop.f32.mrb[0].mxu0
      %v3956 = vpop.f32.mrb[0].mxu0
      %3957 = vdwg.mxu0
      %3958 = vrot.lane.b32.xlu0 %v448, 96
      %v3959 = vpop.permute.xlu0 %3958
      %v3961 = vsel %vm2084, %v2468, 0
      %v3964 = vsel %vm2474, %v3959, 0
      %3966 = vmatprep.subr.bf16.mxu0 0
      %3967 = vmatpush1.bf16.msra.mxu0 %v3964
      %3968 = vmatprep.subr.bf16.mxu0 0
      %3969 = vmatpush1.bf16.msra.mxu0 0
      %3970 = vmatprep.subr.bf16.mxu0 0
      %3971 = vmatpush1.bf16.msra.mxu0 0
      %3972 = vmatprep.subr.bf16.mxu0 0
      %3973 = vmatpush1.bf16.msra.mxu0 0
      %3974 = vmatprep.subr.bf16.mxu0 0
      %3975 = vmatpush1.bf16.msra.mxu0 0
      %3976 = vmatprep.subr.bf16.mxu0 0
      %3977 = vmatpush1.bf16.msra.mxu0 0
      %3978 = vmatprep.subr.bf16.mxu0 0
      %3979 = vmatpush1.bf16.msra.mxu0 0
      %3980 = vmatprep.subr.bf16.mxu0 0
      %3981 = vmatpush1.bf16.msra.mxu0 0
      %3982 = vmatprep.subr.bf16.mxu0 0
      %3983 = vmatpush1.bf16.msra.mxu0 0
      %3984 = vmatprep.subr.bf16.mxu0 0
      %3985 = vmatpush1.bf16.msra.mxu0 0
      %3986 = vmatprep.subr.bf16.mxu0 0
      %3987 = vmatpush1.bf16.msra.mxu0 0
      %3988 = vmatprep.subr.bf16.mxu0 0
      %3989 = vmatpush1.bf16.msra.mxu0 0
      %3990 = vmatprep.subr.bf16.mxu0 0
      %3991 = vmatpush1.bf16.msra.mxu0 0
      %3992 = vmatprep.subr.bf16.mxu0 0
      %3993 = vmatpush1.bf16.msra.mxu0 0
      %3994 = vmatprep.subr.bf16.mxu0 0
      %3995 = vmatpush1.bf16.msra.mxu0 0
      %3996 = vmatprep.subr.bf16.mxu0 0
      %3997 = vmatpush1.bf16.msra.mxu0 0
      %3998 = vmatprep.mubr.bf16.mxu0 0
      %3999 = vmatmul.mubr.bf16.gmra.mrb[0].mxu0 %v3961
      %v4000 = vpop.f32.mrb[0].mxu0
      %v4001 = vadd.f32 0.0, %v4000
      %v4002 = vpop.f32.mrb[0].mxu0
      %v4003 = vpop.f32.mrb[0].mxu0
      %v4004 = vpop.f32.mrb[0].mxu0
      %4005 = vdwg.mxu0
      %4006 = vst.msk [vmem:[%s145] sm:$0xff] %vm452, %v2513
      %4007 = vst.msk [vmem:[%s145 + $0x8] sm:$0xff] %vm452, %v2561
      %4008 = vst.msk [vmem:[%s145 + $0x10] sm:$0xff] %vm452, %v2609
      %4009 = vst.msk [vmem:[%s145 + $0x18] sm:$0xff] %vm452, %v2657
      %4010 = vst.msk [vmem:[%s145 + $0x20] sm:$0xff] %vm452, %v2705
      %4011 = vst.msk [vmem:[%s145 + $0x28] sm:$0xff] %vm452, %v2753
      %4012 = vst.msk [vmem:[%s145 + $0x30] sm:$0xff] %vm452, %v2801
      %4013 = vst.msk [vmem:[%s145 + $0x38] sm:$0xff] %vm452, %v2849
      %4014 = vst.msk [vmem:[%s145 + $0x40] sm:$0xff] %vm452, %v2897
      %4015 = vst.msk [vmem:[%s145 + $0x48] sm:$0xff] %vm452, %v2945
      %4016 = vst.msk [vmem:[%s145 + $0x50] sm:$0xff] %vm452, %v2993
      %4017 = vst.msk [vmem:[%s145 + $0x58] sm:$0xff] %vm452, %v3041
      %4018 = vst.msk [vmem:[%s145 + $0x60] sm:$0xff] %vm452, %v3089
      %4019 = vst.msk [vmem:[%s145 + $0x68] sm:$0xff] %vm452, %v3137
      %4020 = vst.msk [vmem:[%s145 + $0x70] sm:$0xff] %vm452, %v3185
      %4021 = vst.msk [vmem:[%s145 + $0x78] sm:$0xff] %vm452, %v3233
      %4022 = vst.msk [vmem:[%s145 + $0x80] sm:$0xff] %vm452, %v3281
      %4023 = vst.msk [vmem:[%s145 + $0x88] sm:$0xff] %vm452, %v3329
      %4024 = vst.msk [vmem:[%s145 + $0x90] sm:$0xff] %vm452, %v3377
      %4025 = vst.msk [vmem:[%s145 + $0x98] sm:$0xff] %vm452, %v3425
      %4026 = vst.msk [vmem:[%s145 + $0xa0] sm:$0xff] %vm452, %v3473
      %4027 = vst.msk [vmem:[%s145 + $0xa8] sm:$0xff] %vm452, %v3521
      %4028 = vst.msk [vmem:[%s145 + $0xb0] sm:$0xff] %vm452, %v3569
      %4029 = vst.msk [vmem:[%s145 + $0xb8] sm:$0xff] %vm452, %v3617
      %4030 = vst.msk [vmem:[%s145 + $0xc0] sm:$0xff] %vm452, %v3665
      %4031 = vst.msk [vmem:[%s145 + $0xc8] sm:$0xff] %vm452, %v3713
      %4032 = vst.msk [vmem:[%s145 + $0xd0] sm:$0xff] %vm452, %v3761
      %4033 = vst.msk [vmem:[%s145 + $0xd8] sm:$0xff] %vm452, %v3809
      %4034 = vst.msk [vmem:[%s145 + $0xe0] sm:$0xff] %vm452, %v3857
      %4035 = vst.msk [vmem:[%s145 + $0xe8] sm:$0xff] %vm452, %v3905
      %4036 = vst.msk [vmem:[%s145 + $0xf0] sm:$0xff] %vm452, %v3953
      %4037 = vst.msk [vmem:[%s145 + $0xf8] sm:$0xff] %vm452, %v4001
      %s4038 = smul.u32 32, %s13
      %p4039 = scmp.lt.s32.totalorder %s4038, 63
      %s4040 = scalar_select %p4039, %s4038, 63
      %s4041 = smul.addr %s4040, 8
      %s4042 = scalar_lea.vmem %s2, %s4041
      // Predicated region
      $region29: #{tpu_custom_call.1} parent=27 // pred_check
        %p4043 = pneg %p78
      $region30: #{tpu_custom_call.1} parent=27 // pred_check_branch
        %4045 = sbr.rel (%p4043) target = $region32
      $region31: #{tpu_custom_call.1} parent=27 // pred_region
        %s4046 = smul.u32 32, %s13
      $region32: #{tpu_custom_call.1} parent=27 // pred_fallthru
        _
    $region28: #{tpu_custom_call.1} parent=5 // pred_fallthru
      _
    %p4047 = scmp.le.s32.totalorder 2, %s8
    // Predicated region
    $region33: #{tpu_custom_call.1} parent=5 // pred_check
      %p4048 = pneg %p4047
    $region34: #{tpu_custom_call.1} parent=5 // pred_check_branch
      %4050 = sbr.rel (%p4048) target = $region36
    $region35: #{tpu_custom_call.1} parent=5 // pred_region
      %s4051 = ssub.s32 %s8, 2
      // Predicated region
      $region37: #{tpu_custom_call.1} parent=35 // pred_check
        %p4052 = pneg %p84
      $region38: #{tpu_custom_call.1} parent=35 // pred_check_branch
        %4054 = sbr.rel (%p4052) target = $region40
      $region39: #{tpu_custom_call.1} parent=35 // pred_region
        %s4055 = smul.u32 32, %s14
        %p4056 = scmp.lt.s32.totalorder %s4055, 63
        %s4057 = scalar_select %p4056, %s4055, 63
        %s4058 = smul.addr %s4057, 8
        %s4059 = scalar_lea.vmem %s2, %s4058
      $region40: #{tpu_custom_call.1} parent=35 // pred_fallthru
        _
    $region36: #{tpu_custom_call.1} parent=5 // pred_fallthru
      _
  $region6: #{tpu_custom_call.1} parent=0 // loop_footer
    %s12 = sadd.s32 1, %s8
  $region7: #{tpu_custom_call.1} parent=0 // loop_footer_branch
    %7 = sbr.rel target = $region3
  $region8: #{tpu_custom_call.1} parent=0 // loop_exit
    _

</llo_original>
